<compile_context>
chip_gen: v6e
topology: v6e:2x2x1
jax: 0.10.0
libtpu: 0.0.40
codegen_flags: <defaults>
</compile_context>

<pallas_src>
import functools

import jax
import jax.numpy as jnp
from jax.experimental import pallas as pl
from jax.experimental.pallas import tpu as pltpu


N_CHANNELS = 4
HIDDEN_DIMS = (32, 64, 32)
ALL_DIMS = [N_CHANNELS] + list(HIDDEN_DIMS) + [N_CHANNELS]   # [4, 32, 64, 32, 4]
EPS = 1e-5

# Per-pass sized working set (double-buffered I/O tiles + chain intermediates).
TILE_BUDGET_BYTES = 16 * 1024 * 1024
# Scoped-VMEM limit: leaves headroom for compiler temporaries; <= ~48 MiB so it
# is safe on v7x's 64 MiB/TC VMEM and comfortable on v5e/v6e (128 MiB).
VMEM_LIMIT_BYTES = 48 * 1024 * 1024
MAX_TILE_N = 32768


def _round_up(x, m):
    return -(-x // m) * m


# --------------------------------------------------------------------------
# Kernel: evaluate a chain of folded SparseEquivariantLayer stages on one tile
# --------------------------------------------------------------------------

def _chain_kernel(*refs, n_stages, relus, write_act, accum, true_n, tile_n,
                  compute_dtype):
    """refs layout: [h, w_0, c_0, ..., w_{S-1}, c_{S-1}, <outputs>].

    outputs = ([act], [sum, sumsq]) depending on write_act / accum.
    Stage s:  y = W'_s @ x + c_s ; optional ReLU.  W'_s already carries the
    previous RelationNorm scale folded into its columns; c_s is the pooled
    term + bias pre-combined in the wrapper.  Matmuls accumulate in f32,
    operands are compute_dtype (bf16 on v6e/v7x); add/ReLU/stats stay f32.
    """
    h_ref = refs[0]
    pos = 1 + 2 * n_stages
    act_ref = sum_ref = sq_ref = None
    if write_act:
        act_ref = refs[pos]
        pos += 1
    if accum:
        sum_ref = refs[pos]
        sq_ref = refs[pos + 1]

    x = h_ref[...]
    if x.dtype != compute_dtype:
        x = x.astype(compute_dtype)

    y = None
    for s in range(n_stages):
        w = refs[1 + 2 * s][...]          # (c_out, c_in), pre-cast in the wrapper
        c = refs[2 + 2 * s][...]          # (c_out, 1) f32 pooled term + bias
        y = jnp.dot(w, x, preferred_element_type=jnp.float32) + c
        if relus[s]:
            y = jnp.maximum(y, 0.0)
        if s + 1 < n_stages:
            x = y.astype(compute_dtype)

    if write_act:
        act_ref[...] = y.astype(act_ref.dtype)

    if accum:
        @pl.when(pl.program_id(0) == 0)
        def _init():
            sum_ref[...] = jnp.zeros_like(sum_ref)
            sq_ref[...] = jnp.zeros_like(sq_ref)

        y_stats = y
        if true_n % tile_n != 0:
            # Padded lanes of the trailing partial tile must never enter the
            # RelationNorm / pooled-mean statistics.
            lane = jax.lax.broadcasted_iota(jnp.int32, (1, tile_n), 1)
            col = pl.program_id(0) * tile_n + lane
            y_stats = jnp.where(col < true_n, y, 0.0)
        sum_ref[...] += jnp.sum(y_stats, axis=1, keepdims=True)
        sq_ref[...] += jnp.sum(y_stats * y_stats, axis=1, keepdims=True)


# --------------------------------------------------------------------------
# pallas_call wrapper
# --------------------------------------------------------------------------

def _pick_tile(n, c_in, in_bytes, c_write, write_bytes, stage_couts,
               compute_bytes, max_tile_n):
    """Largest 128-multiple tile whose working set fits TILE_BUDGET_BYTES."""
    per_col = 2 * (c_in * in_bytes + c_write * write_bytes)           # dbl-buffered I/O
    per_col += sum(c * (4 + compute_bytes) for c in stage_couts)      # f32 stage + cast operand
    per_col += stage_couts[-1] * 8                                    # stats temporaries
    tn = int(TILE_BUDGET_BYTES // per_col)
    tn = min(tn, max_tile_n, _round_up(n, 128))
    return max(128, (tn // 128) * 128)


def _chain_call(h, stages, *, relus, write_act, act_dtype, accum,
                compute_dtype, parallel, max_tile_n):
    c_in, n = h.shape
    n_stages = len(stages)
    stage_couts = [w.shape[0] for w, _ in stages]
    c_out = stage_couts[-1]

    in_bytes = jnp.dtype(h.dtype).itemsize
    out_bytes = jnp.dtype(act_dtype).itemsize if write_act else 0
    cbytes = jnp.dtype(compute_dtype).itemsize
    tn = _pick_tile(n, c_in, in_bytes, c_out if write_act else 0, out_bytes,
                    stage_couts, cbytes, max_tile_n)
    grid = (pl.cdiv(n, tn),)

    in_specs = [pl.BlockSpec((c_in, tn), lambda i: (0, i))]            # activation tile
    inputs = [h]
    for w, c in stages:
        co, ci = w.shape
        in_specs.append(pl.BlockSpec((co, ci), lambda i: (0, 0)))      # resident folded weights
        in_specs.append(pl.BlockSpec((co, 1), lambda i: (0, 0)))       # resident pooled+bias
        inputs.append(w)
        inputs.append(c)

    out_shape = []
    out_specs = []
    if write_act:
        out_shape.append(jax.ShapeDtypeStruct((c_out, n), act_dtype))
        out_specs.append(pl.BlockSpec((c_out, tn), lambda i: (0, i)))
    if accum:
        stat_spec = pl.BlockSpec((c_out, 1), lambda i: (0, 0))
        out_shape += [jax.ShapeDtypeStruct((c_out, 1), jnp.float32),
                      jax.ShapeDtypeStruct((c_out, 1), jnp.float32)]
        out_specs += [stat_spec, stat_spec]

    kernel = functools.partial(
        _chain_kernel, n_stages=n_stages, relus=tuple(relus),
        write_act=write_act, accum=accum, true_n=n, tile_n=tn,
        compute_dtype=compute_dtype)

    return pl.pallas_call(
        kernel,
        out_shape=tuple(out_shape),
        grid_spec=pltpu.PrefetchScalarGridSpec(
            num_scalar_prefetch=0,
            grid=grid,
            in_specs=in_specs,
            out_specs=tuple(out_specs)),
        compiler_params=pltpu.CompilerParams(
            dimension_semantics=(("parallel",) if parallel else ("arbitrary",)),
            vmem_limit_bytes=VMEM_LIMIT_BYTES),
    )(*inputs)


# --------------------------------------------------------------------------
# Full forward pass
# --------------------------------------------------------------------------

@functools.partial(jax.jit, static_argnames=("max_tile_n", "compute_dtype"))
def sparse_equivariant_forward(x, params, *, max_tile_n=MAX_TILE_N,
                               compute_dtype=jnp.bfloat16):
    """x: (n_channels, nnz) float32 relation values. Returns (n_channels, nnz).

    compute_dtype=bf16 (default, recommended for v6e/v7x): bf16 matmul operands
    and bf16 HBM round-trip for the one materialized intermediate (f32
    accumulation / ReLU / stats kept in-kernel).  compute_dtype=f32 reproduces
    the module's arithmetic exactly.
    """
    c0, n = x.shape
    n_f = jnp.float32(n)
    n_layers = len(params)
    act_dtype = jnp.bfloat16 if compute_dtype == jnp.bfloat16 else jnp.float32

    def fold(w1, w2, b, d, m):
        # Previous RelationNorm scale d folded into the columns of W1 (exact),
        # pooled term W2 @ mean(h_norm) + bias pre-combined into one constant.
        w_fold = (w1 * jnp.transpose(d)).astype(compute_dtype)   # cast ONCE here
        c_fold = (jnp.dot(w2, d * m) + b).astype(jnp.float32)
        return w_fold, c_fold

    # Per-channel mean of the raw input: tiny (4, N) reduction, plain XLA
    # (replaces the dedicated channel-sum Pallas pre-pass of v1).
    m = jnp.mean(x.astype(jnp.float32), axis=1, keepdims=True)
    d = jnp.ones((c0, 1), jnp.float32)          # no RelationNorm before layer 0

    base = x.astype(compute_dtype)              # cast once, not per grid step
    stages = []
    for i, (w1, w2, b) in enumerate(params):
        stage = fold(w1, w2, b, d, m)
        if i == n_layers - 1:
            # Final SparseEquivariantLayer: no ReLU / no stats; pure per-tile
            # map -> "parallel" so it shards across v7x's two TensorCores.
            (out,) = _chain_call(base, [stage], relus=(False,),
                                 write_act=True, act_dtype=jnp.float32,
                                 accum=False, compute_dtype=compute_dtype,
                                 parallel=True, max_tile_n=max_tile_n)
            return out                           # final activation = Identity

        stages.append(stage)
        # Only the last hidden activation is materialized (bf16) in HBM; the
        # earlier 32/64-channel intermediates are recomputed on the fly inside
        # the later passes (recompute-fusion).
        write_here = (i == n_layers - 2)
        res = _chain_call(base, stages, relus=(True,) * len(stages),
                          write_act=write_here, act_dtype=act_dtype,
                          accum=True, compute_dtype=compute_dtype,
                          parallel=False, max_tile_n=max_tile_n)
        if write_here:
            act, s, q = res
            base = act
            stages = []
        else:
            s, q = res
        m = s / n_f                              # mean_N of this pre-norm activation
        d = jax.lax.rsqrt(q / n_f + EPS)         # RelationNorm(affine=False) scale


# --------------------------------------------------------------------------
# Reference / params / demo
# --------------------------------------------------------------------------

def init_params(key):
    """Deterministic parameter init: per layer (W1, W2, b)."""
    params = []
    for i in range(1, len(ALL_DIMS)):
        c_in, c_out = ALL_DIMS[i - 1], ALL_DIMS[i]
        key, k1, k2 = jax.random.split(key, 3)
        scale = 1.0 / jnp.sqrt(jnp.float32(c_in))
        w1 = jax.random.normal(k1, (c_out, c_in), jnp.float32) * scale
        w2 = jax.random.normal(k2, (c_out, c_in), jnp.float32) * scale
        b = jnp.zeros((c_out, 1), jnp.float32)
        params.append((w1, w2, b))
    return params


def reference_forward(x, params):
    """Pure-JAX reference for correctness checking (original formulation)."""
    h = x.astype(jnp.float32)
    n_layers = len(params)
    for idx, (w1, w2, b) in enumerate(params):
        h = w1 @ h + jnp.mean(w2 @ h, axis=1, keepdims=True) + b
        if idx < n_layers - 1:
            h = jnp.maximum(h, 0.0)
            h = h * jax.lax.rsqrt(jnp.mean(h * h, axis=1, keepdims=True) + EPS)
    return h  # final activation = Identity


if __name__ == "__main__":
    key = jax.random.PRNGKey(0)
    key, xkey = jax.random.split(key)

    # Small demo: nnz is deliberately NOT a multiple of the tile (or of 128),
    # so the cdiv grid + padded-lane masking path is exercised; max_tile_n=256
    # forces a multi-step grid per pass.  (At this size the kernel is launch-
    # overhead bound; the structural wins show up at production nnz.)
    nnz = 1000
    x = jax.random.normal(xkey, (N_CHANNELS, nnz), jnp.float32)
    params = init_params(jax.random.PRNGKey(0))

    ref = reference_forward(x, params)

    # Exact-arithmetic path (f32 compute + f32 intermediates).
    out_f32 = sparse_equivariant_forward(x, params, max_tile_n=256,
                                         compute_dtype=jnp.float32)
    out_f32 = jax.block_until_ready(out_f32)
    assert out_f32.shape == (N_CHANNELS, nnz)
    assert jnp.allclose(out_f32, ref, atol=2e-4, rtol=2e-4), \
        "f32 mismatch vs JAX reference"

    # Default optimized path (bf16 matmul operands + bf16 HBM intermediate).
    out_bf16 = sparse_equivariant_forward(x, params, max_tile_n=256)
    out_bf16 = jax.block_until_ready(out_bf16)
    assert out_bf16.shape == (N_CHANNELS, nnz)
    assert jnp.allclose(out_bf16, ref, atol=1e-1, rtol=1e-1), \
        "bf16 mismatch vs JAX reference"

    print("KERNEL_OK")
</pallas_src>

<mosaic_0001>
module attributes {stable_mosaic.version = 11 : i64} {
  func.func @_chain_kernel(%arg0: i32, %arg1: memref<4x256xf32, #tpu.memory_space<vmem>>, %arg2: memref<32x4xf32, #tpu.memory_space<vmem>>, %arg3: memref<32x1xf32, #tpu.memory_space<vmem>>, %arg4: memref<32x1xf32, #tpu.memory_space<vmem>>, %arg5: memref<32x1xf32, #tpu.memory_space<vmem>>) attributes {dimension_semantics = [#tpu.dimension_semantics<arbitrary>], iteration_bounds = array<i64: 4>, scalar_prefetch = 0 : i64, scratch_operands = 0 : i64, tpu.core_type = #tpu.core_type<tc>, window_params = [{transform_indices = @transform_0, window_bounds = array<i64: 4, 256>}, {pipeline_mode = #tpu.pipeline_mode<synchronous>, transform_indices = @transform_1, window_bounds = array<i64: 32, 4>}, {pipeline_mode = #tpu.pipeline_mode<synchronous>, transform_indices = @transform_2, window_bounds = array<i64: 32, 1>}, {pipeline_mode = #tpu.pipeline_mode<synchronous>, transform_indices = @transform_3, window_bounds = array<i64: 32, 1>}, {pipeline_mode = #tpu.pipeline_mode<synchronous>, transform_indices = @transform_4, window_bounds = array<i64: 32, 1>}]} {
    %c0 = arith.constant 0 : index
    %c0_0 = arith.constant 0 : index
    %0 = vector.load %arg1[%c0, %c0_0] : memref<4x256xf32, #tpu.memory_space<vmem>>, vector<4x256xf32>
    %c0_1 = arith.constant 0 : index
    %c0_2 = arith.constant 0 : index
    %1 = vector.load %arg2[%c0_1, %c0_2] : memref<32x4xf32, #tpu.memory_space<vmem>>, vector<32x4xf32>
    %c0_3 = arith.constant 0 : index
    %c0_4 = arith.constant 0 : index
    %2 = vector.load %arg3[%c0_3, %c0_4] : memref<32x1xf32, #tpu.memory_space<vmem>>, vector<32x1xf32>
    %cst = arith.constant dense<0.000000e+00> : vector<32x256xf32>
    %3 = tpu.matmul %1, %0, %cst {dimension_numbers = #tpu.dot_dimension_numbers<[1], [0], [0], [1], [0, 0, 1, 1], [], []>} : vector<32x4xf32>, vector<4x256xf32>, vector<32x256xf32> -> vector<32x256xf32>
    %4 = vector.broadcast %2 : vector<32x1xf32> to vector<32x256xf32>
    %5 = arith.addf %3, %4 : vector<32x256xf32>
    %cst_5 = arith.constant 0.000000e+00 : f32
    %6 = vector.broadcast %cst_5 : f32 to vector<32x256xf32>
    %7 = arith.maximumf %5, %6 : vector<32x256xf32>
    %c0_i32 = arith.constant 0 : i32
    %8 = arith.cmpi eq, %arg0, %c0_i32 : i32
    %9 = arith.extui %8 : i1 to i32
    %c0_i32_6 = arith.constant 0 : i32
    %10 = arith.cmpi ne, %9, %c0_i32_6 : i32
    scf.if %10 {
      %cst_18 = arith.constant 0.000000e+00 : f32
      %32 = vector.broadcast %cst_18 : f32 to vector<32x1xf32>
      %c0_19 = arith.constant 0 : index
      %c0_20 = arith.constant 0 : index
      %33 = vector.load %arg4[%c0_19, %c0_20] : memref<32x1xf32, #tpu.memory_space<vmem>>, vector<32x1xf32>
      tpu.vector_store %arg4[%c0_19, %c0_20], %32 {strides = array<i32>} : memref<32x1xf32, #tpu.memory_space<vmem>>, vector<32x1xf32>,
      %cst_21 = arith.constant 0.000000e+00 : f32
      %34 = vector.broadcast %cst_21 : f32 to vector<32x1xf32>
      %c0_22 = arith.constant 0 : index
      %c0_23 = arith.constant 0 : index
      %35 = vector.load %arg5[%c0_22, %c0_23] : memref<32x1xf32, #tpu.memory_space<vmem>>, vector<32x1xf32>
      tpu.vector_store %arg5[%c0_22, %c0_23], %34 {strides = array<i32>} : memref<32x1xf32, #tpu.memory_space<vmem>>, vector<32x1xf32>,
    } else {
    }
    %11 = tpu.iota {dimensions = array<i32: 1>} : vector<1x256xi32>
    %c256_i32 = arith.constant 256 : i32
    %12 = arith.muli %arg0, %c256_i32 : i32
    %13 = vector.broadcast %12 : i32 to vector<1x256xi32>
    %14 = arith.addi %13, %11 : vector<1x256xi32>
    %c1000_i32 = arith.constant 1000 : i32
    %15 = vector.broadcast %c1000_i32 : i32 to vector<1x256xi32>
    %16 = arith.cmpi slt, %14, %15 : vector<1x256xi32>
    %cst_7 = arith.constant 0.000000e+00 : f32
    %17 = vector.shape_cast %16 : vector<1x256xi1> to vector<1x256xi1>
    %18 = vector.broadcast %17 : vector<1x256xi1> to vector<32x256xi1>
    %19 = vector.broadcast %cst_7 : f32 to vector<32x256xf32>
    %20 = arith.select %18, %7, %19 : vector<32x256xi1>, vector<32x256xf32>
    %c0_8 = arith.constant 0 : index
    %c0_9 = arith.constant 0 : index
    %21 = vector.load %arg4[%c0_8, %c0_9] : memref<32x1xf32, #tpu.memory_space<vmem>>, vector<32x1xf32>
    %cst_10 = arith.constant dense<0.000000e+00> : vector<32xf32>
    %22 = vector.multi_reduction <add>, %20, %cst_10 [1] : vector<32x256xf32> to vector<32xf32>
    %23 = vector.shape_cast %22 : vector<32xf32> to vector<32x1xf32>
    %24 = arith.addf %21, %23 : vector<32x1xf32>
    %c0_11 = arith.constant 0 : index
    %c0_12 = arith.constant 0 : index
    %25 = vector.load %arg4[%c0_11, %c0_12] : memref<32x1xf32, #tpu.memory_space<vmem>>, vector<32x1xf32>
    tpu.vector_store %arg4[%c0_11, %c0_12], %24 {strides = array<i32>} : memref<32x1xf32, #tpu.memory_space<vmem>>, vector<32x1xf32>,
    %c0_13 = arith.constant 0 : index
    %c0_14 = arith.constant 0 : index
    %26 = vector.load %arg5[%c0_13, %c0_14] : memref<32x1xf32, #tpu.memory_space<vmem>>, vector<32x1xf32>
    %27 = arith.mulf %20, %20 : vector<32x256xf32>
    %cst_15 = arith.constant dense<0.000000e+00> : vector<32xf32>
    %28 = vector.multi_reduction <add>, %27, %cst_15 [1] : vector<32x256xf32> to vector<32xf32>
    %29 = vector.shape_cast %28 : vector<32xf32> to vector<32x1xf32>
    %30 = arith.addf %26, %29 : vector<32x1xf32>
    %c0_16 = arith.constant 0 : index
    %c0_17 = arith.constant 0 : index
    %31 = vector.load %arg5[%c0_16, %c0_17] : memref<32x1xf32, #tpu.memory_space<vmem>>, vector<32x1xf32>
    tpu.vector_store %arg5[%c0_16, %c0_17], %30 {strides = array<i32>} : memref<32x1xf32, #tpu.memory_space<vmem>>, vector<32x1xf32>,
    return
  }
  func.func @transform_0(%arg0: i32) -> (i32, i32) {
    %c0_i32 = arith.constant 0 : i32
    %c0_i32_0 = arith.constant 0 : i32
    return %c0_i32, %arg0 : i32, i32
  }
  func.func @transform_1(%arg0: i32) -> (i32, i32) {
    %c0_i32 = arith.constant 0 : i32
    %c0_i32_0 = arith.constant 0 : i32
    %c0_i32_1 = arith.constant 0 : i32
    return %c0_i32, %c0_i32_0 : i32, i32
  }
  func.func @transform_2(%arg0: i32) -> (i32, i32) {
    %c0_i32 = arith.constant 0 : i32
    %c0_i32_0 = arith.constant 0 : i32
    %c0_i32_1 = arith.constant 0 : i32
    return %c0_i32, %c0_i32_0 : i32, i32
  }
  func.func @transform_3(%arg0: i32) -> (i32, i32) {
    %c0_i32 = arith.constant 0 : i32
    %c0_i32_0 = arith.constant 0 : i32
    %c0_i32_1 = arith.constant 0 : i32
    return %c0_i32, %c0_i32_0 : i32, i32
  }
  func.func @transform_4(%arg0: i32) -> (i32, i32) {
    %c0_i32 = arith.constant 0 : i32
    %c0_i32_0 = arith.constant 0 : i32
    %c0_i32_1 = arith.constant 0 : i32
    return %c0_i32, %c0_i32_0 : i32, i32
  }
}

module attributes {stable_mosaic.version = 11 : i64} {
  func.func @_chain_kernel(%arg0: i32, %arg1: memref<4x256xf32, #tpu.memory_space<vmem>>, %arg2: memref<32x4xf32, #tpu.memory_space<vmem>>, %arg3: memref<32x1xf32, #tpu.memory_space<vmem>>, %arg4: memref<64x32xf32, #tpu.memory_space<vmem>>, %arg5: memref<64x1xf32, #tpu.memory_space<vmem>>, %arg6: memref<64x1xf32, #tpu.memory_space<vmem>>, %arg7: memref<64x1xf32, #tpu.memory_space<vmem>>) attributes {dimension_semantics = [#tpu.dimension_semantics<arbitrary>], iteration_bounds = array<i64: 4>, scalar_prefetch = 0 : i64, scratch_operands = 0 : i64, tpu.core_type = #tpu.core_type<tc>, window_params = [{transform_indices = @transform_0, window_bounds = array<i64: 4, 256>}, {pipeline_mode = #tpu.pipeline_mode<synchronous>, transform_indices = @transform_1, window_bounds = array<i64: 32, 4>}, {pipeline_mode = #tpu.pipeline_mode<synchronous>, transform_indices = @transform_2, window_bounds = array<i64: 32, 1>}, {pipeline_mode = #tpu.pipeline_mode<synchronous>, transform_indices = @transform_3, window_bounds = array<i64: 64, 32>}, {pipeline_mode = #tpu.pipeline_mode<synchronous>, transform_indices = @transform_4, window_bounds = array<i64: 64, 1>}, {pipeline_mode = #tpu.pipeline_mode<synchronous>, transform_indices = @transform_5, window_bounds = array<i64: 64, 1>}, {pipeline_mode = #tpu.pipeline_mode<synchronous>, transform_indices = @transform_6, window_bounds = array<i64: 64, 1>}]} {
    %c0 = arith.constant 0 : index
    %c0_0 = arith.constant 0 : index
    %0 = vector.load %arg1[%c0, %c0_0] : memref<4x256xf32, #tpu.memory_space<vmem>>, vector<4x256xf32>
    %c0_1 = arith.constant 0 : index
    %c0_2 = arith.constant 0 : index
    %1 = vector.load %arg2[%c0_1, %c0_2] : memref<32x4xf32, #tpu.memory_space<vmem>>, vector<32x4xf32>
    %c0_3 = arith.constant 0 : index
    %c0_4 = arith.constant 0 : index
    %2 = vector.load %arg3[%c0_3, %c0_4] : memref<32x1xf32, #tpu.memory_space<vmem>>, vector<32x1xf32>
    %cst = arith.constant dense<0.000000e+00> : vector<32x256xf32>
    %3 = tpu.matmul %1, %0, %cst {dimension_numbers = #tpu.dot_dimension_numbers<[1], [0], [0], [1], [0, 0, 1, 1], [], []>} : vector<32x4xf32>, vector<4x256xf32>, vector<32x256xf32> -> vector<32x256xf32>
    %4 = vector.broadcast %2 : vector<32x1xf32> to vector<32x256xf32>
    %5 = arith.addf %3, %4 : vector<32x256xf32>
    %cst_5 = arith.constant 0.000000e+00 : f32
    %6 = vector.broadcast %cst_5 : f32 to vector<32x256xf32>
    %7 = arith.maximumf %5, %6 : vector<32x256xf32>
    %c0_6 = arith.constant 0 : index
    %c0_7 = arith.constant 0 : index
    %8 = vector.load %arg4[%c0_6, %c0_7] : memref<64x32xf32, #tpu.memory_space<vmem>>, vector<64x32xf32>
    %c0_8 = arith.constant 0 : index
    %c0_9 = arith.constant 0 : index
    %9 = vector.load %arg5[%c0_8, %c0_9] : memref<64x1xf32, #tpu.memory_space<vmem>>, vector<64x1xf32>
    %cst_10 = arith.constant dense<0.000000e+00> : vector<64x256xf32>
    %10 = tpu.matmul %8, %7, %cst_10 {dimension_numbers = #tpu.dot_dimension_numbers<[1], [0], [0], [1], [0, 0, 1, 1], [], []>} : vector<64x32xf32>, vector<32x256xf32>, vector<64x256xf32> -> vector<64x256xf32>
    %11 = vector.broadcast %9 : vector<64x1xf32> to vector<64x256xf32>
    %12 = arith.addf %10, %11 : vector<64x256xf32>
    %cst_11 = arith.constant 0.000000e+00 : f32
    %13 = vector.broadcast %cst_11 : f32 to vector<64x256xf32>
    %14 = arith.maximumf %12, %13 : vector<64x256xf32>
    %c0_i32 = arith.constant 0 : i32
    %15 = arith.cmpi eq, %arg0, %c0_i32 : i32
    %16 = arith.extui %15 : i1 to i32
    %c0_i32_12 = arith.constant 0 : i32
    %17 = arith.cmpi ne, %16, %c0_i32_12 : i32
    scf.if %17 {
      %cst_24 = arith.constant 0.000000e+00 : f32
      %39 = vector.broadcast %cst_24 : f32 to vector<64x1xf32>
      %c0_25 = arith.constant 0 : index
      %c0_26 = arith.constant 0 : index
      %40 = vector.load %arg6[%c0_25, %c0_26] : memref<64x1xf32, #tpu.memory_space<vmem>>, vector<64x1xf32>
      tpu.vector_store %arg6[%c0_25, %c0_26], %39 {strides = array<i32>} : memref<64x1xf32, #tpu.memory_space<vmem>>, vector<64x1xf32>,
      %cst_27 = arith.constant 0.000000e+00 : f32
      %41 = vector.broadcast %cst_27 : f32 to vector<64x1xf32>
      %c0_28 = arith.constant 0 : index
      %c0_29 = arith.constant 0 : index
      %42 = vector.load %arg7[%c0_28, %c0_29] : memref<64x1xf32, #tpu.memory_space<vmem>>, vector<64x1xf32>
      tpu.vector_store %arg7[%c0_28, %c0_29], %41 {strides = array<i32>} : memref<64x1xf32, #tpu.memory_space<vmem>>, vector<64x1xf32>,
    } else {
    }
    %18 = tpu.iota {dimensions = array<i32: 1>} : vector<1x256xi32>
    %c256_i32 = arith.constant 256 : i32
    %19 = arith.muli %arg0, %c256_i32 : i32
    %20 = vector.broadcast %19 : i32 to vector<1x256xi32>
    %21 = arith.addi %20, %18 : vector<1x256xi32>
    %c1000_i32 = arith.constant 1000 : i32
    %22 = vector.broadcast %c1000_i32 : i32 to vector<1x256xi32>
    %23 = arith.cmpi slt, %21, %22 : vector<1x256xi32>
    %cst_13 = arith.constant 0.000000e+00 : f32
    %24 = vector.shape_cast %23 : vector<1x256xi1> to vector<1x256xi1>
    %25 = vector.broadcast %24 : vector<1x256xi1> to vector<64x256xi1>
    %26 = vector.broadcast %cst_13 : f32 to vector<64x256xf32>
    %27 = arith.select %25, %14, %26 : vector<64x256xi1>, vector<64x256xf32>
    %c0_14 = arith.constant 0 : index
    %c0_15 = arith.constant 0 : index
    %28 = vector.load %arg6[%c0_14, %c0_15] : memref<64x1xf32, #tpu.memory_space<vmem>>, vector<64x1xf32>
    %cst_16 = arith.constant dense<0.000000e+00> : vector<64xf32>
    %29 = vector.multi_reduction <add>, %27, %cst_16 [1] : vector<64x256xf32> to vector<64xf32>
    %30 = vector.shape_cast %29 : vector<64xf32> to vector<64x1xf32>
    %31 = arith.addf %28, %30 : vector<64x1xf32>
    %c0_17 = arith.constant 0 : index
    %c0_18 = arith.constant 0 : index
    %32 = vector.load %arg6[%c0_17, %c0_18] : memref<64x1xf32, #tpu.memory_space<vmem>>, vector<64x1xf32>
    tpu.vector_store %arg6[%c0_17, %c0_18], %31 {strides = array<i32>} : memref<64x1xf32, #tpu.memory_space<vmem>>, vector<64x1xf32>,
    %c0_19 = arith.constant 0 : index
    %c0_20 = arith.constant 0 : index
    %33 = vector.load %arg7[%c0_19, %c0_20] : memref<64x1xf32, #tpu.memory_space<vmem>>, vector<64x1xf32>
    %34 = arith.mulf %27, %27 : vector<64x256xf32>
    %cst_21 = arith.constant dense<0.000000e+00> : vector<64xf32>
    %35 = vector.multi_reduction <add>, %34, %cst_21 [1] : vector<64x256xf32> to vector<64xf32>
    %36 = vector.shape_cast %35 : vector<64xf32> to vector<64x1xf32>
    %37 = arith.addf %33, %36 : vector<64x1xf32>
    %c0_22 = arith.constant 0 : index
    %c0_23 = arith.constant 0 : index
    %38 = vector.load %arg7[%c0_22, %c0_23] : memref<64x1xf32, #tpu.memory_space<vmem>>, vector<64x1xf32>
    tpu.vector_store %arg7[%c0_22, %c0_23], %37 {strides = array<i32>} : memref<64x1xf32, #tpu.memory_space<vmem>>, vector<64x1xf32>,
    return
  }
  func.func @transform_0(%arg0: i32) -> (i32, i32) {
    %c0_i32 = arith.constant 0 : i32
    %c0_i32_0 = arith.constant 0 : i32
    return %c0_i32, %arg0 : i32, i32
  }
  func.func @transform_1(%arg0: i32) -> (i32, i32) {
    %c0_i32 = arith.constant 0 : i32
    %c0_i32_0 = arith.constant 0 : i32
    %c0_i32_1 = arith.constant 0 : i32
    return %c0_i32, %c0_i32_0 : i32, i32
  }
  func.func @transform_2(%arg0: i32) -> (i32, i32) {
    %c0_i32 = arith.constant 0 : i32
    %c0_i32_0 = arith.constant 0 : i32
    %c0_i32_1 = arith.constant 0 : i32
    return %c0_i32, %c0_i32_0 : i32, i32
  }
  func.func @transform_3(%arg0: i32) -> (i32, i32) {
    %c0_i32 = arith.constant 0 : i32
    %c0_i32_0 = arith.constant 0 : i32
    %c0_i32_1 = arith.constant 0 : i32
    return %c0_i32, %c0_i32_0 : i32, i32
  }
  func.func @transform_4(%arg0: i32) -> (i32, i32) {
    %c0_i32 = arith.constant 0 : i32
    %c0_i32_0 = arith.constant 0 : i32
    %c0_i32_1 = arith.constant 0 : i32
    return %c0_i32, %c0_i32_0 : i32, i32
  }
  func.func @transform_5(%arg0: i32) -> (i32, i32) {
    %c0_i32 = arith.constant 0 : i32
    %c0_i32_0 = arith.constant 0 : i32
    %c0_i32_1 = arith.constant 0 : i32
    return %c0_i32, %c0_i32_0 : i32, i32
  }
  func.func @transform_6(%arg0: i32) -> (i32, i32) {
    %c0_i32 = arith.constant 0 : i32
    %c0_i32_0 = arith.constant 0 : i32
    %c0_i32_1 = arith.constant 0 : i32
    return %c0_i32, %c0_i32_0 : i32, i32
  }
}

module attributes {stable_mosaic.version = 11 : i64} {
  func.func @_chain_kernel(%arg0: i32, %arg1: memref<4x256xf32, #tpu.memory_space<vmem>>, %arg2: memref<32x4xf32, #tpu.memory_space<vmem>>, %arg3: memref<32x1xf32, #tpu.memory_space<vmem>>, %arg4: memref<64x32xf32, #tpu.memory_space<vmem>>, %arg5: memref<64x1xf32, #tpu.memory_space<vmem>>, %arg6: memref<32x64xf32, #tpu.memory_space<vmem>>, %arg7: memref<32x1xf32, #tpu.memory_space<vmem>>, %arg8: memref<32x256xf32, #tpu.memory_space<vmem>>, %arg9: memref<32x1xf32, #tpu.memory_space<vmem>>, %arg10: memref<32x1xf32, #tpu.memory_space<vmem>>) attributes {dimension_semantics = [#tpu.dimension_semantics<arbitrary>], iteration_bounds = array<i64: 4>, scalar_prefetch = 0 : i64, scratch_operands = 0 : i64, tpu.core_type = #tpu.core_type<tc>, window_params = [{transform_indices = @transform_0, window_bounds = array<i64: 4, 256>}, {pipeline_mode = #tpu.pipeline_mode<synchronous>, transform_indices = @transform_1, window_bounds = array<i64: 32, 4>}, {pipeline_mode = #tpu.pipeline_mode<synchronous>, transform_indices = @transform_2, window_bounds = array<i64: 32, 1>}, {pipeline_mode = #tpu.pipeline_mode<synchronous>, transform_indices = @transform_3, window_bounds = array<i64: 64, 32>}, {pipeline_mode = #tpu.pipeline_mode<synchronous>, transform_indices = @transform_4, window_bounds = array<i64: 64, 1>}, {pipeline_mode = #tpu.pipeline_mode<synchronous>, transform_indices = @transform_5, window_bounds = array<i64: 32, 64>}, {pipeline_mode = #tpu.pipeline_mode<synchronous>, transform_indices = @transform_6, window_bounds = array<i64: 32, 1>}, {transform_indices = @transform_7, window_bounds = array<i64: 32, 256>}, {pipeline_mode = #tpu.pipeline_mode<synchronous>, transform_indices = @transform_8, window_bounds = array<i64: 32, 1>}, {pipeline_mode = #tpu.pipeline_mode<synchronous>, transform_indices = @transform_9, window_bounds = array<i64: 32, 1>}]} {
    %c0 = arith.constant 0 : index
    %c0_0 = arith.constant 0 : index
    %0 = vector.load %arg1[%c0, %c0_0] : memref<4x256xf32, #tpu.memory_space<vmem>>, vector<4x256xf32>
    %c0_1 = arith.constant 0 : index
    %c0_2 = arith.constant 0 : index
    %1 = vector.load %arg2[%c0_1, %c0_2] : memref<32x4xf32, #tpu.memory_space<vmem>>, vector<32x4xf32>
    %c0_3 = arith.constant 0 : index
    %c0_4 = arith.constant 0 : index
    %2 = vector.load %arg3[%c0_3, %c0_4] : memref<32x1xf32, #tpu.memory_space<vmem>>, vector<32x1xf32>
    %cst = arith.constant dense<0.000000e+00> : vector<32x256xf32>
    %3 = tpu.matmul %1, %0, %cst {dimension_numbers = #tpu.dot_dimension_numbers<[1], [0], [0], [1], [0, 0, 1, 1], [], []>} : vector<32x4xf32>, vector<4x256xf32>, vector<32x256xf32> -> vector<32x256xf32>
    %4 = vector.broadcast %2 : vector<32x1xf32> to vector<32x256xf32>
    %5 = arith.addf %3, %4 : vector<32x256xf32>
    %cst_5 = arith.constant 0.000000e+00 : f32
    %6 = vector.broadcast %cst_5 : f32 to vector<32x256xf32>
    %7 = arith.maximumf %5, %6 : vector<32x256xf32>
    %c0_6 = arith.constant 0 : index
    %c0_7 = arith.constant 0 : index
    %8 = vector.load %arg4[%c0_6, %c0_7] : memref<64x32xf32, #tpu.memory_space<vmem>>, vector<64x32xf32>
    %c0_8 = arith.constant 0 : index
    %c0_9 = arith.constant 0 : index
    %9 = vector.load %arg5[%c0_8, %c0_9] : memref<64x1xf32, #tpu.memory_space<vmem>>, vector<64x1xf32>
    %cst_10 = arith.constant dense<0.000000e+00> : vector<64x256xf32>
    %10 = tpu.matmul %8, %7, %cst_10 {dimension_numbers = #tpu.dot_dimension_numbers<[1], [0], [0], [1], [0, 0, 1, 1], [], []>} : vector<64x32xf32>, vector<32x256xf32>, vector<64x256xf32> -> vector<64x256xf32>
    %11 = vector.broadcast %9 : vector<64x1xf32> to vector<64x256xf32>
    %12 = arith.addf %10, %11 : vector<64x256xf32>
    %cst_11 = arith.constant 0.000000e+00 : f32
    %13 = vector.broadcast %cst_11 : f32 to vector<64x256xf32>
    %14 = arith.maximumf %12, %13 : vector<64x256xf32>
    %c0_12 = arith.constant 0 : index
    %c0_13 = arith.constant 0 : index
    %15 = vector.load %arg6[%c0_12, %c0_13] : memref<32x64xf32, #tpu.memory_space<vmem>>, vector<32x64xf32>
    %c0_14 = arith.constant 0 : index
    %c0_15 = arith.constant 0 : index
    %16 = vector.load %arg7[%c0_14, %c0_15] : memref<32x1xf32, #tpu.memory_space<vmem>>, vector<32x1xf32>
    %cst_16 = arith.constant dense<0.000000e+00> : vector<32x256xf32>
    %17 = tpu.matmul %15, %14, %cst_16 {dimension_numbers = #tpu.dot_dimension_numbers<[1], [0], [0], [1], [0, 0, 1, 1], [], []>} : vector<32x64xf32>, vector<64x256xf32>, vector<32x256xf32> -> vector<32x256xf32>
    %18 = vector.broadcast %16 : vector<32x1xf32> to vector<32x256xf32>
    %19 = arith.addf %17, %18 : vector<32x256xf32>
    %cst_17 = arith.constant 0.000000e+00 : f32
    %20 = vector.broadcast %cst_17 : f32 to vector<32x256xf32>
    %21 = arith.maximumf %19, %20 : vector<32x256xf32>
    %c0_18 = arith.constant 0 : index
    %c0_19 = arith.constant 0 : index
    %22 = vector.load %arg8[%c0_18, %c0_19] : memref<32x256xf32, #tpu.memory_space<vmem>>, vector<32x256xf32>
    tpu.vector_store %arg8[%c0_18, %c0_19], %21 {strides = array<i32>} : memref<32x256xf32, #tpu.memory_space<vmem>>, vector<32x256xf32>,
    %c0_i32 = arith.constant 0 : i32
    %23 = arith.cmpi eq, %arg0, %c0_i32 : i32
    %24 = arith.extui %23 : i1 to i32
    %c0_i32_20 = arith.constant 0 : i32
    %25 = arith.cmpi ne, %24, %c0_i32_20 : i32
    scf.if %25 {
      %cst_32 = arith.constant 0.000000e+00 : f32
      %47 = vector.broadcast %cst_32 : f32 to vector<32x1xf32>
      %c0_33 = arith.constant 0 : index
      %c0_34 = arith.constant 0 : index
      %48 = vector.load %arg9[%c0_33, %c0_34] : memref<32x1xf32, #tpu.memory_space<vmem>>, vector<32x1xf32>
      tpu.vector_store %arg9[%c0_33, %c0_34], %47 {strides = array<i32>} : memref<32x1xf32, #tpu.memory_space<vmem>>, vector<32x1xf32>,
      %cst_35 = arith.constant 0.000000e+00 : f32
      %49 = vector.broadcast %cst_35 : f32 to vector<32x1xf32>
      %c0_36 = arith.constant 0 : index
      %c0_37 = arith.constant 0 : index
      %50 = vector.load %arg10[%c0_36, %c0_37] : memref<32x1xf32, #tpu.memory_space<vmem>>, vector<32x1xf32>
      tpu.vector_store %arg10[%c0_36, %c0_37], %49 {strides = array<i32>} : memref<32x1xf32, #tpu.memory_space<vmem>>, vector<32x1xf32>,
    } else {
    }
    %26 = tpu.iota {dimensions = array<i32: 1>} : vector<1x256xi32>
    %c256_i32 = arith.constant 256 : i32
    %27 = arith.muli %arg0, %c256_i32 : i32
    %28 = vector.broadcast %27 : i32 to vector<1x256xi32>
    %29 = arith.addi %28, %26 : vector<1x256xi32>
    %c1000_i32 = arith.constant 1000 : i32
    %30 = vector.broadcast %c1000_i32 : i32 to vector<1x256xi32>
    %31 = arith.cmpi slt, %29, %30 : vector<1x256xi32>
    %cst_21 = arith.constant 0.000000e+00 : f32
    %32 = vector.shape_cast %31 : vector<1x256xi1> to vector<1x256xi1>
    %33 = vector.broadcast %32 : vector<1x256xi1> to vector<32x256xi1>
    %34 = vector.broadcast %cst_21 : f32 to vector<32x256xf32>
    %35 = arith.select %33, %21, %34 : vector<32x256xi1>, vector<32x256xf32>
    %c0_22 = arith.constant 0 : index
    %c0_23 = arith.constant 0 : index
    %36 = vector.load %arg9[%c0_22, %c0_23] : memref<32x1xf32, #tpu.memory_space<vmem>>, vector<32x1xf32>
    %cst_24 = arith.constant dense<0.000000e+00> : vector<32xf32>
    %37 = vector.multi_reduction <add>, %35, %cst_24 [1] : vector<32x256xf32> to vector<32xf32>
    %38 = vector.shape_cast %37 : vector<32xf32> to vector<32x1xf32>
    %39 = arith.addf %36, %38 : vector<32x1xf32>
    %c0_25 = arith.constant 0 : index
    %c0_26 = arith.constant 0 : index
    %40 = vector.load %arg9[%c0_25, %c0_26] : memref<32x1xf32, #tpu.memory_space<vmem>>, vector<32x1xf32>
    tpu.vector_store %arg9[%c0_25, %c0_26], %39 {strides = array<i32>} : memref<32x1xf32, #tpu.memory_space<vmem>>, vector<32x1xf32>,
    %c0_27 = arith.constant 0 : index
    %c0_28 = arith.constant 0 : index
    %41 = vector.load %arg10[%c0_27, %c0_28] : memref<32x1xf32, #tpu.memory_space<vmem>>, vector<32x1xf32>
    %42 = arith.mulf %35, %35 : vector<32x256xf32>
    %cst_29 = arith.constant dense<0.000000e+00> : vector<32xf32>
    %43 = vector.multi_reduction <add>, %42, %cst_29 [1] : vector<32x256xf32> to vector<32xf32>
    %44 = vector.shape_cast %43 : vector<32xf32> to vector<32x1xf32>
    %45 = arith.addf %41, %44 : vector<32x1xf32>
    %c0_30 = arith.constant 0 : index
    %c0_31 = arith.constant 0 : index
    %46 = vector.load %arg10[%c0_30, %c0_31] : memref<32x1xf32, #tpu.memory_space<vmem>>, vector<32x1xf32>
    tpu.vector_store %arg10[%c0_30, %c0_31], %45 {strides = array<i32>} : memref<32x1xf32, #tpu.memory_space<vmem>>, vector<32x1xf32>,
    return
  }
  func.func @transform_0(%arg0: i32) -> (i32, i32) {
    %c0_i32 = arith.constant 0 : i32
    %c0_i32_0 = arith.constant 0 : i32
    return %c0_i32, %arg0 : i32, i32
  }
  func.func @transform_1(%arg0: i32) -> (i32, i32) {
    %c0_i32 = arith.constant 0 : i32
    %c0_i32_0 = arith.constant 0 : i32
    %c0_i32_1 = arith.constant 0 : i32
    return %c0_i32, %c0_i32_0 : i32, i32
  }
  func.func @transform_2(%arg0: i32) -> (i32, i32) {
    %c0_i32 = arith.constant 0 : i32
    %c0_i32_0 = arith.constant 0 : i32
    %c0_i32_1 = arith.constant 0 : i32
    return %c0_i32, %c0_i32_0 : i32, i32
  }
  func.func @transform_3(%arg0: i32) -> (i32, i32) {
    %c0_i32 = arith.constant 0 : i32
    %c0_i32_0 = arith.constant 0 : i32
    %c0_i32_1 = arith.constant 0 : i32
    return %c0_i32, %c0_i32_0 : i32, i32
  }
  func.func @transform_4(%arg0: i32) -> (i32, i32) {
    %c0_i32 = arith.constant 0 : i32
    %c0_i32_0 = arith.constant 0 : i32
    %c0_i32_1 = arith.constant 0 : i32
    return %c0_i32, %c0_i32_0 : i32, i32
  }
  func.func @transform_5(%arg0: i32) -> (i32, i32) {
    %c0_i32 = arith.constant 0 : i32
    %c0_i32_0 = arith.constant 0 : i32
    %c0_i32_1 = arith.constant 0 : i32
    return %c0_i32, %c0_i32_0 : i32, i32
  }
  func.func @transform_6(%arg0: i32) -> (i32, i32) {
    %c0_i32 = arith.constant 0 : i32
    %c0_i32_0 = arith.constant 0 : i32
    %c0_i32_1 = arith.constant 0 : i32
    return %c0_i32, %c0_i32_0 : i32, i32
  }
  func.func @transform_7(%arg0: i32) -> (i32, i32) {
    %c0_i32 = arith.constant 0 : i32
    %c0_i32_0 = arith.constant 0 : i32
    return %c0_i32, %arg0 : i32, i32
  }
  func.func @transform_8(%arg0: i32) -> (i32, i32) {
    %c0_i32 = arith.constant 0 : i32
    %c0_i32_0 = arith.constant 0 : i32
    %c0_i32_1 = arith.constant 0 : i32
    return %c0_i32, %c0_i32_0 : i32, i32
  }
  func.func @transform_9(%arg0: i32) -> (i32, i32) {
    %c0_i32 = arith.constant 0 : i32
    %c0_i32_0 = arith.constant 0 : i32
    %c0_i32_1 = arith.constant 0 : i32
    return %c0_i32, %c0_i32_0 : i32, i32
  }
}

module attributes {stable_mosaic.version = 11 : i64} {
  func.func @_chain_kernel(%arg0: i32, %arg1: memref<32x256xf32, #tpu.memory_space<vmem>>, %arg2: memref<4x32xf32, #tpu.memory_space<vmem>>, %arg3: memref<4x1xf32, #tpu.memory_space<vmem>>, %arg4: memref<4x256xf32, #tpu.memory_space<vmem>>) attributes {dimension_semantics = [#tpu.dimension_semantics<parallel>], iteration_bounds = array<i64: 4>, scalar_prefetch = 0 : i64, scratch_operands = 0 : i64, tpu.core_type = #tpu.core_type<tc>, window_params = [{transform_indices = @transform_0, window_bounds = array<i64: 32, 256>}, {pipeline_mode = #tpu.pipeline_mode<synchronous>, transform_indices = @transform_1, window_bounds = array<i64: 4, 32>}, {pipeline_mode = #tpu.pipeline_mode<synchronous>, transform_indices = @transform_2, window_bounds = array<i64: 4, 1>}, {transform_indices = @transform_3, window_bounds = array<i64: 4, 256>}]} {
    %c0 = arith.constant 0 : index
    %c0_0 = arith.constant 0 : index
    %0 = vector.load %arg1[%c0, %c0_0] : memref<32x256xf32, #tpu.memory_space<vmem>>, vector<32x256xf32>
    %c0_1 = arith.constant 0 : index
    %c0_2 = arith.constant 0 : index
    %1 = vector.load %arg2[%c0_1, %c0_2] : memref<4x32xf32, #tpu.memory_space<vmem>>, vector<4x32xf32>
    %c0_3 = arith.constant 0 : index
    %c0_4 = arith.constant 0 : index
    %2 = vector.load %arg3[%c0_3, %c0_4] : memref<4x1xf32, #tpu.memory_space<vmem>>, vector<4x1xf32>
    %cst = arith.constant dense<0.000000e+00> : vector<4x256xf32>
    %3 = tpu.matmul %1, %0, %cst {dimension_numbers = #tpu.dot_dimension_numbers<[1], [0], [0], [1], [0, 0, 1, 1], [], []>} : vector<4x32xf32>, vector<32x256xf32>, vector<4x256xf32> -> vector<4x256xf32>
    %4 = vector.broadcast %2 : vector<4x1xf32> to vector<4x256xf32>
    %5 = arith.addf %3, %4 : vector<4x256xf32>
    %c0_5 = arith.constant 0 : index
    %c0_6 = arith.constant 0 : index
    %6 = vector.load %arg4[%c0_5, %c0_6] : memref<4x256xf32, #tpu.memory_space<vmem>>, vector<4x256xf32>
    tpu.vector_store %arg4[%c0_5, %c0_6], %5 {strides = array<i32>} : memref<4x256xf32, #tpu.memory_space<vmem>>, vector<4x256xf32>,
    return
  }
  func.func @transform_0(%arg0: i32) -> (i32, i32) {
    %c0_i32 = arith.constant 0 : i32
    %c0_i32_0 = arith.constant 0 : i32
    return %c0_i32, %arg0 : i32, i32
  }
  func.func @transform_1(%arg0: i32) -> (i32, i32) {
    %c0_i32 = arith.constant 0 : i32
    %c0_i32_0 = arith.constant 0 : i32
    %c0_i32_1 = arith.constant 0 : i32
    return %c0_i32, %c0_i32_0 : i32, i32
  }
  func.func @transform_2(%arg0: i32) -> (i32, i32) {
    %c0_i32 = arith.constant 0 : i32
    %c0_i32_0 = arith.constant 0 : i32
    %c0_i32_1 = arith.constant 0 : i32
    return %c0_i32, %c0_i32_0 : i32, i32
  }
  func.func @transform_3(%arg0: i32) -> (i32, i32) {
    %c0_i32 = arith.constant 0 : i32
    %c0_i32_0 = arith.constant 0 : i32
    return %c0_i32, %arg0 : i32, i32
  }
}

</mosaic_0001>

<llo_original>
// kernel: sparse_equivariant_forward.4
$region0: #{sparse_equivariant_forward.4}
  #allocation0 [shape = 'u32[]', space=smem, size = 0x4, offset = 0x4, fixed_abs, tag = 'smem constant byte address 0x4 - core index']
  #allocation1 [shape = 'u32[144,128]{1,0:T(1,128)}', space=vmem, size = 0x12000, scoped, tag = 'internal scratch']
  %s0 = inlined_call_operand.vmem [shape: f32[4,1000], index: 0, kind: input, shape index: {}]
  %s1 = inlined_call_operand.vmem [shape: f32[32,4], index: 1, kind: input, shape index: {}]
  %s2 = inlined_call_operand.vmem [shape: f32[32,1], index: 2, kind: input, shape index: {}]
  %s3 = inlined_call_operand.vmem [shape: f32[32,1], index: 3, kind: output, shape index: {0}]
  %s4 = inlined_call_operand.vmem [shape: f32[32,1], index: 4, kind: output, shape index: {1}]
  %5 = xla_tuple %s3, %s4
  %s6 = sld [smem:[#allocation0]]
  $region57: #{sparse_equivariant_forward.4} parent=0
    _
  %s8 = ssub.s32 1, %s6
  %s9 = scalar_select 0, %s8, %s6
  loop: start=0, step=1, limit=6
  $region2: #{sparse_equivariant_forward.4} parent=0 // loop_pre_header
    _
  $region3: #{sparse_equivariant_forward.4} parent=0 // loop_header
    %s11 = sphi 0, %s15
    %p12 = scmp.ge.s32.totalorder %s11, 6
    %s21 = sphi 0, %s23
    %s24 = sphi 0, %s21
    %s25 = sphi 0, %s24
    %s41 = sphi 0, %s25
    %s45 = sphi 0, %s45
    %s47 = sphi 0, %s45
    %s48 = sphi 0, %s47
    %s62 = sphi 0, %s48
    %s66 = sphi 0, %s66
    %s68 = sphi 0, %s66
    %s69 = sphi 0, %s68
    %s83 = sphi 0, %s69
    %s87 = sphi 0, %s87
    %s89 = sphi 0, %s87
    %s90 = sphi 0, %s89
    %s104 = sphi 0, %s90
    %s108 = sphi 0, %s108
    %s110 = sphi 0, %s108
    %s111 = sphi 0, %s110
    %s125 = sphi 0, %s111
  $region4: #{sparse_equivariant_forward.4} parent=0 // loop_header_branch
    %14 = sbr.rel (%p12) target = $region8
  $region5: #{sparse_equivariant_forward.4} parent=0 // loop_body
    %s16 = ssub.s32 %s11, 1
    %s17 = ssub.s32 %s11, 2
    %s18 = sadd.s32 %s11, 1
    %s19 = ssub.s32 %s11, %s18
    %p20 = scmp.eq.s32.totalorder %s19, 0
    %s22 = sadd.s32 %s21, 1
    %s23 = scalar_select %p20, %s21, %s22
    %p26 = pneg %p20
    %p27 = scmp.eq.s32.totalorder %s11, 3
    %p28 = por %p26, %p27
    %p29 = scmp.ne.s32.totalorder %s21, %s24
    %p30 = scmp.eq.s32.totalorder %s11, 0
    %p31 = por %p29, %p30
    %p32 = scmp.ne.s32.totalorder %s21, %s24
    %p33 = scmp.eq.s32.totalorder %s16, 3
    %p34 = por %p32, %p33
    %p35 = scmp.ne.s32.totalorder %s24, %s25
    %p36 = scmp.eq.s32.totalorder %s16, 0
    %p37 = por %p35, %p36
    %p38 = scmp.ne.s32.totalorder %s24, %s25
    %p39 = scmp.eq.s32.totalorder %s17, 3
    %p40 = por %p38, %p39
    %p42 = scmp.ne.s32.totalorder %s25, %s41
    %p43 = scmp.eq.s32.totalorder %s17, 0
    %p44 = por %p42, %p43
    %s46 = sadd.s32 %s45, 1
    %p49 = scmp.eq.s32.totalorder %s11, 3
    %p50 = scmp.ne.s32.totalorder %s45, %s47
    %p51 = scmp.eq.s32.totalorder %s11, 0
    %p52 = por %p50, %p51
    %p53 = scmp.ne.s32.totalorder %s45, %s47
    %p54 = scmp.eq.s32.totalorder %s16, 3
    %p55 = por %p53, %p54
    %p56 = scmp.ne.s32.totalorder %s47, %s48
    %p57 = scmp.eq.s32.totalorder %s16, 0
    %p58 = por %p56, %p57
    %p59 = scmp.ne.s32.totalorder %s47, %s48
    %p60 = scmp.eq.s32.totalorder %s17, 3
    %p61 = por %p59, %p60
    %p63 = scmp.ne.s32.totalorder %s48, %s62
    %p64 = scmp.eq.s32.totalorder %s17, 0
    %p65 = por %p63, %p64
    %s67 = sadd.s32 %s66, 1
    %p70 = scmp.eq.s32.totalorder %s11, 3
    %p71 = scmp.ne.s32.totalorder %s66, %s68
    %p72 = scmp.eq.s32.totalorder %s11, 0
    %p73 = por %p71, %p72
    %p74 = scmp.ne.s32.totalorder %s66, %s68
    %p75 = scmp.eq.s32.totalorder %s16, 3
    %p76 = por %p74, %p75
    %p77 = scmp.ne.s32.totalorder %s68, %s69
    %p78 = scmp.eq.s32.totalorder %s16, 0
    %p79 = por %p77, %p78
    %p80 = scmp.ne.s32.totalorder %s68, %s69
    %p81 = scmp.eq.s32.totalorder %s17, 3
    %p82 = por %p80, %p81
    %p84 = scmp.ne.s32.totalorder %s69, %s83
    %p85 = scmp.eq.s32.totalorder %s17, 0
    %p86 = por %p84, %p85
    %s88 = sadd.s32 %s87, 1
    %p91 = scmp.eq.s32.totalorder %s11, 3
    %p92 = scmp.ne.s32.totalorder %s87, %s89
    %p93 = scmp.eq.s32.totalorder %s11, 0
    %p94 = por %p92, %p93
    %p95 = scmp.ne.s32.totalorder %s87, %s89
    %p96 = scmp.eq.s32.totalorder %s16, 3
    %p97 = por %p95, %p96
    %p98 = scmp.ne.s32.totalorder %s89, %s90
    %p99 = scmp.eq.s32.totalorder %s16, 0
    %p100 = por %p98, %p99
    %p101 = scmp.ne.s32.totalorder %s89, %s90
    %p102 = scmp.eq.s32.totalorder %s17, 3
    %p103 = por %p101, %p102
    %p105 = scmp.ne.s32.totalorder %s90, %s104
    %p106 = scmp.eq.s32.totalorder %s17, 0
    %p107 = por %p105, %p106
    %s109 = sadd.s32 %s108, 1
    %p112 = scmp.eq.s32.totalorder %s11, 3
    %p113 = scmp.ne.s32.totalorder %s108, %s110
    %p114 = scmp.eq.s32.totalorder %s11, 0
    %p115 = por %p113, %p114
    %p116 = scmp.ne.s32.totalorder %s108, %s110
    %p117 = scmp.eq.s32.totalorder %s16, 3
    %p118 = por %p116, %p117
    %p119 = scmp.ne.s32.totalorder %s110, %s111
    %p120 = scmp.eq.s32.totalorder %s16, 0
    %p121 = por %p119, %p120
    %p122 = scmp.ne.s32.totalorder %s110, %s111
    %p123 = scmp.eq.s32.totalorder %s17, 3
    %p124 = por %p122, %p123
    %p126 = scmp.ne.s32.totalorder %s111, %s125
    %p127 = scmp.eq.s32.totalorder %s17, 0
    %p128 = por %p126, %p127
    %p129 = scmp.le.s32.totalorder 1, %s11
    %p130 = scmp.lt.s32.totalorder %s11, 5
    %p131 = pnand %p129, %p130
    %p132 = pneg %p131
    // Predicated region
    $region9: #{sparse_equivariant_forward.4} parent=5 // pred_check
      _
    $region10: #{sparse_equivariant_forward.4} parent=5 // pred_check_branch
      %134 = sbr.rel (%p131) target = $region12
    $region11: #{sparse_equivariant_forward.4} parent=5 // pred_region
      %s135 = ssub.s32 %s11, 1
      // Predicated region
      $region13: #{sparse_equivariant_forward.4} parent=11 // pred_check
        %p136 = pneg %p58
      $region14: #{sparse_equivariant_forward.4} parent=11 // pred_check_branch
        %138 = sbr.rel (%p136) target = $region16
      $region15: #{sparse_equivariant_forward.4} parent=11 // pred_region
        _
      $region16: #{sparse_equivariant_forward.4} parent=11 // pred_fallthru
        _
      // Predicated region
      $region17: #{sparse_equivariant_forward.4} parent=11 // pred_check
        %p139 = pneg %p79
      $region18: #{sparse_equivariant_forward.4} parent=11 // pred_check_branch
        %141 = sbr.rel (%p139) target = $region20
      $region19: #{sparse_equivariant_forward.4} parent=11 // pred_region
        _
      $region20: #{sparse_equivariant_forward.4} parent=11 // pred_fallthru
        _
    $region12: #{sparse_equivariant_forward.4} parent=5 // pred_fallthru
      _
    %p142 = scmp.lt.s32.totalorder %s11, 4
    // Predicated region
    $region21: #{sparse_equivariant_forward.4} parent=5 // pred_check
      %p143 = pneg %p142
    $region22: #{sparse_equivariant_forward.4} parent=5 // pred_check_branch
      %145 = sbr.rel (%p143) target = $region24
    $region23: #{sparse_equivariant_forward.4} parent=5 // pred_region
      // Predicated region
      $region25: #{sparse_equivariant_forward.4} parent=23 // pred_check
        %p146 = pneg %p31
      $region26: #{sparse_equivariant_forward.4} parent=23 // pred_check_branch
        %148 = sbr.rel (%p146) target = $region28
      $region27: #{sparse_equivariant_forward.4} parent=23 // pred_region
        %s149 = smul.u32 2, %s11
        %p150 = scmp.lt.s32.totalorder %s149, 7
        %s151 = scalar_select %p150, %s149, 7
        %s152 = smul.addr %s151, 4
        %s153 = scalar_lea.vmem %s0, %s152
        %s154 = smul.u32 2, %s11
      $region28: #{sparse_equivariant_forward.4} parent=23 // pred_fallthru
        _
    $region24: #{sparse_equivariant_forward.4} parent=5 // pred_fallthru
      _
    %p155 = scmp.le.s32.totalorder 1, %s11
    %p156 = scmp.lt.s32.totalorder %s11, 5
    %p157 = pnand %p155, %p156
    %p158 = pneg %p157
    // Predicated region
    $region29: #{sparse_equivariant_forward.4} parent=5 // pred_check
      _
    $region30: #{sparse_equivariant_forward.4} parent=5 // pred_check_branch
      %160 = sbr.rel (%p157) target = $region32
    $region31: #{sparse_equivariant_forward.4} parent=5 // pred_region
      %s161 = ssub.s32 %s11, 1
      %s162 = smul.u32 2, %s16
      %p163 = scmp.lt.s32.totalorder %s162, 7
      %s164 = scalar_select %p163, %s162, 7
      %s165 = smul.addr %s164, 4
      %s166 = scalar_lea.vmem %s0, %s165
      %p167 = pneg %p37
      %p168 = pneg %p34
      %p169 = pneg %p58
      %p170 = pneg %p55
      %p171 = pneg %p79
      %p172 = pneg %p76
      %p173 = pneg %p100
      %p174 = pneg %p97
      %p175 = pneg %p121
      %p176 = pneg %p118
      %s177 = smul.u32 2, %s16
      %p178 = scmp.lt.s32.totalorder %s177, 7
      %s179 = scalar_select %p178, %s177, 7
      %s180 = smul.addr %s179, 4
      %s181 = scalar_lea.vmem %s0, %s180
      %s182 = smul.u32 2, %s16
      %v183 = vld [vmem:[%s181] sm:$0xff]
      %v184 = vld [vmem:[%s1] sm:$0xff]
      %v185 = vld [vmem:[%s1 + $0x8] sm:$0xff]
      %v186 = vld [vmem:[%s1 + $0x10] sm:$0xff]
      %v187 = vld [vmem:[%s1 + $0x18] sm:$0xff]
      %v188 = vld [vmem:[%s2] sm:$0xff]
      %v189 = vld [vmem:[%s2 + $0x8] sm:$0xff]
      %v190 = vld [vmem:[%s2 + $0x10] sm:$0xff]
      %v191 = vld [vmem:[%s2 + $0x18] sm:$0xff]
      %193 = vset.pattern.permute.xlu0 0
      %194 = vperm.xlu0 %193, %v188
      %v195 = vpop.permute.xlu0 %194
      %198 = vset.pattern.permute.xlu0 0
      %199 = vperm.xlu0 %198, %v189
      %v200 = vpop.permute.xlu0 %199
      %203 = vset.pattern.permute.xlu0 0
      %204 = vperm.xlu0 %203, %v190
      %v205 = vpop.permute.xlu0 %204
      %208 = vset.pattern.permute.xlu0 0
      %209 = vperm.xlu0 %208, %v191
      %v210 = vpop.permute.xlu0 %209
      %v213 = vcombine.high %v183, %v183
      %vm214 = vcmask 31744
      %v216 = vsel %vm214, %v184, 0
      %v219 = vsel %vm214, %v185, 0
      %v222 = vsel %vm214, %v186, 0
      %v225 = vsel %vm214, %v187, 0
      %vm227 = vcmask 1043456
      %v228 = vsel %vm227, %v183, 0
      %v230 = vsel %vm227, %v213, 0
      %232 = vmatprep.subr.mxu0 0.0
      %233 = vmatpush1.msra.mxu0 0.0
      %234 = vmatprep.subr.mxu0 0.0
      %235 = vmatpush1.msra.mxu0 0.0
      %236 = vmatprep.subr.mxu0 0.0
      %237 = vmatpush1.msra.mxu0 0.0
      %238 = vmatprep.subr.mxu0 0.0
      %239 = vmatpush1.msra.mxu0 0.0
      %240 = vmatprep.subr.mxu0 0.0
      %241 = vmatpush1.msra.mxu0 0.0
      %242 = vmatprep.subr.mxu0 0.0
      %243 = vmatpush1.msra.mxu0 0.0
      %244 = vmatprep.subr.mxu0 0.0
      %245 = vmatpush1.msra.mxu0 0.0
      %246 = vmatprep.subr.mxu0 0.0
      %247 = vmatpush1.msra.mxu0 0.0
      %248 = vmatprep.subr.mxu0 0.0
      %249 = vmatpush1.msra.mxu0 0.0
      %250 = vmatprep.subr.mxu0 0.0
      %251 = vmatpush1.msra.mxu0 0.0
      %252 = vmatprep.subr.mxu0 0.0
      %253 = vmatpush1.msra.mxu0 0.0
      %254 = vmatprep.subr.mxu0 0.0
      %255 = vmatpush1.msra.mxu0 0.0
      %256 = vmatprep.subr.mxu0 0.0
      %257 = vmatpush1.msra.mxu0 0.0
      %258 = vmatprep.subr.mxu0 0.0
      %259 = vmatpush1.msra.mxu0 0.0
      %260 = vmatprep.subr.mxu0 0.0
      %261 = vmatpush1.msra.mxu0 0.0
      %262 = vmatprep.subr.mxu0 %v230
      %263 = vmatpush1.msra.mxu0 %v228
      %264 = vmatprep.subr.mxu0 0.0
      %265 = vmatpush2.msra.mxu0 0.0
      %266 = vmatprep.subr.mxu0 0.0
      %267 = vmatpush2.msra.mxu0 0.0
      %268 = vmatprep.subr.mxu0 0.0
      %269 = vmatpush2.msra.mxu0 0.0
      %270 = vmatprep.subr.mxu0 0.0
      %271 = vmatpush2.msra.mxu0 0.0
      %272 = vmatprep.subr.mxu0 0.0
      %273 = vmatpush2.msra.mxu0 0.0
      %274 = vmatprep.subr.mxu0 0.0
      %275 = vmatpush2.msra.mxu0 0.0
      %276 = vmatprep.subr.mxu0 0.0
      %277 = vmatpush2.msra.mxu0 0.0
      %278 = vmatprep.subr.mxu0 0.0
      %279 = vmatpush2.msra.mxu0 0.0
      %280 = vmatprep.subr.mxu0 0.0
      %281 = vmatpush2.msra.mxu0 0.0
      %282 = vmatprep.subr.mxu0 0.0
      %283 = vmatpush2.msra.mxu0 0.0
      %284 = vmatprep.subr.mxu0 0.0
      %285 = vmatpush2.msra.mxu0 0.0
      %286 = vmatprep.subr.mxu0 0.0
      %287 = vmatpush2.msra.mxu0 0.0
      %288 = vmatprep.subr.mxu0 0.0
      %289 = vmatpush2.msra.mxu0 0.0
      %290 = vmatprep.subr.mxu0 0.0
      %291 = vmatpush2.msra.mxu0 0.0
      %292 = vmatprep.subr.mxu0 0.0
      %293 = vmatpush2.msra.mxu0 0.0
      %294 = vmatprep.subr.mxu0 0.0
      %295 = vmatpush2.msra.mxu0 0.0
      %296 = vmatprep.mubr.f32.mxu0 0.0
      %297 = vmatmul.mubr.f32.gmra.mxu0 %v216
      %v298 = vpop.f32.mrf.mxu0
      %v299 = vadd.f32 %v195, %v298
      %v300 = vpop.f32.mrf.mxu0
      %v301 = vadd.f32 %v195, %v300
      %302 = vmatprep.mubr.f32.mxu0 0.0
      %303 = vmatmul.mubr.f32.gmra.mxu0 %v219
      %v304 = vpop.f32.mrf.mxu0
      %v305 = vadd.f32 %v200, %v304
      %v306 = vpop.f32.mrf.mxu0
      %v307 = vadd.f32 %v200, %v306
      %308 = vmatprep.mubr.f32.mxu0 0.0
      %309 = vmatmul.mubr.f32.gmra.mxu0 %v222
      %v310 = vpop.f32.mrf.mxu0
      %v311 = vadd.f32 %v205, %v310
      %v312 = vpop.f32.mrf.mxu0
      %v313 = vadd.f32 %v205, %v312
      %314 = vmatprep.mubr.f32.mxu0 0.0
      %315 = vmatmul.mubr.f32.gmra.mxu0 %v225
      %v316 = vpop.f32.mrf.mxu0
      %v317 = vadd.f32 %v210, %v316
      %v318 = vpop.f32.mrf.mxu0
      %v319 = vadd.f32 %v210, %v318
      %320 = vdwg.mxu0
      %v321 = vmax.f32 %v299, 0.0
      %v322 = vmax.f32 %v301, 0.0
      %v323 = vmax.f32 %v305, 0.0
      %v324 = vmax.f32 %v307, 0.0
      %v325 = vmax.f32 %v311, 0.0
      %v326 = vmax.f32 %v313, 0.0
      %v327 = vmax.f32 %v317, 0.0
      %v328 = vmax.f32 %v319, 0.0
      %p329 = scmp.eq.s32.totalorder %s16, 0
      // Predicated region
      $region33: #{sparse_equivariant_forward.4} parent=31 // pred_check
        %p330 = pneg %p329
      $region34: #{sparse_equivariant_forward.4} parent=31 // pred_check_branch
        %332 = sbr.rel (%p330) target = $region36
      $region35: #{sparse_equivariant_forward.4} parent=31 // pred_region
        %vm333 = vcmask 7168
        %334 = vst.msk [vmem:[%s3] sm:$0xff] %vm333, 0.0
        %335 = vst.msk [vmem:[%s3 + $0x8] sm:$0xff] %vm333, 0.0
        %336 = vst.msk [vmem:[%s3 + $0x10] sm:$0xff] %vm333, 0.0
        %337 = vst.msk [vmem:[%s3 + $0x18] sm:$0xff] %vm333, 0.0
        %338 = vst.msk [vmem:[%s4] sm:$0xff] %vm333, 0.0
        %339 = vst.msk [vmem:[%s4 + $0x8] sm:$0xff] %vm333, 0.0
        %340 = vst.msk [vmem:[%s4 + $0x10] sm:$0xff] %vm333, 0.0
        %341 = vst.msk [vmem:[%s4 + $0x18] sm:$0xff] %vm333, 0.0
      $region36: #{sparse_equivariant_forward.4} parent=31 // pred_fallthru
        _
      %v342 = vlaneseq
      %v343 = vand.u32 %v342, 127
      %v344 = vadd.s32 %v343, 128
      %s345 = smul.u32 %s16, 256
      %v346 = vstv %s345
      %v347 = vadd.s32 %v346, %v343
      %v348 = vadd.s32 %v346, %v344
      %vm349 = vcmp.lt.s32.totalorder %v347, 1000
      %vm350 = vcmp.lt.s32.totalorder %v348, 1000
      %v351 = vsel %vm349, 1, 0
      %v352 = vsel %vm350, 1, 0
      %vm353 = vcmp.eq.s32.totalorder %v351, 1
      %vm354 = vcmp.eq.s32.totalorder %v352, 1
      %v355 = vsel %vm353, %v321, 0.0
      %v356 = vsel %vm354, %v322, 0.0
      %v357 = vsel %vm353, %v323, 0.0
      %v358 = vsel %vm354, %v324, 0.0
      %v359 = vsel %vm353, %v325, 0.0
      %v360 = vsel %vm354, %v326, 0.0
      %v361 = vsel %vm353, %v327, 0.0
      %v362 = vsel %vm354, %v328, 0.0
      %v363 = vld [vmem:[%s3] sm:$0xff]
      %v364 = vld [vmem:[%s3 + $0x8] sm:$0xff]
      %v365 = vld [vmem:[%s3 + $0x10] sm:$0xff]
      %v366 = vld [vmem:[%s3 + $0x18] sm:$0xff]
      %v367 = vadd.f32 %v355, %v356
      %368 = vadd.xlane.f32.xlu0 %v367
      %v369 = vpop.xlane.xlu0 %368
      %v370 = vadd.f32 %v357, %v358
      %371 = vadd.xlane.f32.xlu0 %v370
      %v372 = vpop.xlane.xlu0 %371
      %v373 = vadd.f32 %v359, %v360
      %374 = vadd.xlane.f32.xlu0 %v373
      %v375 = vpop.xlane.xlu0 %374
      %v376 = vadd.f32 %v361, %v362
      %377 = vadd.xlane.f32.xlu0 %v376
      %v378 = vpop.xlane.xlu0 %377
      %v379 = vadd.f32 %v363, %v369
      %v380 = vadd.f32 %v364, %v372
      %v381 = vadd.f32 %v365, %v375
      %v382 = vadd.f32 %v366, %v378
      %vm383 = vcmask 7168
      %384 = vst.msk [vmem:[%s3] sm:$0xff] %vm383, %v379
      %385 = vst.msk [vmem:[%s3 + $0x8] sm:$0xff] %vm383, %v380
      %386 = vst.msk [vmem:[%s3 + $0x10] sm:$0xff] %vm383, %v381
      %387 = vst.msk [vmem:[%s3 + $0x18] sm:$0xff] %vm383, %v382
      %v388 = vld [vmem:[%s4] sm:$0xff]
      %v389 = vld [vmem:[%s4 + $0x8] sm:$0xff]
      %v390 = vld [vmem:[%s4 + $0x10] sm:$0xff]
      %v391 = vld [vmem:[%s4 + $0x18] sm:$0xff]
      %v392 = vmul.f32 %v355, %v355
      %v393 = vmul.f32 %v356, %v356
      %v394 = vmul.f32 %v357, %v357
      %v395 = vmul.f32 %v358, %v358
      %v396 = vmul.f32 %v359, %v359
      %v397 = vmul.f32 %v360, %v360
      %v398 = vmul.f32 %v361, %v361
      %v399 = vmul.f32 %v362, %v362
      %v400 = vadd.f32 %v392, %v393
      %401 = vadd.xlane.f32.xlu0 %v400
      %v402 = vpop.xlane.xlu0 %401
      %v403 = vadd.f32 %v394, %v395
      %404 = vadd.xlane.f32.xlu0 %v403
      %v405 = vpop.xlane.xlu0 %404
      %v406 = vadd.f32 %v396, %v397
      %407 = vadd.xlane.f32.xlu0 %v406
      %v408 = vpop.xlane.xlu0 %407
      %v409 = vadd.f32 %v398, %v399
      %410 = vadd.xlane.f32.xlu0 %v409
      %v411 = vpop.xlane.xlu0 %410
      %v412 = vadd.f32 %v388, %v402
      %v413 = vadd.f32 %v389, %v405
      %v414 = vadd.f32 %v390, %v408
      %v415 = vadd.f32 %v391, %v411
      %416 = vst.msk [vmem:[%s4] sm:$0xff] %vm383, %v412
      %417 = vst.msk [vmem:[%s4 + $0x8] sm:$0xff] %vm383, %v413
      %418 = vst.msk [vmem:[%s4 + $0x10] sm:$0xff] %vm383, %v414
      %419 = vst.msk [vmem:[%s4 + $0x18] sm:$0xff] %vm383, %v415
      // Predicated region
      $region37: #{sparse_equivariant_forward.4} parent=31 // pred_check
        %p420 = pneg %p97
      $region38: #{sparse_equivariant_forward.4} parent=31 // pred_check_branch
        %422 = sbr.rel (%p420) target = $region40
      $region39: #{sparse_equivariant_forward.4} parent=31 // pred_region
        _
      $region40: #{sparse_equivariant_forward.4} parent=31 // pred_fallthru
        _
      // Predicated region
      $region41: #{sparse_equivariant_forward.4} parent=31 // pred_check
        %p423 = pneg %p118
      $region42: #{sparse_equivariant_forward.4} parent=31 // pred_check_branch
        %425 = sbr.rel (%p423) target = $region44
      $region43: #{sparse_equivariant_forward.4} parent=31 // pred_region
        _
      $region44: #{sparse_equivariant_forward.4} parent=31 // pred_fallthru
        _
      // Predicated region
      $region45: #{sparse_equivariant_forward.4} parent=31 // pred_check
        %p426 = pneg %p97
      $region46: #{sparse_equivariant_forward.4} parent=31 // pred_check_branch
        %428 = sbr.rel (%p426) target = $region48
      $region47: #{sparse_equivariant_forward.4} parent=31 // pred_region
        _
      $region48: #{sparse_equivariant_forward.4} parent=31 // pred_fallthru
        _
      // Predicated region
      $region49: #{sparse_equivariant_forward.4} parent=31 // pred_check
        %p429 = pneg %p118
      $region50: #{sparse_equivariant_forward.4} parent=31 // pred_check_branch
        %431 = sbr.rel (%p429) target = $region52
      $region51: #{sparse_equivariant_forward.4} parent=31 // pred_region
        _
      $region52: #{sparse_equivariant_forward.4} parent=31 // pred_fallthru
        _
    $region32: #{sparse_equivariant_forward.4} parent=5 // pred_fallthru
      _
    %p432 = scmp.le.s32.totalorder 2, %s11
    // Predicated region
    $region53: #{sparse_equivariant_forward.4} parent=5 // pred_check
      %p433 = pneg %p432
    $region54: #{sparse_equivariant_forward.4} parent=5 // pred_check_branch
      %435 = sbr.rel (%p433) target = $region56
    $region55: #{sparse_equivariant_forward.4} parent=5 // pred_region
      %s436 = ssub.s32 %s11, 2
    $region56: #{sparse_equivariant_forward.4} parent=5 // pred_fallthru
      _
  $region6: #{sparse_equivariant_forward.4} parent=0 // loop_footer
    %s15 = sadd.s32 1, %s11
  $region7: #{sparse_equivariant_forward.4} parent=0 // loop_footer_branch
    %10 = sbr.rel target = $region3
  $region8: #{sparse_equivariant_forward.4} parent=0 // loop_exit
    _

// kernel: sparse_equivariant_forward.5
$region0: #{sparse_equivariant_forward.5}
  #allocation0 [shape = 'u32[]', space=smem, size = 0x4, offset = 0x4, fixed_abs, tag = 'smem constant byte address 0x4 - core index']
  #allocation1 [shape = 'u32[144,128]{1,0:T(1,128)}', space=vmem, size = 0x12000, scoped, tag = 'internal scratch']
  %s0 = inlined_call_operand.vmem [shape: f32[4,1000], index: 0, kind: input, shape index: {}]
  %s1 = inlined_call_operand.vmem [shape: f32[32,4], index: 1, kind: input, shape index: {}]
  %s2 = inlined_call_operand.vmem [shape: f32[32,1], index: 2, kind: input, shape index: {}]
  %s3 = inlined_call_operand.vmem [shape: f32[64,32], index: 3, kind: input, shape index: {}]
  %s4 = inlined_call_operand.vmem [shape: f32[64,1], index: 4, kind: input, shape index: {}]
  %s5 = inlined_call_operand.vmem [shape: f32[64,1], index: 5, kind: output, shape index: {0}]
  %s6 = inlined_call_operand.vmem [shape: f32[64,1], index: 6, kind: output, shape index: {1}]
  %7 = xla_tuple %s5, %s6
  %s8 = sld [smem:[#allocation0]]
  $region65: #{sparse_equivariant_forward.5} parent=0
    _
  %s10 = ssub.s32 1, %s8
  %s11 = scalar_select 0, %s10, %s8
  loop: start=0, step=1, limit=6
  $region2: #{sparse_equivariant_forward.5} parent=0 // loop_pre_header
    _
  $region3: #{sparse_equivariant_forward.5} parent=0 // loop_header
    %s13 = sphi 0, %s17
    %p14 = scmp.ge.s32.totalorder %s13, 6
    %s23 = sphi 0, %s25
    %s26 = sphi 0, %s23
    %s27 = sphi 0, %s26
    %s43 = sphi 0, %s27
    %s47 = sphi 0, %s47
    %s49 = sphi 0, %s47
    %s50 = sphi 0, %s49
    %s64 = sphi 0, %s50
    %s68 = sphi 0, %s68
    %s70 = sphi 0, %s68
    %s71 = sphi 0, %s70
    %s85 = sphi 0, %s71
    %s89 = sphi 0, %s89
    %s91 = sphi 0, %s89
    %s92 = sphi 0, %s91
    %s106 = sphi 0, %s92
    %s110 = sphi 0, %s110
    %s112 = sphi 0, %s110
    %s113 = sphi 0, %s112
    %s127 = sphi 0, %s113
    %s131 = sphi 0, %s131
    %s133 = sphi 0, %s131
    %s134 = sphi 0, %s133
    %s148 = sphi 0, %s134
    %s152 = sphi 0, %s152
    %s154 = sphi 0, %s152
    %s155 = sphi 0, %s154
    %s169 = sphi 0, %s155
  $region4: #{sparse_equivariant_forward.5} parent=0 // loop_header_branch
    %16 = sbr.rel (%p14) target = $region8
  $region5: #{sparse_equivariant_forward.5} parent=0 // loop_body
    %s18 = ssub.s32 %s13, 1
    %s19 = ssub.s32 %s13, 2
    %s20 = sadd.s32 %s13, 1
    %s21 = ssub.s32 %s13, %s20
    %p22 = scmp.eq.s32.totalorder %s21, 0
    %s24 = sadd.s32 %s23, 1
    %s25 = scalar_select %p22, %s23, %s24
    %p28 = pneg %p22
    %p29 = scmp.eq.s32.totalorder %s13, 3
    %p30 = por %p28, %p29
    %p31 = scmp.ne.s32.totalorder %s23, %s26
    %p32 = scmp.eq.s32.totalorder %s13, 0
    %p33 = por %p31, %p32
    %p34 = scmp.ne.s32.totalorder %s23, %s26
    %p35 = scmp.eq.s32.totalorder %s18, 3
    %p36 = por %p34, %p35
    %p37 = scmp.ne.s32.totalorder %s26, %s27
    %p38 = scmp.eq.s32.totalorder %s18, 0
    %p39 = por %p37, %p38
    %p40 = scmp.ne.s32.totalorder %s26, %s27
    %p41 = scmp.eq.s32.totalorder %s19, 3
    %p42 = por %p40, %p41
    %p44 = scmp.ne.s32.totalorder %s27, %s43
    %p45 = scmp.eq.s32.totalorder %s19, 0
    %p46 = por %p44, %p45
    %s48 = sadd.s32 %s47, 1
    %p51 = scmp.eq.s32.totalorder %s13, 3
    %p52 = scmp.ne.s32.totalorder %s47, %s49
    %p53 = scmp.eq.s32.totalorder %s13, 0
    %p54 = por %p52, %p53
    %p55 = scmp.ne.s32.totalorder %s47, %s49
    %p56 = scmp.eq.s32.totalorder %s18, 3
    %p57 = por %p55, %p56
    %p58 = scmp.ne.s32.totalorder %s49, %s50
    %p59 = scmp.eq.s32.totalorder %s18, 0
    %p60 = por %p58, %p59
    %p61 = scmp.ne.s32.totalorder %s49, %s50
    %p62 = scmp.eq.s32.totalorder %s19, 3
    %p63 = por %p61, %p62
    %p65 = scmp.ne.s32.totalorder %s50, %s64
    %p66 = scmp.eq.s32.totalorder %s19, 0
    %p67 = por %p65, %p66
    %s69 = sadd.s32 %s68, 1
    %p72 = scmp.eq.s32.totalorder %s13, 3
    %p73 = scmp.ne.s32.totalorder %s68, %s70
    %p74 = scmp.eq.s32.totalorder %s13, 0
    %p75 = por %p73, %p74
    %p76 = scmp.ne.s32.totalorder %s68, %s70
    %p77 = scmp.eq.s32.totalorder %s18, 3
    %p78 = por %p76, %p77
    %p79 = scmp.ne.s32.totalorder %s70, %s71
    %p80 = scmp.eq.s32.totalorder %s18, 0
    %p81 = por %p79, %p80
    %p82 = scmp.ne.s32.totalorder %s70, %s71
    %p83 = scmp.eq.s32.totalorder %s19, 3
    %p84 = por %p82, %p83
    %p86 = scmp.ne.s32.totalorder %s71, %s85
    %p87 = scmp.eq.s32.totalorder %s19, 0
    %p88 = por %p86, %p87
    %s90 = sadd.s32 %s89, 1
    %p93 = scmp.eq.s32.totalorder %s13, 3
    %p94 = scmp.ne.s32.totalorder %s89, %s91
    %p95 = scmp.eq.s32.totalorder %s13, 0
    %p96 = por %p94, %p95
    %p97 = scmp.ne.s32.totalorder %s89, %s91
    %p98 = scmp.eq.s32.totalorder %s18, 3
    %p99 = por %p97, %p98
    %p100 = scmp.ne.s32.totalorder %s91, %s92
    %p101 = scmp.eq.s32.totalorder %s18, 0
    %p102 = por %p100, %p101
    %p103 = scmp.ne.s32.totalorder %s91, %s92
    %p104 = scmp.eq.s32.totalorder %s19, 3
    %p105 = por %p103, %p104
    %p107 = scmp.ne.s32.totalorder %s92, %s106
    %p108 = scmp.eq.s32.totalorder %s19, 0
    %p109 = por %p107, %p108
    %s111 = sadd.s32 %s110, 1
    %p114 = scmp.eq.s32.totalorder %s13, 3
    %p115 = scmp.ne.s32.totalorder %s110, %s112
    %p116 = scmp.eq.s32.totalorder %s13, 0
    %p117 = por %p115, %p116
    %p118 = scmp.ne.s32.totalorder %s110, %s112
    %p119 = scmp.eq.s32.totalorder %s18, 3
    %p120 = por %p118, %p119
    %p121 = scmp.ne.s32.totalorder %s112, %s113
    %p122 = scmp.eq.s32.totalorder %s18, 0
    %p123 = por %p121, %p122
    %p124 = scmp.ne.s32.totalorder %s112, %s113
    %p125 = scmp.eq.s32.totalorder %s19, 3
    %p126 = por %p124, %p125
    %p128 = scmp.ne.s32.totalorder %s113, %s127
    %p129 = scmp.eq.s32.totalorder %s19, 0
    %p130 = por %p128, %p129
    %s132 = sadd.s32 %s131, 1
    %p135 = scmp.eq.s32.totalorder %s13, 3
    %p136 = scmp.ne.s32.totalorder %s131, %s133
    %p137 = scmp.eq.s32.totalorder %s13, 0
    %p138 = por %p136, %p137
    %p139 = scmp.ne.s32.totalorder %s131, %s133
    %p140 = scmp.eq.s32.totalorder %s18, 3
    %p141 = por %p139, %p140
    %p142 = scmp.ne.s32.totalorder %s133, %s134
    %p143 = scmp.eq.s32.totalorder %s18, 0
    %p144 = por %p142, %p143
    %p145 = scmp.ne.s32.totalorder %s133, %s134
    %p146 = scmp.eq.s32.totalorder %s19, 3
    %p147 = por %p145, %p146
    %p149 = scmp.ne.s32.totalorder %s134, %s148
    %p150 = scmp.eq.s32.totalorder %s19, 0
    %p151 = por %p149, %p150
    %s153 = sadd.s32 %s152, 1
    %p156 = scmp.eq.s32.totalorder %s13, 3
    %p157 = scmp.ne.s32.totalorder %s152, %s154
    %p158 = scmp.eq.s32.totalorder %s13, 0
    %p159 = por %p157, %p158
    %p160 = scmp.ne.s32.totalorder %s152, %s154
    %p161 = scmp.eq.s32.totalorder %s18, 3
    %p162 = por %p160, %p161
    %p163 = scmp.ne.s32.totalorder %s154, %s155
    %p164 = scmp.eq.s32.totalorder %s18, 0
    %p165 = por %p163, %p164
    %p166 = scmp.ne.s32.totalorder %s154, %s155
    %p167 = scmp.eq.s32.totalorder %s19, 3
    %p168 = por %p166, %p167
    %p170 = scmp.ne.s32.totalorder %s155, %s169
    %p171 = scmp.eq.s32.totalorder %s19, 0
    %p172 = por %p170, %p171
    %p173 = scmp.le.s32.totalorder 1, %s13
    %p174 = scmp.lt.s32.totalorder %s13, 5
    %p175 = pnand %p173, %p174
    %p176 = pneg %p175
    // Predicated region
    $region9: #{sparse_equivariant_forward.5} parent=5 // pred_check
      _
    $region10: #{sparse_equivariant_forward.5} parent=5 // pred_check_branch
      %178 = sbr.rel (%p175) target = $region12
    $region11: #{sparse_equivariant_forward.5} parent=5 // pred_region
      %s179 = ssub.s32 %s13, 1
      // Predicated region
      $region13: #{sparse_equivariant_forward.5} parent=11 // pred_check
        %p180 = pneg %p60
      $region14: #{sparse_equivariant_forward.5} parent=11 // pred_check_branch
        %182 = sbr.rel (%p180) target = $region16
      $region15: #{sparse_equivariant_forward.5} parent=11 // pred_region
        _
      $region16: #{sparse_equivariant_forward.5} parent=11 // pred_fallthru
        _
      // Predicated region
      $region17: #{sparse_equivariant_forward.5} parent=11 // pred_check
        %p183 = pneg %p81
      $region18: #{sparse_equivariant_forward.5} parent=11 // pred_check_branch
        %185 = sbr.rel (%p183) target = $region20
      $region19: #{sparse_equivariant_forward.5} parent=11 // pred_region
        _
      $region20: #{sparse_equivariant_forward.5} parent=11 // pred_fallthru
        _
      // Predicated region
      $region21: #{sparse_equivariant_forward.5} parent=11 // pred_check
        %p186 = pneg %p102
      $region22: #{sparse_equivariant_forward.5} parent=11 // pred_check_branch
        %188 = sbr.rel (%p186) target = $region24
      $region23: #{sparse_equivariant_forward.5} parent=11 // pred_region
        _
      $region24: #{sparse_equivariant_forward.5} parent=11 // pred_fallthru
        _
      // Predicated region
      $region25: #{sparse_equivariant_forward.5} parent=11 // pred_check
        %p189 = pneg %p123
      $region26: #{sparse_equivariant_forward.5} parent=11 // pred_check_branch
        %191 = sbr.rel (%p189) target = $region28
      $region27: #{sparse_equivariant_forward.5} parent=11 // pred_region
        _
      $region28: #{sparse_equivariant_forward.5} parent=11 // pred_fallthru
        _
    $region12: #{sparse_equivariant_forward.5} parent=5 // pred_fallthru
      _
    %p192 = scmp.lt.s32.totalorder %s13, 4
    // Predicated region
    $region29: #{sparse_equivariant_forward.5} parent=5 // pred_check
      %p193 = pneg %p192
    $region30: #{sparse_equivariant_forward.5} parent=5 // pred_check_branch
      %195 = sbr.rel (%p193) target = $region32
    $region31: #{sparse_equivariant_forward.5} parent=5 // pred_region
      // Predicated region
      $region33: #{sparse_equivariant_forward.5} parent=31 // pred_check
        %p196 = pneg %p33
      $region34: #{sparse_equivariant_forward.5} parent=31 // pred_check_branch
        %198 = sbr.rel (%p196) target = $region36
      $region35: #{sparse_equivariant_forward.5} parent=31 // pred_region
        %s199 = smul.u32 2, %s13
        %p200 = scmp.lt.s32.totalorder %s199, 7
        %s201 = scalar_select %p200, %s199, 7
        %s202 = smul.addr %s201, 4
        %s203 = scalar_lea.vmem %s0, %s202
        %s204 = smul.u32 2, %s13
      $region36: #{sparse_equivariant_forward.5} parent=31 // pred_fallthru
        _
    $region32: #{sparse_equivariant_forward.5} parent=5 // pred_fallthru
      _
    %p205 = scmp.le.s32.totalorder 1, %s13
    %p206 = scmp.lt.s32.totalorder %s13, 5
    %p207 = pnand %p205, %p206
    %p208 = pneg %p207
    // Predicated region
    $region37: #{sparse_equivariant_forward.5} parent=5 // pred_check
      _
    $region38: #{sparse_equivariant_forward.5} parent=5 // pred_check_branch
      %210 = sbr.rel (%p207) target = $region40
    $region39: #{sparse_equivariant_forward.5} parent=5 // pred_region
      %s211 = ssub.s32 %s13, 1
      %s212 = smul.u32 2, %s18
      %p213 = scmp.lt.s32.totalorder %s212, 7
      %s214 = scalar_select %p213, %s212, 7
      %s215 = smul.addr %s214, 4
      %s216 = scalar_lea.vmem %s0, %s215
      %p217 = pneg %p39
      %p218 = pneg %p36
      %p219 = pneg %p60
      %p220 = pneg %p57
      %p221 = pneg %p81
      %p222 = pneg %p78
      %p223 = pneg %p102
      %p224 = pneg %p99
      %p225 = pneg %p123
      %p226 = pneg %p120
      %p227 = pneg %p144
      %p228 = pneg %p141
      %p229 = pneg %p165
      %p230 = pneg %p162
      %s231 = smul.u32 2, %s18
      %p232 = scmp.lt.s32.totalorder %s231, 7
      %s233 = scalar_select %p232, %s231, 7
      %s234 = smul.addr %s233, 4
      %s235 = scalar_lea.vmem %s0, %s234
      %s236 = smul.u32 2, %s18
      %v237 = vld [vmem:[%s235] sm:$0xff]
      %v238 = vld [vmem:[%s1] sm:$0xff]
      %v239 = vld [vmem:[%s1 + $0x8] sm:$0xff]
      %v240 = vld [vmem:[%s1 + $0x10] sm:$0xff]
      %v241 = vld [vmem:[%s1 + $0x18] sm:$0xff]
      %v242 = vld [vmem:[%s2] sm:$0xff]
      %v243 = vld [vmem:[%s2 + $0x8] sm:$0xff]
      %v244 = vld [vmem:[%s2 + $0x10] sm:$0xff]
      %v245 = vld [vmem:[%s2 + $0x18] sm:$0xff]
      %247 = vset.pattern.permute.xlu0 0
      %248 = vperm.xlu0 %247, %v242
      %v249 = vpop.permute.xlu0 %248
      %252 = vset.pattern.permute.xlu0 0
      %253 = vperm.xlu0 %252, %v243
      %v254 = vpop.permute.xlu0 %253
      %257 = vset.pattern.permute.xlu0 0
      %258 = vperm.xlu0 %257, %v244
      %v259 = vpop.permute.xlu0 %258
      %262 = vset.pattern.permute.xlu0 0
      %263 = vperm.xlu0 %262, %v245
      %v264 = vpop.permute.xlu0 %263
      %v267 = vcombine.high %v237, %v237
      %vm268 = vcmask 31744
      %v270 = vsel %vm268, %v238, 0
      %v273 = vsel %vm268, %v239, 0
      %v276 = vsel %vm268, %v240, 0
      %v279 = vsel %vm268, %v241, 0
      %vm281 = vcmask 1043456
      %v282 = vsel %vm281, %v237, 0
      %v284 = vsel %vm281, %v267, 0
      %286 = vmatprep.subr.mxu0 0.0
      %287 = vmatpush1.msra.mxu0 0.0
      %288 = vmatprep.subr.mxu0 0.0
      %289 = vmatpush1.msra.mxu0 0.0
      %290 = vmatprep.subr.mxu0 0.0
      %291 = vmatpush1.msra.mxu0 0.0
      %292 = vmatprep.subr.mxu0 0.0
      %293 = vmatpush1.msra.mxu0 0.0
      %294 = vmatprep.subr.mxu0 0.0
      %295 = vmatpush1.msra.mxu0 0.0
      %296 = vmatprep.subr.mxu0 0.0
      %297 = vmatpush1.msra.mxu0 0.0
      %298 = vmatprep.subr.mxu0 0.0
      %299 = vmatpush1.msra.mxu0 0.0
      %300 = vmatprep.subr.mxu0 0.0
      %301 = vmatpush1.msra.mxu0 0.0
      %302 = vmatprep.subr.mxu0 0.0
      %303 = vmatpush1.msra.mxu0 0.0
      %304 = vmatprep.subr.mxu0 0.0
      %305 = vmatpush1.msra.mxu0 0.0
      %306 = vmatprep.subr.mxu0 0.0
      %307 = vmatpush1.msra.mxu0 0.0
      %308 = vmatprep.subr.mxu0 0.0
      %309 = vmatpush1.msra.mxu0 0.0
      %310 = vmatprep.subr.mxu0 0.0
      %311 = vmatpush1.msra.mxu0 0.0
      %312 = vmatprep.subr.mxu0 0.0
      %313 = vmatpush1.msra.mxu0 0.0
      %314 = vmatprep.subr.mxu0 0.0
      %315 = vmatpush1.msra.mxu0 0.0
      %316 = vmatprep.subr.mxu0 %v284
      %317 = vmatpush1.msra.mxu0 %v282
      %318 = vmatprep.subr.mxu0 0.0
      %319 = vmatpush2.msra.mxu0 0.0
      %320 = vmatprep.subr.mxu0 0.0
      %321 = vmatpush2.msra.mxu0 0.0
      %322 = vmatprep.subr.mxu0 0.0
      %323 = vmatpush2.msra.mxu0 0.0
      %324 = vmatprep.subr.mxu0 0.0
      %325 = vmatpush2.msra.mxu0 0.0
      %326 = vmatprep.subr.mxu0 0.0
      %327 = vmatpush2.msra.mxu0 0.0
      %328 = vmatprep.subr.mxu0 0.0
      %329 = vmatpush2.msra.mxu0 0.0
      %330 = vmatprep.subr.mxu0 0.0
      %331 = vmatpush2.msra.mxu0 0.0
      %332 = vmatprep.subr.mxu0 0.0
      %333 = vmatpush2.msra.mxu0 0.0
      %334 = vmatprep.subr.mxu0 0.0
      %335 = vmatpush2.msra.mxu0 0.0
      %336 = vmatprep.subr.mxu0 0.0
      %337 = vmatpush2.msra.mxu0 0.0
      %338 = vmatprep.subr.mxu0 0.0
      %339 = vmatpush2.msra.mxu0 0.0
      %340 = vmatprep.subr.mxu0 0.0
      %341 = vmatpush2.msra.mxu0 0.0
      %342 = vmatprep.subr.mxu0 0.0
      %343 = vmatpush2.msra.mxu0 0.0
      %344 = vmatprep.subr.mxu0 0.0
      %345 = vmatpush2.msra.mxu0 0.0
      %346 = vmatprep.subr.mxu0 0.0
      %347 = vmatpush2.msra.mxu0 0.0
      %348 = vmatprep.subr.mxu0 0.0
      %349 = vmatpush2.msra.mxu0 0.0
      %350 = vmatprep.mubr.f32.mxu0 0.0
      %351 = vmatmul.mubr.f32.gmra.mxu0 %v270
      %v352 = vpop.f32.mrf.mxu0
      %v353 = vadd.f32 %v249, %v352
      %v354 = vpop.f32.mrf.mxu0
      %v355 = vadd.f32 %v249, %v354
      %356 = vmatprep.mubr.f32.mxu0 0.0
      %357 = vmatmul.mubr.f32.gmra.mxu0 %v273
      %v358 = vpop.f32.mrf.mxu0
      %v359 = vadd.f32 %v254, %v358
      %v360 = vpop.f32.mrf.mxu0
      %v361 = vadd.f32 %v254, %v360
      %362 = vmatprep.mubr.f32.mxu0 0.0
      %363 = vmatmul.mubr.f32.gmra.mxu0 %v276
      %v364 = vpop.f32.mrf.mxu0
      %v365 = vadd.f32 %v259, %v364
      %v366 = vpop.f32.mrf.mxu0
      %v367 = vadd.f32 %v259, %v366
      %368 = vmatprep.mubr.f32.mxu0 0.0
      %369 = vmatmul.mubr.f32.gmra.mxu0 %v279
      %v370 = vpop.f32.mrf.mxu0
      %v371 = vadd.f32 %v264, %v370
      %v372 = vpop.f32.mrf.mxu0
      %v373 = vadd.f32 %v264, %v372
      %374 = vdwg.mxu0
      %v375 = vmax.f32 %v353, 0.0
      %v376 = vmax.f32 %v355, 0.0
      %v377 = vmax.f32 %v359, 0.0
      %v378 = vmax.f32 %v361, 0.0
      %v379 = vmax.f32 %v365, 0.0
      %v380 = vmax.f32 %v367, 0.0
      %v381 = vmax.f32 %v371, 0.0
      %v382 = vmax.f32 %v373, 0.0
      %v383 = vld [vmem:[%s3] sm:$0xff]
      %v384 = vld [vmem:[%s3 + $0x8] sm:$0xff]
      %v385 = vld [vmem:[%s3 + $0x10] sm:$0xff]
      %v386 = vld [vmem:[%s3 + $0x18] sm:$0xff]
      %v387 = vld [vmem:[%s3 + $0x20] sm:$0xff]
      %v388 = vld [vmem:[%s3 + $0x28] sm:$0xff]
      %v389 = vld [vmem:[%s3 + $0x30] sm:$0xff]
      %v390 = vld [vmem:[%s3 + $0x38] sm:$0xff]
      %v391 = vld [vmem:[%s4] sm:$0xff]
      %v392 = vld [vmem:[%s4 + $0x8] sm:$0xff]
      %v393 = vld [vmem:[%s4 + $0x10] sm:$0xff]
      %v394 = vld [vmem:[%s4 + $0x18] sm:$0xff]
      %v395 = vld [vmem:[%s4 + $0x20] sm:$0xff]
      %v396 = vld [vmem:[%s4 + $0x28] sm:$0xff]
      %v397 = vld [vmem:[%s4 + $0x30] sm:$0xff]
      %v398 = vld [vmem:[%s4 + $0x38] sm:$0xff]
      %400 = vset.pattern.permute.xlu0 0
      %401 = vperm.xlu0 %400, %v391
      %v402 = vpop.permute.xlu0 %401
      %405 = vset.pattern.permute.xlu0 0
      %406 = vperm.xlu0 %405, %v392
      %v407 = vpop.permute.xlu0 %406
      %410 = vset.pattern.permute.xlu0 0
      %411 = vperm.xlu0 %410, %v393
      %v412 = vpop.permute.xlu0 %411
      %415 = vset.pattern.permute.xlu0 0
      %416 = vperm.xlu0 %415, %v394
      %v417 = vpop.permute.xlu0 %416
      %420 = vset.pattern.permute.xlu0 0
      %421 = vperm.xlu0 %420, %v395
      %v422 = vpop.permute.xlu0 %421
      %425 = vset.pattern.permute.xlu0 0
      %426 = vperm.xlu0 %425, %v396
      %v427 = vpop.permute.xlu0 %426
      %430 = vset.pattern.permute.xlu0 0
      %431 = vperm.xlu0 %430, %v397
      %v432 = vpop.permute.xlu0 %431
      %435 = vset.pattern.permute.xlu0 0
      %436 = vperm.xlu0 %435, %v398
      %v437 = vpop.permute.xlu0 %436
      %vm439 = vcmask 261120
      %v441 = vsel %vm439, %v383, 0
      %v444 = vsel %vm439, %v384, 0
      %v447 = vsel %vm439, %v385, 0
      %v450 = vsel %vm439, %v386, 0
      %v453 = vsel %vm439, %v387, 0
      %v456 = vsel %vm439, %v388, 0
      %v459 = vsel %vm439, %v389, 0
      %v462 = vsel %vm439, %v390, 0
      %464 = vmatprep.subr.mxu0 0.0
      %465 = vmatpush1.msra.mxu0 0.0
      %466 = vmatprep.subr.mxu0 0.0
      %467 = vmatpush1.msra.mxu0 0.0
      %468 = vmatprep.subr.mxu0 0.0
      %469 = vmatpush1.msra.mxu0 0.0
      %470 = vmatprep.subr.mxu0 0.0
      %471 = vmatpush1.msra.mxu0 0.0
      %472 = vmatprep.subr.mxu0 0.0
      %473 = vmatpush1.msra.mxu0 0.0
      %474 = vmatprep.subr.mxu0 0.0
      %475 = vmatpush1.msra.mxu0 0.0
      %476 = vmatprep.subr.mxu0 0.0
      %477 = vmatpush1.msra.mxu0 0.0
      %478 = vmatprep.subr.mxu0 0.0
      %479 = vmatpush1.msra.mxu0 0.0
      %480 = vmatprep.subr.mxu0 0.0
      %481 = vmatpush1.msra.mxu0 0.0
      %482 = vmatprep.subr.mxu0 0.0
      %483 = vmatpush1.msra.mxu0 0.0
      %484 = vmatprep.subr.mxu0 0.0
      %485 = vmatpush1.msra.mxu0 0.0
      %486 = vmatprep.subr.mxu0 0.0
      %487 = vmatpush1.msra.mxu0 0.0
      %488 = vmatprep.subr.mxu0 %v382
      %489 = vmatpush1.msra.mxu0 %v381
      %490 = vmatprep.subr.mxu0 %v380
      %491 = vmatpush1.msra.mxu0 %v379
      %492 = vmatprep.subr.mxu0 %v378
      %493 = vmatpush1.msra.mxu0 %v377
      %494 = vmatprep.subr.mxu0 %v376
      %495 = vmatpush1.msra.mxu0 %v375
      %496 = vmatprep.subr.mxu0 0.0
      %497 = vmatpush2.msra.mxu0 0.0
      %498 = vmatprep.subr.mxu0 0.0
      %499 = vmatpush2.msra.mxu0 0.0
      %500 = vmatprep.subr.mxu0 0.0
      %501 = vmatpush2.msra.mxu0 0.0
      %502 = vmatprep.subr.mxu0 0.0
      %503 = vmatpush2.msra.mxu0 0.0
      %504 = vmatprep.subr.mxu0 0.0
      %505 = vmatpush2.msra.mxu0 0.0
      %506 = vmatprep.subr.mxu0 0.0
      %507 = vmatpush2.msra.mxu0 0.0
      %508 = vmatprep.subr.mxu0 0.0
      %509 = vmatpush2.msra.mxu0 0.0
      %510 = vmatprep.subr.mxu0 0.0
      %511 = vmatpush2.msra.mxu0 0.0
      %512 = vmatprep.subr.mxu0 0.0
      %513 = vmatpush2.msra.mxu0 0.0
      %514 = vmatprep.subr.mxu0 0.0
      %515 = vmatpush2.msra.mxu0 0.0
      %516 = vmatprep.subr.mxu0 0.0
      %517 = vmatpush2.msra.mxu0 0.0
      %518 = vmatprep.subr.mxu0 0.0
      %519 = vmatpush2.msra.mxu0 0.0
      %520 = vmatprep.subr.mxu0 0.0
      %521 = vmatpush2.msra.mxu0 0.0
      %522 = vmatprep.subr.mxu0 0.0
      %523 = vmatpush2.msra.mxu0 0.0
      %524 = vmatprep.subr.mxu0 0.0
      %525 = vmatpush2.msra.mxu0 0.0
      %526 = vmatprep.subr.mxu0 0.0
      %527 = vmatpush2.msra.mxu0 0.0
      %528 = vmatprep.mubr.f32.mxu0 0.0
      %529 = vmatmul.mubr.f32.gmra.mxu0 %v441
      %v530 = vpop.f32.mrf.mxu0
      %v531 = vadd.f32 %v402, %v530
      %v532 = vpop.f32.mrf.mxu0
      %v533 = vadd.f32 %v402, %v532
      %534 = vmatprep.mubr.f32.mxu0 0.0
      %535 = vmatmul.mubr.f32.gmra.mxu0 %v444
      %v536 = vpop.f32.mrf.mxu0
      %v537 = vadd.f32 %v407, %v536
      %v538 = vpop.f32.mrf.mxu0
      %v539 = vadd.f32 %v407, %v538
      %540 = vmatprep.mubr.f32.mxu0 0.0
      %541 = vmatmul.mubr.f32.gmra.mxu0 %v447
      %v542 = vpop.f32.mrf.mxu0
      %v543 = vadd.f32 %v412, %v542
      %v544 = vpop.f32.mrf.mxu0
      %v545 = vadd.f32 %v412, %v544
      %546 = vmatprep.mubr.f32.mxu0 0.0
      %547 = vmatmul.mubr.f32.gmra.mxu0 %v450
      %v548 = vpop.f32.mrf.mxu0
      %v549 = vadd.f32 %v417, %v548
      %v550 = vpop.f32.mrf.mxu0
      %v551 = vadd.f32 %v417, %v550
      %552 = vmatprep.mubr.f32.mxu0 0.0
      %553 = vmatmul.mubr.f32.gmra.mxu0 %v453
      %v554 = vpop.f32.mrf.mxu0
      %v555 = vadd.f32 %v422, %v554
      %v556 = vpop.f32.mrf.mxu0
      %v557 = vadd.f32 %v422, %v556
      %558 = vmatprep.mubr.f32.mxu0 0.0
      %559 = vmatmul.mubr.f32.gmra.mxu0 %v456
      %v560 = vpop.f32.mrf.mxu0
      %v561 = vadd.f32 %v427, %v560
      %v562 = vpop.f32.mrf.mxu0
      %v563 = vadd.f32 %v427, %v562
      %564 = vmatprep.mubr.f32.mxu0 0.0
      %565 = vmatmul.mubr.f32.gmra.mxu0 %v459
      %v566 = vpop.f32.mrf.mxu0
      %v567 = vadd.f32 %v432, %v566
      %v568 = vpop.f32.mrf.mxu0
      %v569 = vadd.f32 %v432, %v568
      %570 = vmatprep.mubr.f32.mxu0 0.0
      %571 = vmatmul.mubr.f32.gmra.mxu0 %v462
      %v572 = vpop.f32.mrf.mxu0
      %v573 = vadd.f32 %v437, %v572
      %v574 = vpop.f32.mrf.mxu0
      %v575 = vadd.f32 %v437, %v574
      %576 = vdwg.mxu0
      %v577 = vmax.f32 %v531, 0.0
      %v578 = vmax.f32 %v533, 0.0
      %v579 = vmax.f32 %v537, 0.0
      %v580 = vmax.f32 %v539, 0.0
      %v581 = vmax.f32 %v543, 0.0
      %v582 = vmax.f32 %v545, 0.0
      %v583 = vmax.f32 %v549, 0.0
      %v584 = vmax.f32 %v551, 0.0
      %v585 = vmax.f32 %v555, 0.0
      %v586 = vmax.f32 %v557, 0.0
      %v587 = vmax.f32 %v561, 0.0
      %v588 = vmax.f32 %v563, 0.0
      %v589 = vmax.f32 %v567, 0.0
      %v590 = vmax.f32 %v569, 0.0
      %v591 = vmax.f32 %v573, 0.0
      %v592 = vmax.f32 %v575, 0.0
      %p593 = scmp.eq.s32.totalorder %s18, 0
      // Predicated region
      $region41: #{sparse_equivariant_forward.5} parent=39 // pred_check
        %p594 = pneg %p593
      $region42: #{sparse_equivariant_forward.5} parent=39 // pred_check_branch
        %596 = sbr.rel (%p594) target = $region44
      $region43: #{sparse_equivariant_forward.5} parent=39 // pred_region
        %vm597 = vcmask 7168
        %598 = vst.msk [vmem:[%s5] sm:$0xff] %vm597, 0.0
        %599 = vst.msk [vmem:[%s5 + $0x8] sm:$0xff] %vm597, 0.0
        %600 = vst.msk [vmem:[%s5 + $0x10] sm:$0xff] %vm597, 0.0
        %601 = vst.msk [vmem:[%s5 + $0x18] sm:$0xff] %vm597, 0.0
        %602 = vst.msk [vmem:[%s5 + $0x20] sm:$0xff] %vm597, 0.0
        %603 = vst.msk [vmem:[%s5 + $0x28] sm:$0xff] %vm597, 0.0
        %604 = vst.msk [vmem:[%s5 + $0x30] sm:$0xff] %vm597, 0.0
        %605 = vst.msk [vmem:[%s5 + $0x38] sm:$0xff] %vm597, 0.0
        %606 = vst.msk [vmem:[%s6] sm:$0xff] %vm597, 0.0
        %607 = vst.msk [vmem:[%s6 + $0x8] sm:$0xff] %vm597, 0.0
        %608 = vst.msk [vmem:[%s6 + $0x10] sm:$0xff] %vm597, 0.0
        %609 = vst.msk [vmem:[%s6 + $0x18] sm:$0xff] %vm597, 0.0
        %610 = vst.msk [vmem:[%s6 + $0x20] sm:$0xff] %vm597, 0.0
        %611 = vst.msk [vmem:[%s6 + $0x28] sm:$0xff] %vm597, 0.0
        %612 = vst.msk [vmem:[%s6 + $0x30] sm:$0xff] %vm597, 0.0
        %613 = vst.msk [vmem:[%s6 + $0x38] sm:$0xff] %vm597, 0.0
      $region44: #{sparse_equivariant_forward.5} parent=39 // pred_fallthru
        _
      %v614 = vlaneseq
      %v615 = vand.u32 %v614, 127
      %v616 = vadd.s32 %v615, 128
      %s617 = smul.u32 %s18, 256
      %v618 = vstv %s617
      %v619 = vadd.s32 %v618, %v615
      %v620 = vadd.s32 %v618, %v616
      %vm621 = vcmp.lt.s32.totalorder %v619, 1000
      %vm622 = vcmp.lt.s32.totalorder %v620, 1000
      %v623 = vsel %vm621, 1, 0
      %v624 = vsel %vm622, 1, 0
      %vm625 = vcmp.eq.s32.totalorder %v623, 1
      %vm626 = vcmp.eq.s32.totalorder %v624, 1
      %v627 = vsel %vm625, %v577, 0.0
      %v628 = vsel %vm626, %v578, 0.0
      %v629 = vsel %vm625, %v579, 0.0
      %v630 = vsel %vm626, %v580, 0.0
      %v631 = vsel %vm625, %v581, 0.0
      %v632 = vsel %vm626, %v582, 0.0
      %v633 = vsel %vm625, %v583, 0.0
      %v634 = vsel %vm626, %v584, 0.0
      %v635 = vsel %vm625, %v585, 0.0
      %v636 = vsel %vm626, %v586, 0.0
      %v637 = vsel %vm625, %v587, 0.0
      %v638 = vsel %vm626, %v588, 0.0
      %v639 = vsel %vm625, %v589, 0.0
      %v640 = vsel %vm626, %v590, 0.0
      %v641 = vsel %vm625, %v591, 0.0
      %v642 = vsel %vm626, %v592, 0.0
      %v643 = vld [vmem:[%s5] sm:$0xff]
      %v644 = vld [vmem:[%s5 + $0x8] sm:$0xff]
      %v645 = vld [vmem:[%s5 + $0x10] sm:$0xff]
      %v646 = vld [vmem:[%s5 + $0x18] sm:$0xff]
      %v647 = vld [vmem:[%s5 + $0x20] sm:$0xff]
      %v648 = vld [vmem:[%s5 + $0x28] sm:$0xff]
      %v649 = vld [vmem:[%s5 + $0x30] sm:$0xff]
      %v650 = vld [vmem:[%s5 + $0x38] sm:$0xff]
      %v651 = vadd.f32 %v627, %v628
      %652 = vadd.xlane.f32.xlu0 %v651
      %v653 = vpop.xlane.xlu0 %652
      %v654 = vadd.f32 %v629, %v630
      %655 = vadd.xlane.f32.xlu0 %v654
      %v656 = vpop.xlane.xlu0 %655
      %v657 = vadd.f32 %v631, %v632
      %658 = vadd.xlane.f32.xlu0 %v657
      %v659 = vpop.xlane.xlu0 %658
      %v660 = vadd.f32 %v633, %v634
      %661 = vadd.xlane.f32.xlu0 %v660
      %v662 = vpop.xlane.xlu0 %661
      %v663 = vadd.f32 %v635, %v636
      %664 = vadd.xlane.f32.xlu0 %v663
      %v665 = vpop.xlane.xlu0 %664
      %v666 = vadd.f32 %v637, %v638
      %667 = vadd.xlane.f32.xlu0 %v666
      %v668 = vpop.xlane.xlu0 %667
      %v669 = vadd.f32 %v639, %v640
      %670 = vadd.xlane.f32.xlu0 %v669
      %v671 = vpop.xlane.xlu0 %670
      %v672 = vadd.f32 %v641, %v642
      %673 = vadd.xlane.f32.xlu0 %v672
      %v674 = vpop.xlane.xlu0 %673
      %v675 = vadd.f32 %v643, %v653
      %v676 = vadd.f32 %v644, %v656
      %v677 = vadd.f32 %v645, %v659
      %v678 = vadd.f32 %v646, %v662
      %v679 = vadd.f32 %v647, %v665
      %v680 = vadd.f32 %v648, %v668
      %v681 = vadd.f32 %v649, %v671
      %v682 = vadd.f32 %v650, %v674
      %vm683 = vcmask 7168
      %684 = vst.msk [vmem:[%s5] sm:$0xff] %vm683, %v675
      %685 = vst.msk [vmem:[%s5 + $0x8] sm:$0xff] %vm683, %v676
      %686 = vst.msk [vmem:[%s5 + $0x10] sm:$0xff] %vm683, %v677
      %687 = vst.msk [vmem:[%s5 + $0x18] sm:$0xff] %vm683, %v678
      %688 = vst.msk [vmem:[%s5 + $0x20] sm:$0xff] %vm683, %v679
      %689 = vst.msk [vmem:[%s5 + $0x28] sm:$0xff] %vm683, %v680
      %690 = vst.msk [vmem:[%s5 + $0x30] sm:$0xff] %vm683, %v681
      %691 = vst.msk [vmem:[%s5 + $0x38] sm:$0xff] %vm683, %v682
      %v692 = vld [vmem:[%s6] sm:$0xff]
      %v693 = vld [vmem:[%s6 + $0x8] sm:$0xff]
      %v694 = vld [vmem:[%s6 + $0x10] sm:$0xff]
      %v695 = vld [vmem:[%s6 + $0x18] sm:$0xff]
      %v696 = vld [vmem:[%s6 + $0x20] sm:$0xff]
      %v697 = vld [vmem:[%s6 + $0x28] sm:$0xff]
      %v698 = vld [vmem:[%s6 + $0x30] sm:$0xff]
      %v699 = vld [vmem:[%s6 + $0x38] sm:$0xff]
      %v700 = vmul.f32 %v627, %v627
      %v701 = vmul.f32 %v628, %v628
      %v702 = vmul.f32 %v629, %v629
      %v703 = vmul.f32 %v630, %v630
      %v704 = vmul.f32 %v631, %v631
      %v705 = vmul.f32 %v632, %v632
      %v706 = vmul.f32 %v633, %v633
      %v707 = vmul.f32 %v634, %v634
      %v708 = vmul.f32 %v635, %v635
      %v709 = vmul.f32 %v636, %v636
      %v710 = vmul.f32 %v637, %v637
      %v711 = vmul.f32 %v638, %v638
      %v712 = vmul.f32 %v639, %v639
      %v713 = vmul.f32 %v640, %v640
      %v714 = vmul.f32 %v641, %v641
      %v715 = vmul.f32 %v642, %v642
      %v716 = vadd.f32 %v700, %v701
      %717 = vadd.xlane.f32.xlu0 %v716
      %v718 = vpop.xlane.xlu0 %717
      %v719 = vadd.f32 %v702, %v703
      %720 = vadd.xlane.f32.xlu0 %v719
      %v721 = vpop.xlane.xlu0 %720
      %v722 = vadd.f32 %v704, %v705
      %723 = vadd.xlane.f32.xlu0 %v722
      %v724 = vpop.xlane.xlu0 %723
      %v725 = vadd.f32 %v706, %v707
      %726 = vadd.xlane.f32.xlu0 %v725
      %v727 = vpop.xlane.xlu0 %726
      %v728 = vadd.f32 %v708, %v709
      %729 = vadd.xlane.f32.xlu0 %v728
      %v730 = vpop.xlane.xlu0 %729
      %v731 = vadd.f32 %v710, %v711
      %732 = vadd.xlane.f32.xlu0 %v731
      %v733 = vpop.xlane.xlu0 %732
      %v734 = vadd.f32 %v712, %v713
      %735 = vadd.xlane.f32.xlu0 %v734
      %v736 = vpop.xlane.xlu0 %735
      %v737 = vadd.f32 %v714, %v715
      %738 = vadd.xlane.f32.xlu0 %v737
      %v739 = vpop.xlane.xlu0 %738
      %v740 = vadd.f32 %v692, %v718
      %v741 = vadd.f32 %v693, %v721
      %v742 = vadd.f32 %v694, %v724
      %v743 = vadd.f32 %v695, %v727
      %v744 = vadd.f32 %v696, %v730
      %v745 = vadd.f32 %v697, %v733
      %v746 = vadd.f32 %v698, %v736
      %v747 = vadd.f32 %v699, %v739
      %748 = vst.msk [vmem:[%s6] sm:$0xff] %vm683, %v740
      %749 = vst.msk [vmem:[%s6 + $0x8] sm:$0xff] %vm683, %v741
      %750 = vst.msk [vmem:[%s6 + $0x10] sm:$0xff] %vm683, %v742
      %751 = vst.msk [vmem:[%s6 + $0x18] sm:$0xff] %vm683, %v743
      %752 = vst.msk [vmem:[%s6 + $0x20] sm:$0xff] %vm683, %v744
      %753 = vst.msk [vmem:[%s6 + $0x28] sm:$0xff] %vm683, %v745
      %754 = vst.msk [vmem:[%s6 + $0x30] sm:$0xff] %vm683, %v746
      %755 = vst.msk [vmem:[%s6 + $0x38] sm:$0xff] %vm683, %v747
      // Predicated region
      $region45: #{sparse_equivariant_forward.5} parent=39 // pred_check
        %p756 = pneg %p141
      $region46: #{sparse_equivariant_forward.5} parent=39 // pred_check_branch
        %758 = sbr.rel (%p756) target = $region48
      $region47: #{sparse_equivariant_forward.5} parent=39 // pred_region
        _
      $region48: #{sparse_equivariant_forward.5} parent=39 // pred_fallthru
        _
      // Predicated region
      $region49: #{sparse_equivariant_forward.5} parent=39 // pred_check
        %p759 = pneg %p162
      $region50: #{sparse_equivariant_forward.5} parent=39 // pred_check_branch
        %761 = sbr.rel (%p759) target = $region52
      $region51: #{sparse_equivariant_forward.5} parent=39 // pred_region
        _
      $region52: #{sparse_equivariant_forward.5} parent=39 // pred_fallthru
        _
      // Predicated region
      $region53: #{sparse_equivariant_forward.5} parent=39 // pred_check
        %p762 = pneg %p141
      $region54: #{sparse_equivariant_forward.5} parent=39 // pred_check_branch
        %764 = sbr.rel (%p762) target = $region56
      $region55: #{sparse_equivariant_forward.5} parent=39 // pred_region
        _
      $region56: #{sparse_equivariant_forward.5} parent=39 // pred_fallthru
        _
      // Predicated region
      $region57: #{sparse_equivariant_forward.5} parent=39 // pred_check
        %p765 = pneg %p162
      $region58: #{sparse_equivariant_forward.5} parent=39 // pred_check_branch
        %767 = sbr.rel (%p765) target = $region60
      $region59: #{sparse_equivariant_forward.5} parent=39 // pred_region
        _
      $region60: #{sparse_equivariant_forward.5} parent=39 // pred_fallthru
        _
    $region40: #{sparse_equivariant_forward.5} parent=5 // pred_fallthru
      _
    %p768 = scmp.le.s32.totalorder 2, %s13
    // Predicated region
    $region61: #{sparse_equivariant_forward.5} parent=5 // pred_check
      %p769 = pneg %p768
    $region62: #{sparse_equivariant_forward.5} parent=5 // pred_check_branch
      %771 = sbr.rel (%p769) target = $region64
    $region63: #{sparse_equivariant_forward.5} parent=5 // pred_region
      %s772 = ssub.s32 %s13, 2
    $region64: #{sparse_equivariant_forward.5} parent=5 // pred_fallthru
      _
  $region6: #{sparse_equivariant_forward.5} parent=0 // loop_footer
    %s17 = sadd.s32 1, %s13
  $region7: #{sparse_equivariant_forward.5} parent=0 // loop_footer_branch
    %12 = sbr.rel target = $region3
  $region8: #{sparse_equivariant_forward.5} parent=0 // loop_exit
    _

// kernel: sparse_equivariant_forward.7
$region0: #{sparse_equivariant_forward.7}
  #allocation0 [shape = 'u32[]', space=smem, size = 0x4, offset = 0x4, fixed_abs, tag = 'smem constant byte address 0x4 - core index']
  #allocation1 [shape = 'u32[144,128]{1,0:T(1,128)}', space=vmem, size = 0x12000, scoped, tag = 'internal scratch']
  %s0 = inlined_call_operand.vmem [shape: f32[32,1000], index: 0, kind: input, shape index: {}]
  %s1 = inlined_call_operand.vmem [shape: f32[4,32], index: 1, kind: input, shape index: {}]
  %s2 = inlined_call_operand.vmem [shape: f32[4,1], index: 2, kind: input, shape index: {}]
  %s3 = inlined_call_operand.hbm [shape: f32[4,1000], index: 3, kind: output, shape index: {}]
  %s4 = sld [smem:[#allocation0]]
  $region68: #{sparse_equivariant_forward.7} parent=0
    _
  %s6 = ssub.s32 1, %s4
  %s7 = scalar_select 0, %s6, %s4
  $region1: #{sparse_equivariant_forward.7} parent=0
    #allocation2 [shape = 'u8[65536]{0}', space=vmem, size = 0x10000, scoped, tag = 'input window, operand 0']
    #allocation3 [shape = 'u8[8192]{0}', space=vmem, size = 0x2000, scoped, tag = 'output window, operand 0']
    #allocation4 [shape = 's32[2]{0}', space=sflag, size = 0x8, scoped, tag = 'scoped memory for sparse_equivariant_forward.7']
    %8 = vsyncpa [#allocation4], 0
    %s9 = scalar_lea.sflag [#allocation4], 1
    %10 = vsyncpa %s9, 0
    loop: start=0, step=1, limit=6
    $region2: #{sparse_equivariant_forward.7} parent=1 // loop_pre_header
      _
    $region3: #{sparse_equivariant_forward.7} parent=1 // loop_header
      %s12 = sphi 0, %s16
      %p13 = scmp.ge.s32.totalorder %s12, 6
      %s22 = sphi 0, %s24
      %s25 = sphi 0, %s22
      %s26 = sphi 0, %s25
      %s42 = sphi 0, %s26
      %s46 = sphi 0, %s46
      %s48 = sphi 0, %s46
      %s49 = sphi 0, %s48
      %s63 = sphi 0, %s49
      %s67 = sphi 0, %s67
      %s69 = sphi 0, %s67
      %s70 = sphi 0, %s69
      %s84 = sphi 0, %s70
      %s90 = sphi 0, %s92
      %s93 = sphi 0, %s90
      %s94 = sphi 0, %s93
      %s110 = sphi 0, %s94
    $region4: #{sparse_equivariant_forward.7} parent=1 // loop_header_branch
      %15 = sbr.rel (%p13) target = $region8
    $region5: #{sparse_equivariant_forward.7} parent=1 // loop_body
      %s17 = ssub.s32 %s12, 1
      %s18 = ssub.s32 %s12, 2
      %s19 = sadd.s32 %s12, 1
      %s20 = ssub.s32 %s12, %s19
      %p21 = scmp.eq.s32.totalorder %s20, 0
      %s23 = sadd.s32 %s22, 1
      %s24 = scalar_select %p21, %s22, %s23
      %p27 = pneg %p21
      %p28 = scmp.eq.s32.totalorder %s12, 3
      %p29 = por %p27, %p28
      %p30 = scmp.ne.s32.totalorder %s22, %s25
      %p31 = scmp.eq.s32.totalorder %s12, 0
      %p32 = por %p30, %p31
      %p33 = scmp.ne.s32.totalorder %s22, %s25
      %p34 = scmp.eq.s32.totalorder %s17, 3
      %p35 = por %p33, %p34
      %p36 = scmp.ne.s32.totalorder %s25, %s26
      %p37 = scmp.eq.s32.totalorder %s17, 0
      %p38 = por %p36, %p37
      %p39 = scmp.ne.s32.totalorder %s25, %s26
      %p40 = scmp.eq.s32.totalorder %s18, 3
      %p41 = por %p39, %p40
      %p43 = scmp.ne.s32.totalorder %s26, %s42
      %p44 = scmp.eq.s32.totalorder %s18, 0
      %p45 = por %p43, %p44
      %s47 = sadd.s32 %s46, 1
      %p50 = scmp.eq.s32.totalorder %s12, 3
      %p51 = scmp.ne.s32.totalorder %s46, %s48
      %p52 = scmp.eq.s32.totalorder %s12, 0
      %p53 = por %p51, %p52
      %p54 = scmp.ne.s32.totalorder %s46, %s48
      %p55 = scmp.eq.s32.totalorder %s17, 3
      %p56 = por %p54, %p55
      %p57 = scmp.ne.s32.totalorder %s48, %s49
      %p58 = scmp.eq.s32.totalorder %s17, 0
      %p59 = por %p57, %p58
      %p60 = scmp.ne.s32.totalorder %s48, %s49
      %p61 = scmp.eq.s32.totalorder %s18, 3
      %p62 = por %p60, %p61
      %p64 = scmp.ne.s32.totalorder %s49, %s63
      %p65 = scmp.eq.s32.totalorder %s18, 0
      %p66 = por %p64, %p65
      %s68 = sadd.s32 %s67, 1
      %p71 = scmp.eq.s32.totalorder %s12, 3
      %p72 = scmp.ne.s32.totalorder %s67, %s69
      %p73 = scmp.eq.s32.totalorder %s12, 0
      %p74 = por %p72, %p73
      %p75 = scmp.ne.s32.totalorder %s67, %s69
      %p76 = scmp.eq.s32.totalorder %s17, 3
      %p77 = por %p75, %p76
      %p78 = scmp.ne.s32.totalorder %s69, %s70
      %p79 = scmp.eq.s32.totalorder %s17, 0
      %p80 = por %p78, %p79
      %p81 = scmp.ne.s32.totalorder %s69, %s70
      %p82 = scmp.eq.s32.totalorder %s18, 3
      %p83 = por %p81, %p82
      %p85 = scmp.ne.s32.totalorder %s70, %s84
      %p86 = scmp.eq.s32.totalorder %s18, 0
      %p87 = por %p85, %p86
      %s88 = ssub.s32 %s12, %s19
      %p89 = scmp.eq.s32.totalorder %s88, 0
      %s91 = sadd.s32 %s90, 1
      %s92 = scalar_select %p89, %s90, %s91
      %p95 = pneg %p89
      %p96 = scmp.eq.s32.totalorder %s12, 3
      %p97 = por %p95, %p96
      %p98 = scmp.ne.s32.totalorder %s90, %s93
      %p99 = scmp.eq.s32.totalorder %s12, 0
      %p100 = por %p98, %p99
      %p101 = scmp.ne.s32.totalorder %s90, %s93
      %p102 = scmp.eq.s32.totalorder %s17, 3
      %p103 = por %p101, %p102
      %p104 = scmp.ne.s32.totalorder %s93, %s94
      %p105 = scmp.eq.s32.totalorder %s17, 0
      %p106 = por %p104, %p105
      %p107 = scmp.ne.s32.totalorder %s93, %s94
      %p108 = scmp.eq.s32.totalorder %s18, 3
      %p109 = por %p107, %p108
      %p111 = scmp.ne.s32.totalorder %s94, %s110
      %p112 = scmp.eq.s32.totalorder %s18, 0
      %p113 = por %p111, %p112
      %p114 = scmp.le.s32.totalorder 1, %s12
      %p115 = scmp.lt.s32.totalorder %s12, 5
      %p116 = pnand %p114, %p115
      %p117 = pneg %p116
      // Predicated region
      $region9: #{sparse_equivariant_forward.7} parent=5 // pred_check
        _
      $region10: #{sparse_equivariant_forward.7} parent=5 // pred_check_branch
        %119 = sbr.rel (%p116) target = $region12
      $region11: #{sparse_equivariant_forward.7} parent=5 // pred_region
        %s120 = ssub.s32 %s12, 1
        // Predicated region
        $region13: #{sparse_equivariant_forward.7} parent=11 // pred_check
          %p121 = pneg %p59
        $region14: #{sparse_equivariant_forward.7} parent=11 // pred_check_branch
          %123 = sbr.rel (%p121) target = $region16
        $region15: #{sparse_equivariant_forward.7} parent=11 // pred_region
          _
        $region16: #{sparse_equivariant_forward.7} parent=11 // pred_fallthru
          _
        // Predicated region
        $region17: #{sparse_equivariant_forward.7} parent=11 // pred_check
          %p124 = pneg %p80
        $region18: #{sparse_equivariant_forward.7} parent=11 // pred_check_branch
          %126 = sbr.rel (%p124) target = $region20
        $region19: #{sparse_equivariant_forward.7} parent=11 // pred_region
          _
        $region20: #{sparse_equivariant_forward.7} parent=11 // pred_fallthru
          _
      $region12: #{sparse_equivariant_forward.7} parent=5 // pred_fallthru
        _
      %p127 = scmp.lt.s32.totalorder %s12, 4
      // Predicated region
      $region21: #{sparse_equivariant_forward.7} parent=5 // pred_check
        %p128 = pneg %p127
      $region22: #{sparse_equivariant_forward.7} parent=5 // pred_check_branch
        %130 = sbr.rel (%p128) target = $region24
      $region23: #{sparse_equivariant_forward.7} parent=5 // pred_region
        // Predicated region
        $region25: #{sparse_equivariant_forward.7} parent=23 // pred_check
          %p131 = pneg %p32
        $region26: #{sparse_equivariant_forward.7} parent=23 // pred_check_branch
          %133 = sbr.rel (%p131) target = $region28
        $region27: #{sparse_equivariant_forward.7} parent=23 // pred_region
          %s134 = sand.u32 %s22, 1
          %s135 = sand.u32 %s22, 1
          %s136 = smul.addr %s135, 64
          %s137 = scalar_lea.vmem [#allocation2], %s136
          %s138 = smul.u32 2, %s12
          %s139 = smul.addr %s138, 8
          %s140 = scalar_lea.vmem %s0, %s139
          // Predicated region
          $region29: #{sparse_equivariant_forward.7} parent=27 // pred_check
            _
          $region30: #{sparse_equivariant_forward.7} parent=27 // pred_check_branch
            %142 = sbr.rel (0) target = $region32
          $region31: #{sparse_equivariant_forward.7} parent=27 // pred_region
            // Predicated region
            $region33: #{sparse_equivariant_forward.7} parent=31 // pred_check
              _
            $region34: #{sparse_equivariant_forward.7} parent=31 // pred_check_branch
              %144 = sbr.rel (0) target = $region36
            $region35: #{sparse_equivariant_forward.7} parent=31 // pred_region
              loop: start=0, step=1, limit=1
              $region37: #{sparse_equivariant_forward.7} parent=35 // loop_pre_header
                _
              $region38: #{sparse_equivariant_forward.7} parent=35 // loop_header
                %s146 = sphi 0, %s150
                %p147 = scmp.ge.s32.totalorder %s146, 1
                %s151 = sphi %s140, %s140
                %s152 = sphi %s137, %s137
              $region39: #{sparse_equivariant_forward.7} parent=35 // loop_header_branch
                %149 = sbr.rel (%p147) target = $region43
              $region40: #{sparse_equivariant_forward.7} parent=35 // loop_body
                %v153 = vld [vmem:[%s151] sm:$0xff]
                %154 = vst [vmem:[%s152] sm:$0xff] %v153
                %v155 = vld [vmem:[%s151 + $0x8] sm:$0xff]
                %156 = vst [vmem:[%s152 + $0x8] sm:$0xff] %v155
                %v157 = vld [vmem:[%s151 + $0x40] sm:$0xff]
                %158 = vst [vmem:[%s152 + $0x10] sm:$0xff] %v157
                %v159 = vld [vmem:[%s151 + $0x48] sm:$0xff]
                %160 = vst [vmem:[%s152 + $0x18] sm:$0xff] %v159
                %v161 = vld [vmem:[%s151 + $0x80] sm:$0xff]
                %162 = vst [vmem:[%s152 + $0x20] sm:$0xff] %v161
                %v163 = vld [vmem:[%s151 + $0x88] sm:$0xff]
                %164 = vst [vmem:[%s152 + $0x28] sm:$0xff] %v163
                %v165 = vld [vmem:[%s151 + $0xc0] sm:$0xff]
                %166 = vst [vmem:[%s152 + $0x30] sm:$0xff] %v165
                %v167 = vld [vmem:[%s151 + $0xc8] sm:$0xff]
                %168 = vst [vmem:[%s152 + $0x38] sm:$0xff] %v167
              $region41: #{sparse_equivariant_forward.7} parent=35 // loop_footer
                %s150 = sadd.s32 1, %s146
              $region42: #{sparse_equivariant_forward.7} parent=35 // loop_footer_branch
                %145 = sbr.rel target = $region38
              $region43: #{sparse_equivariant_forward.7} parent=35 // loop_exit
                _
            $region36: #{sparse_equivariant_forward.7} parent=31 // pred_fallthru
              _
            // Predicated region
            $region44: #{sparse_equivariant_forward.7} parent=31 // pred_check
              _
            $region45: #{sparse_equivariant_forward.7} parent=31 // pred_check_branch
              %170 = sbr.rel target = $region47
            $region46: #{sparse_equivariant_forward.7} parent=31 // pred_region
              _
            $region47: #{sparse_equivariant_forward.7} parent=31 // pred_fallthru
              _
          $region32: #{sparse_equivariant_forward.7} parent=27 // pred_fallthru
            _
          %171 = vnop
        $region28: #{sparse_equivariant_forward.7} parent=23 // pred_fallthru
          _
      $region24: #{sparse_equivariant_forward.7} parent=5 // pred_fallthru
        _
      %p172 = scmp.le.s32.totalorder 1, %s12
      %p173 = scmp.lt.s32.totalorder %s12, 5
      %p174 = pnand %p172, %p173
      %p175 = pneg %p174
      // Predicated region
      $region48: #{sparse_equivariant_forward.7} parent=5 // pred_check
        _
      $region49: #{sparse_equivariant_forward.7} parent=5 // pred_check_branch
        %177 = sbr.rel (%p174) target = $region51
      $region50: #{sparse_equivariant_forward.7} parent=5 // pred_region
        %s178 = ssub.s32 %s12, 1
        %s179 = sand.u32 %s25, 1
        %s180 = sand.u32 %s25, 1
        %s181 = smul.addr %s180, 64
        %s182 = scalar_lea.vmem [#allocation2], %s181
        // Predicated region
        $region52: #{sparse_equivariant_forward.7} parent=50 // pred_check
          %p183 = pneg %p38
        $region53: #{sparse_equivariant_forward.7} parent=50 // pred_check_branch
          %185 = sbr.rel (%p183) target = $region55
        $region54: #{sparse_equivariant_forward.7} parent=50 // pred_region
          _
        $region55: #{sparse_equivariant_forward.7} parent=50 // pred_fallthru
          _
        %s186 = sand.u32 %s25, 1
        %s187 = sand.u32 %s25, 1
        %s188 = smul.addr %s187, 64
        %s189 = scalar_lea.vmem [#allocation2], %s188
        %p190 = pneg %p38
        %p191 = pneg %p35
        %p192 = pneg %p59
        %p193 = pneg %p56
        %p194 = pneg %p80
        %p195 = pneg %p77
        %p196 = pneg %p106
        %p197 = pneg %p103
        %s198 = sand.u32 %s93, 1
        %s199 = scalar_lea.sflag [#allocation4], %s198
        %s200 = sand.u32 %s93, 1
        %s201 = smul.addr %s200, 8
        %s202 = scalar_lea.vmem [#allocation3], %s201
        %s203 = smul.u32 2, %s17
        %s204 = smul.u32 2, %s17
        %v205 = vld [vmem:[%s182] sm:$0xff]
        %v206 = vld [vmem:[%s182 + $0x8] sm:$0xff]
        %v207 = vld [vmem:[%s182 + $0x10] sm:$0xff]
        %v208 = vld [vmem:[%s182 + $0x18] sm:$0xff]
        %v209 = vld [vmem:[%s182 + $0x20] sm:$0xff]
        %v210 = vld [vmem:[%s182 + $0x28] sm:$0xff]
        %v211 = vld [vmem:[%s182 + $0x30] sm:$0xff]
        %v212 = vld [vmem:[%s182 + $0x38] sm:$0xff]
        %v213 = vld [vmem:[%s1] sm:$0xf]
        %v214 = vld [vmem:[%s2] sm:$0xf]
        %216 = vset.pattern.permute.xlu0 0
        %217 = vperm.xlu0 %216, %v214
        %v218 = vpop.permute.xlu0 %217
        %vm220 = vcmask 261120
        %v222 = vsel %vm220, %v213, 0
        %224 = vmatprep.subr.mxu0 0.0
        %225 = vmatpush1.msra.mxu0 0.0
        %226 = vmatprep.subr.mxu0 0.0
        %227 = vmatpush1.msra.mxu0 0.0
        %228 = vmatprep.subr.mxu0 0.0
        %229 = vmatpush1.msra.mxu0 0.0
        %230 = vmatprep.subr.mxu0 0.0
        %231 = vmatpush1.msra.mxu0 0.0
        %232 = vmatprep.subr.mxu0 0.0
        %233 = vmatpush1.msra.mxu0 0.0
        %234 = vmatprep.subr.mxu0 0.0
        %235 = vmatpush1.msra.mxu0 0.0
        %236 = vmatprep.subr.mxu0 0.0
        %237 = vmatpush1.msra.mxu0 0.0
        %238 = vmatprep.subr.mxu0 0.0
        %239 = vmatpush1.msra.mxu0 0.0
        %240 = vmatprep.subr.mxu0 0.0
        %241 = vmatpush1.msra.mxu0 0.0
        %242 = vmatprep.subr.mxu0 0.0
        %243 = vmatpush1.msra.mxu0 0.0
        %244 = vmatprep.subr.mxu0 0.0
        %245 = vmatpush1.msra.mxu0 0.0
        %246 = vmatprep.subr.mxu0 0.0
        %247 = vmatpush1.msra.mxu0 0.0
        %248 = vmatprep.subr.mxu0 %v212
        %249 = vmatpush1.msra.mxu0 %v211
        %250 = vmatprep.subr.mxu0 %v210
        %251 = vmatpush1.msra.mxu0 %v209
        %252 = vmatprep.subr.mxu0 %v208
        %253 = vmatpush1.msra.mxu0 %v207
        %254 = vmatprep.subr.mxu0 %v206
        %255 = vmatpush1.msra.mxu0 %v205
        %256 = vmatprep.subr.mxu0 0.0
        %257 = vmatpush2.msra.mxu0 0.0
        %258 = vmatprep.subr.mxu0 0.0
        %259 = vmatpush2.msra.mxu0 0.0
        %260 = vmatprep.subr.mxu0 0.0
        %261 = vmatpush2.msra.mxu0 0.0
        %262 = vmatprep.subr.mxu0 0.0
        %263 = vmatpush2.msra.mxu0 0.0
        %264 = vmatprep.subr.mxu0 0.0
        %265 = vmatpush2.msra.mxu0 0.0
        %266 = vmatprep.subr.mxu0 0.0
        %267 = vmatpush2.msra.mxu0 0.0
        %268 = vmatprep.subr.mxu0 0.0
        %269 = vmatpush2.msra.mxu0 0.0
        %270 = vmatprep.subr.mxu0 0.0
        %271 = vmatpush2.msra.mxu0 0.0
        %272 = vmatprep.subr.mxu0 0.0
        %273 = vmatpush2.msra.mxu0 0.0
        %274 = vmatprep.subr.mxu0 0.0
        %275 = vmatpush2.msra.mxu0 0.0
        %276 = vmatprep.subr.mxu0 0.0
        %277 = vmatpush2.msra.mxu0 0.0
        %278 = vmatprep.subr.mxu0 0.0
        %279 = vmatpush2.msra.mxu0 0.0
        %280 = vmatprep.subr.mxu0 0.0
        %281 = vmatpush2.msra.mxu0 0.0
        %282 = vmatprep.subr.mxu0 0.0
        %283 = vmatpush2.msra.mxu0 0.0
        %284 = vmatprep.subr.mxu0 0.0
        %285 = vmatpush2.msra.mxu0 0.0
        %286 = vmatprep.subr.mxu0 0.0
        %287 = vmatpush2.msra.mxu0 0.0
        %288 = vmatprep.mubr.f32.mxu0 0.0
        %289 = vmatmul.mubr.f32.gmra.mxu0 %v222
        %v290 = vpop.f32.mrf.mxu0
        %v291 = vadd.f32 %v218, %v290
        %v292 = vpop.f32.mrf.mxu0
        %v293 = vadd.f32 %v218, %v292
        %294 = vdwg.mxu0
        %v297 = vcombine.low %v291, %v293
        %299 = vst [vmem:[%s202] sm:$0xff] %v297
        %s300 = sand.u32 %s93, 1
        %s301 = scalar_lea.sflag [#allocation4], %s300
        %s302 = sand.u32 %s93, 1
        %s303 = smul.addr %s302, 8
        %s304 = scalar_lea.vmem [#allocation3], %s303
        // Predicated region
        $region56: #{sparse_equivariant_forward.7} parent=50 // pred_check
          %p305 = pneg %p103
        $region57: #{sparse_equivariant_forward.7} parent=50 // pred_check_branch
          %307 = sbr.rel (%p305) target = $region59
        $region58: #{sparse_equivariant_forward.7} parent=50 // pred_region
          %s308 = smul.u32 2, %s17
          %s310 = ssub.s32 128, 128
          %311 = vsyncadd %s301, %s310
          %s312 = smul.addr %s308, 64
          %s313 = scalar_lea.hbm %s3, %s312
          %s315 = sshll.u32 %s304, 4
          %s316 = int_to_ptr.vmem [resolvable:$true] %s315
          %318 = dma.vmem_to_hbm [thread:$0]  %s316, 128, %s313, %s301
        $region59: #{sparse_equivariant_forward.7} parent=50 // pred_fallthru
          _
      $region51: #{sparse_equivariant_forward.7} parent=5 // pred_fallthru
        _
      %p319 = scmp.le.s32.totalorder 2, %s12
      // Predicated region
      $region60: #{sparse_equivariant_forward.7} parent=5 // pred_check
        %p320 = pneg %p319
      $region61: #{sparse_equivariant_forward.7} parent=5 // pred_check_branch
        %322 = sbr.rel (%p320) target = $region63
      $region62: #{sparse_equivariant_forward.7} parent=5 // pred_region
        %s323 = ssub.s32 %s12, 2
        // Predicated region
        $region64: #{sparse_equivariant_forward.7} parent=62 // pred_check
          %p324 = pneg %p109
        $region65: #{sparse_equivariant_forward.7} parent=62 // pred_check_branch
          %326 = sbr.rel (%p324) target = $region67
        $region66: #{sparse_equivariant_forward.7} parent=62 // pred_region
          %s327 = sand.u32 %s94, 1
          %s328 = scalar_lea.sflag [#allocation4], %s327
          %s329 = sand.u32 %s94, 1
          %s330 = smul.addr %s329, 8
          %s331 = scalar_lea.vmem [#allocation3], %s330
          %332 = dma.done %s328, 128
        $region67: #{sparse_equivariant_forward.7} parent=62 // pred_fallthru
          _
      $region63: #{sparse_equivariant_forward.7} parent=5 // pred_fallthru
        _
    $region6: #{sparse_equivariant_forward.7} parent=1 // loop_footer
      %s16 = sadd.s32 1, %s12
    $region7: #{sparse_equivariant_forward.7} parent=1 // loop_footer_branch
      %11 = sbr.rel target = $region3
    $region8: #{sparse_equivariant_forward.7} parent=1 // loop_exit
      _
    %333 = vsyncpa [#allocation4], 1
    %s334 = scalar_lea.sflag [#allocation4], 1
    %335 = vsyncpa %s334, 1

// kernel: sparse_equivariant_forward.6
$region0: #{sparse_equivariant_forward.6}
  #allocation0 [shape = 'u32[]', space=smem, size = 0x4, offset = 0x4, fixed_abs, tag = 'smem constant byte address 0x4 - core index']
  #allocation1 [shape = 'u32[144,128]{1,0:T(1,128)}', space=vmem, size = 0x12000, scoped, tag = 'internal scratch']
  %s0 = inlined_call_operand.vmem [shape: f32[4,1000], index: 0, kind: input, shape index: {}]
  %s1 = inlined_call_operand.vmem [shape: f32[32,4], index: 1, kind: input, shape index: {}]
  %s2 = inlined_call_operand.vmem [shape: f32[32,1], index: 2, kind: input, shape index: {}]
  %s3 = inlined_call_operand.vmem [shape: f32[64,32], index: 3, kind: input, shape index: {}]
  %s4 = inlined_call_operand.vmem [shape: f32[64,1], index: 4, kind: input, shape index: {}]
  %s5 = inlined_call_operand.vmem [shape: f32[32,64], index: 5, kind: input, shape index: {}]
  %s6 = inlined_call_operand.vmem [shape: f32[32,1], index: 6, kind: input, shape index: {}]
  %s7 = inlined_call_operand.vmem [shape: f32[32,1000], index: 7, kind: output, shape index: {0}]
  %s8 = inlined_call_operand.vmem [shape: f32[32,1], index: 8, kind: output, shape index: {1}]
  %s9 = inlined_call_operand.vmem [shape: f32[32,1], index: 9, kind: output, shape index: {2}]
  %10 = xla_tuple %s7, %s8, %s9
  %s11 = sld [smem:[#allocation0]]
  $region100: #{sparse_equivariant_forward.6} parent=0
    _
  %s13 = ssub.s32 1, %s11
  %s14 = scalar_select 0, %s13, %s11
  $region1: #{sparse_equivariant_forward.6} parent=0
    #allocation2 [shape = 'u8[65536]{0}', space=vmem, size = 0x10000, scoped, tag = 'output window, operand 0']
    loop: start=0, step=1, limit=6
    $region2: #{sparse_equivariant_forward.6} parent=1 // loop_pre_header
      _
    $region3: #{sparse_equivariant_forward.6} parent=1 // loop_header
      %s16 = sphi 0, %s20
      %p17 = scmp.ge.s32.totalorder %s16, 6
      %s26 = sphi 0, %s28
      %s29 = sphi 0, %s26
      %s30 = sphi 0, %s29
      %s46 = sphi 0, %s30
      %s50 = sphi 0, %s50
      %s52 = sphi 0, %s50
      %s53 = sphi 0, %s52
      %s67 = sphi 0, %s53
      %s71 = sphi 0, %s71
      %s73 = sphi 0, %s71
      %s74 = sphi 0, %s73
      %s88 = sphi 0, %s74
      %s92 = sphi 0, %s92
      %s94 = sphi 0, %s92
      %s95 = sphi 0, %s94
      %s109 = sphi 0, %s95
      %s113 = sphi 0, %s113
      %s115 = sphi 0, %s113
      %s116 = sphi 0, %s115
      %s130 = sphi 0, %s116
      %s134 = sphi 0, %s134
      %s136 = sphi 0, %s134
      %s137 = sphi 0, %s136
      %s151 = sphi 0, %s137
      %s155 = sphi 0, %s155
      %s157 = sphi 0, %s155
      %s158 = sphi 0, %s157
      %s172 = sphi 0, %s158
      %s178 = sphi 0, %s180
      %s181 = sphi 0, %s178
      %s182 = sphi 0, %s181
      %s198 = sphi 0, %s182
      %s202 = sphi 0, %s202
      %s204 = sphi 0, %s202
      %s205 = sphi 0, %s204
      %s219 = sphi 0, %s205
      %s223 = sphi 0, %s223
      %s225 = sphi 0, %s223
      %s226 = sphi 0, %s225
      %s240 = sphi 0, %s226
    $region4: #{sparse_equivariant_forward.6} parent=1 // loop_header_branch
      %19 = sbr.rel (%p17) target = $region8
    $region5: #{sparse_equivariant_forward.6} parent=1 // loop_body
      %s21 = ssub.s32 %s16, 1
      %s22 = ssub.s32 %s16, 2
      %s23 = sadd.s32 %s16, 1
      %s24 = ssub.s32 %s16, %s23
      %p25 = scmp.eq.s32.totalorder %s24, 0
      %s27 = sadd.s32 %s26, 1
      %s28 = scalar_select %p25, %s26, %s27
      %p31 = pneg %p25
      %p32 = scmp.eq.s32.totalorder %s16, 3
      %p33 = por %p31, %p32
      %p34 = scmp.ne.s32.totalorder %s26, %s29
      %p35 = scmp.eq.s32.totalorder %s16, 0
      %p36 = por %p34, %p35
      %p37 = scmp.ne.s32.totalorder %s26, %s29
      %p38 = scmp.eq.s32.totalorder %s21, 3
      %p39 = por %p37, %p38
      %p40 = scmp.ne.s32.totalorder %s29, %s30
      %p41 = scmp.eq.s32.totalorder %s21, 0
      %p42 = por %p40, %p41
      %p43 = scmp.ne.s32.totalorder %s29, %s30
      %p44 = scmp.eq.s32.totalorder %s22, 3
      %p45 = por %p43, %p44
      %p47 = scmp.ne.s32.totalorder %s30, %s46
      %p48 = scmp.eq.s32.totalorder %s22, 0
      %p49 = por %p47, %p48
      %s51 = sadd.s32 %s50, 1
      %p54 = scmp.eq.s32.totalorder %s16, 3
      %p55 = scmp.ne.s32.totalorder %s50, %s52
      %p56 = scmp.eq.s32.totalorder %s16, 0
      %p57 = por %p55, %p56
      %p58 = scmp.ne.s32.totalorder %s50, %s52
      %p59 = scmp.eq.s32.totalorder %s21, 3
      %p60 = por %p58, %p59
      %p61 = scmp.ne.s32.totalorder %s52, %s53
      %p62 = scmp.eq.s32.totalorder %s21, 0
      %p63 = por %p61, %p62
      %p64 = scmp.ne.s32.totalorder %s52, %s53
      %p65 = scmp.eq.s32.totalorder %s22, 3
      %p66 = por %p64, %p65
      %p68 = scmp.ne.s32.totalorder %s53, %s67
      %p69 = scmp.eq.s32.totalorder %s22, 0
      %p70 = por %p68, %p69
      %s72 = sadd.s32 %s71, 1
      %p75 = scmp.eq.s32.totalorder %s16, 3
      %p76 = scmp.ne.s32.totalorder %s71, %s73
      %p77 = scmp.eq.s32.totalorder %s16, 0
      %p78 = por %p76, %p77
      %p79 = scmp.ne.s32.totalorder %s71, %s73
      %p80 = scmp.eq.s32.totalorder %s21, 3
      %p81 = por %p79, %p80
      %p82 = scmp.ne.s32.totalorder %s73, %s74
      %p83 = scmp.eq.s32.totalorder %s21, 0
      %p84 = por %p82, %p83
      %p85 = scmp.ne.s32.totalorder %s73, %s74
      %p86 = scmp.eq.s32.totalorder %s22, 3
      %p87 = por %p85, %p86
      %p89 = scmp.ne.s32.totalorder %s74, %s88
      %p90 = scmp.eq.s32.totalorder %s22, 0
      %p91 = por %p89, %p90
      %s93 = sadd.s32 %s92, 1
      %p96 = scmp.eq.s32.totalorder %s16, 3
      %p97 = scmp.ne.s32.totalorder %s92, %s94
      %p98 = scmp.eq.s32.totalorder %s16, 0
      %p99 = por %p97, %p98
      %p100 = scmp.ne.s32.totalorder %s92, %s94
      %p101 = scmp.eq.s32.totalorder %s21, 3
      %p102 = por %p100, %p101
      %p103 = scmp.ne.s32.totalorder %s94, %s95
      %p104 = scmp.eq.s32.totalorder %s21, 0
      %p105 = por %p103, %p104
      %p106 = scmp.ne.s32.totalorder %s94, %s95
      %p107 = scmp.eq.s32.totalorder %s22, 3
      %p108 = por %p106, %p107
      %p110 = scmp.ne.s32.totalorder %s95, %s109
      %p111 = scmp.eq.s32.totalorder %s22, 0
      %p112 = por %p110, %p111
      %s114 = sadd.s32 %s113, 1
      %p117 = scmp.eq.s32.totalorder %s16, 3
      %p118 = scmp.ne.s32.totalorder %s113, %s115
      %p119 = scmp.eq.s32.totalorder %s16, 0
      %p120 = por %p118, %p119
      %p121 = scmp.ne.s32.totalorder %s113, %s115
      %p122 = scmp.eq.s32.totalorder %s21, 3
      %p123 = por %p121, %p122
      %p124 = scmp.ne.s32.totalorder %s115, %s116
      %p125 = scmp.eq.s32.totalorder %s21, 0
      %p126 = por %p124, %p125
      %p127 = scmp.ne.s32.totalorder %s115, %s116
      %p128 = scmp.eq.s32.totalorder %s22, 3
      %p129 = por %p127, %p128
      %p131 = scmp.ne.s32.totalorder %s116, %s130
      %p132 = scmp.eq.s32.totalorder %s22, 0
      %p133 = por %p131, %p132
      %s135 = sadd.s32 %s134, 1
      %p138 = scmp.eq.s32.totalorder %s16, 3
      %p139 = scmp.ne.s32.totalorder %s134, %s136
      %p140 = scmp.eq.s32.totalorder %s16, 0
      %p141 = por %p139, %p140
      %p142 = scmp.ne.s32.totalorder %s134, %s136
      %p143 = scmp.eq.s32.totalorder %s21, 3
      %p144 = por %p142, %p143
      %p145 = scmp.ne.s32.totalorder %s136, %s137
      %p146 = scmp.eq.s32.totalorder %s21, 0
      %p147 = por %p145, %p146
      %p148 = scmp.ne.s32.totalorder %s136, %s137
      %p149 = scmp.eq.s32.totalorder %s22, 3
      %p150 = por %p148, %p149
      %p152 = scmp.ne.s32.totalorder %s137, %s151
      %p153 = scmp.eq.s32.totalorder %s22, 0
      %p154 = por %p152, %p153
      %s156 = sadd.s32 %s155, 1
      %p159 = scmp.eq.s32.totalorder %s16, 3
      %p160 = scmp.ne.s32.totalorder %s155, %s157
      %p161 = scmp.eq.s32.totalorder %s16, 0
      %p162 = por %p160, %p161
      %p163 = scmp.ne.s32.totalorder %s155, %s157
      %p164 = scmp.eq.s32.totalorder %s21, 3
      %p165 = por %p163, %p164
      %p166 = scmp.ne.s32.totalorder %s157, %s158
      %p167 = scmp.eq.s32.totalorder %s21, 0
      %p168 = por %p166, %p167
      %p169 = scmp.ne.s32.totalorder %s157, %s158
      %p170 = scmp.eq.s32.totalorder %s22, 3
      %p171 = por %p169, %p170
      %p173 = scmp.ne.s32.totalorder %s158, %s172
      %p174 = scmp.eq.s32.totalorder %s22, 0
      %p175 = por %p173, %p174
      %s176 = ssub.s32 %s16, %s23
      %p177 = scmp.eq.s32.totalorder %s176, 0
      %s179 = sadd.s32 %s178, 1
      %s180 = scalar_select %p177, %s178, %s179
      %p183 = pneg %p177
      %p184 = scmp.eq.s32.totalorder %s16, 3
      %p185 = por %p183, %p184
      %p186 = scmp.ne.s32.totalorder %s178, %s181
      %p187 = scmp.eq.s32.totalorder %s16, 0
      %p188 = por %p186, %p187
      %p189 = scmp.ne.s32.totalorder %s178, %s181
      %p190 = scmp.eq.s32.totalorder %s21, 3
      %p191 = por %p189, %p190
      %p192 = scmp.ne.s32.totalorder %s181, %s182
      %p193 = scmp.eq.s32.totalorder %s21, 0
      %p194 = por %p192, %p193
      %p195 = scmp.ne.s32.totalorder %s181, %s182
      %p196 = scmp.eq.s32.totalorder %s22, 3
      %p197 = por %p195, %p196
      %p199 = scmp.ne.s32.totalorder %s182, %s198
      %p200 = scmp.eq.s32.totalorder %s22, 0
      %p201 = por %p199, %p200
      %s203 = sadd.s32 %s202, 1
      %p206 = scmp.eq.s32.totalorder %s16, 3
      %p207 = scmp.ne.s32.totalorder %s202, %s204
      %p208 = scmp.eq.s32.totalorder %s16, 0
      %p209 = por %p207, %p208
      %p210 = scmp.ne.s32.totalorder %s202, %s204
      %p211 = scmp.eq.s32.totalorder %s21, 3
      %p212 = por %p210, %p211
      %p213 = scmp.ne.s32.totalorder %s204, %s205
      %p214 = scmp.eq.s32.totalorder %s21, 0
      %p215 = por %p213, %p214
      %p216 = scmp.ne.s32.totalorder %s204, %s205
      %p217 = scmp.eq.s32.totalorder %s22, 3
      %p218 = por %p216, %p217
      %p220 = scmp.ne.s32.totalorder %s205, %s219
      %p221 = scmp.eq.s32.totalorder %s22, 0
      %p222 = por %p220, %p221
      %s224 = sadd.s32 %s223, 1
      %p227 = scmp.eq.s32.totalorder %s16, 3
      %p228 = scmp.ne.s32.totalorder %s223, %s225
      %p229 = scmp.eq.s32.totalorder %s16, 0
      %p230 = por %p228, %p229
      %p231 = scmp.ne.s32.totalorder %s223, %s225
      %p232 = scmp.eq.s32.totalorder %s21, 3
      %p233 = por %p231, %p232
      %p234 = scmp.ne.s32.totalorder %s225, %s226
      %p235 = scmp.eq.s32.totalorder %s21, 0
      %p236 = por %p234, %p235
      %p237 = scmp.ne.s32.totalorder %s225, %s226
      %p238 = scmp.eq.s32.totalorder %s22, 3
      %p239 = por %p237, %p238
      %p241 = scmp.ne.s32.totalorder %s226, %s240
      %p242 = scmp.eq.s32.totalorder %s22, 0
      %p243 = por %p241, %p242
      %p244 = scmp.le.s32.totalorder 1, %s16
      %p245 = scmp.lt.s32.totalorder %s16, 5
      %p246 = pnand %p244, %p245
      %p247 = pneg %p246
      // Predicated region
      $region9: #{sparse_equivariant_forward.6} parent=5 // pred_check
        _
      $region10: #{sparse_equivariant_forward.6} parent=5 // pred_check_branch
        %249 = sbr.rel (%p246) target = $region12
      $region11: #{sparse_equivariant_forward.6} parent=5 // pred_region
        %s250 = ssub.s32 %s16, 1
        // Predicated region
        $region13: #{sparse_equivariant_forward.6} parent=11 // pred_check
          %p251 = pneg %p63
        $region14: #{sparse_equivariant_forward.6} parent=11 // pred_check_branch
          %253 = sbr.rel (%p251) target = $region16
        $region15: #{sparse_equivariant_forward.6} parent=11 // pred_region
          _
        $region16: #{sparse_equivariant_forward.6} parent=11 // pred_fallthru
          _
        // Predicated region
        $region17: #{sparse_equivariant_forward.6} parent=11 // pred_check
          %p254 = pneg %p84
        $region18: #{sparse_equivariant_forward.6} parent=11 // pred_check_branch
          %256 = sbr.rel (%p254) target = $region20
        $region19: #{sparse_equivariant_forward.6} parent=11 // pred_region
          _
        $region20: #{sparse_equivariant_forward.6} parent=11 // pred_fallthru
          _
        // Predicated region
        $region21: #{sparse_equivariant_forward.6} parent=11 // pred_check
          %p257 = pneg %p105
        $region22: #{sparse_equivariant_forward.6} parent=11 // pred_check_branch
          %259 = sbr.rel (%p257) target = $region24
        $region23: #{sparse_equivariant_forward.6} parent=11 // pred_region
          _
        $region24: #{sparse_equivariant_forward.6} parent=11 // pred_fallthru
          _
        // Predicated region
        $region25: #{sparse_equivariant_forward.6} parent=11 // pred_check
          %p260 = pneg %p126
        $region26: #{sparse_equivariant_forward.6} parent=11 // pred_check_branch
          %262 = sbr.rel (%p260) target = $region28
        $region27: #{sparse_equivariant_forward.6} parent=11 // pred_region
          _
        $region28: #{sparse_equivariant_forward.6} parent=11 // pred_fallthru
          _
        // Predicated region
        $region29: #{sparse_equivariant_forward.6} parent=11 // pred_check
          %p263 = pneg %p147
        $region30: #{sparse_equivariant_forward.6} parent=11 // pred_check_branch
          %265 = sbr.rel (%p263) target = $region32
        $region31: #{sparse_equivariant_forward.6} parent=11 // pred_region
          _
        $region32: #{sparse_equivariant_forward.6} parent=11 // pred_fallthru
          _
        // Predicated region
        $region33: #{sparse_equivariant_forward.6} parent=11 // pred_check
          %p266 = pneg %p168
        $region34: #{sparse_equivariant_forward.6} parent=11 // pred_check_branch
          %268 = sbr.rel (%p266) target = $region36
        $region35: #{sparse_equivariant_forward.6} parent=11 // pred_region
          _
        $region36: #{sparse_equivariant_forward.6} parent=11 // pred_fallthru
          _
      $region12: #{sparse_equivariant_forward.6} parent=5 // pred_fallthru
        _
      %p269 = scmp.lt.s32.totalorder %s16, 4
      // Predicated region
      $region37: #{sparse_equivariant_forward.6} parent=5 // pred_check
        %p270 = pneg %p269
      $region38: #{sparse_equivariant_forward.6} parent=5 // pred_check_branch
        %272 = sbr.rel (%p270) target = $region40
      $region39: #{sparse_equivariant_forward.6} parent=5 // pred_region
        // Predicated region
        $region41: #{sparse_equivariant_forward.6} parent=39 // pred_check
          %p273 = pneg %p36
        $region42: #{sparse_equivariant_forward.6} parent=39 // pred_check_branch
          %275 = sbr.rel (%p273) target = $region44
        $region43: #{sparse_equivariant_forward.6} parent=39 // pred_region
          %s276 = smul.u32 2, %s16
          %p277 = scmp.lt.s32.totalorder %s276, 7
          %s278 = scalar_select %p277, %s276, 7
          %s279 = smul.addr %s278, 4
          %s280 = scalar_lea.vmem %s0, %s279
          %s281 = smul.u32 2, %s16
        $region44: #{sparse_equivariant_forward.6} parent=39 // pred_fallthru
          _
      $region40: #{sparse_equivariant_forward.6} parent=5 // pred_fallthru
        _
      %p282 = scmp.le.s32.totalorder 1, %s16
      %p283 = scmp.lt.s32.totalorder %s16, 5
      %p284 = pnand %p282, %p283
      %p285 = pneg %p284
      // Predicated region
      $region45: #{sparse_equivariant_forward.6} parent=5 // pred_check
        _
      $region46: #{sparse_equivariant_forward.6} parent=5 // pred_check_branch
        %287 = sbr.rel (%p284) target = $region48
      $region47: #{sparse_equivariant_forward.6} parent=5 // pred_region
        %s288 = ssub.s32 %s16, 1
        %s289 = smul.u32 2, %s21
        %p290 = scmp.lt.s32.totalorder %s289, 7
        %s291 = scalar_select %p290, %s289, 7
        %s292 = smul.addr %s291, 4
        %s293 = scalar_lea.vmem %s0, %s292
        %p294 = pneg %p42
        %p295 = pneg %p39
        %p296 = pneg %p63
        %p297 = pneg %p60
        %p298 = pneg %p84
        %p299 = pneg %p81
        %p300 = pneg %p105
        %p301 = pneg %p102
        %p302 = pneg %p126
        %p303 = pneg %p123
        %p304 = pneg %p147
        %p305 = pneg %p144
        %p306 = pneg %p168
        %p307 = pneg %p165
        %p308 = pneg %p194
        %p309 = pneg %p191
        %s310 = sand.u32 %s181, 1
        %s311 = sand.u32 %s181, 1
        %s312 = smul.addr %s311, 64
        %s313 = scalar_lea.vmem [#allocation2], %s312
        %p314 = pneg %p215
        %p315 = pneg %p212
        %p316 = pneg %p236
        %p317 = pneg %p233
        %s318 = smul.u32 2, %s21
        %p319 = scmp.lt.s32.totalorder %s318, 7
        %s320 = scalar_select %p319, %s318, 7
        %s321 = smul.addr %s320, 4
        %s322 = scalar_lea.vmem %s0, %s321
        %s323 = smul.u32 2, %s21
        %s324 = smul.u32 2, %s21
        %v325 = vld [vmem:[%s322] sm:$0xff]
        %v326 = vld [vmem:[%s1] sm:$0xff]
        %v327 = vld [vmem:[%s1 + $0x8] sm:$0xff]
        %v328 = vld [vmem:[%s1 + $0x10] sm:$0xff]
        %v329 = vld [vmem:[%s1 + $0x18] sm:$0xff]
        %v330 = vld [vmem:[%s2] sm:$0xff]
        %v331 = vld [vmem:[%s2 + $0x8] sm:$0xff]
        %v332 = vld [vmem:[%s2 + $0x10] sm:$0xff]
        %v333 = vld [vmem:[%s2 + $0x18] sm:$0xff]
        %335 = vset.pattern.permute.xlu0 0
        %336 = vperm.xlu0 %335, %v330
        %v337 = vpop.permute.xlu0 %336
        %340 = vset.pattern.permute.xlu0 0
        %341 = vperm.xlu0 %340, %v331
        %v342 = vpop.permute.xlu0 %341
        %345 = vset.pattern.permute.xlu0 0
        %346 = vperm.xlu0 %345, %v332
        %v347 = vpop.permute.xlu0 %346
        %350 = vset.pattern.permute.xlu0 0
        %351 = vperm.xlu0 %350, %v333
        %v352 = vpop.permute.xlu0 %351
        %v355 = vcombine.high %v325, %v325
        %vm356 = vcmask 31744
        %v358 = vsel %vm356, %v326, 0
        %v361 = vsel %vm356, %v327, 0
        %v364 = vsel %vm356, %v328, 0
        %v367 = vsel %vm356, %v329, 0
        %vm369 = vcmask 1043456
        %v370 = vsel %vm369, %v325, 0
        %v372 = vsel %vm369, %v355, 0
        %374 = vmatprep.subr.mxu0 0.0
        %375 = vmatpush1.msra.mxu0 0.0
        %376 = vmatprep.subr.mxu0 0.0
        %377 = vmatpush1.msra.mxu0 0.0
        %378 = vmatprep.subr.mxu0 0.0
        %379 = vmatpush1.msra.mxu0 0.0
        %380 = vmatprep.subr.mxu0 0.0
        %381 = vmatpush1.msra.mxu0 0.0
        %382 = vmatprep.subr.mxu0 0.0
        %383 = vmatpush1.msra.mxu0 0.0
        %384 = vmatprep.subr.mxu0 0.0
        %385 = vmatpush1.msra.mxu0 0.0
        %386 = vmatprep.subr.mxu0 0.0
        %387 = vmatpush1.msra.mxu0 0.0
        %388 = vmatprep.subr.mxu0 0.0
        %389 = vmatpush1.msra.mxu0 0.0
        %390 = vmatprep.subr.mxu0 0.0
        %391 = vmatpush1.msra.mxu0 0.0
        %392 = vmatprep.subr.mxu0 0.0
        %393 = vmatpush1.msra.mxu0 0.0
        %394 = vmatprep.subr.mxu0 0.0
        %395 = vmatpush1.msra.mxu0 0.0
        %396 = vmatprep.subr.mxu0 0.0
        %397 = vmatpush1.msra.mxu0 0.0
        %398 = vmatprep.subr.mxu0 0.0
        %399 = vmatpush1.msra.mxu0 0.0
        %400 = vmatprep.subr.mxu0 0.0
        %401 = vmatpush1.msra.mxu0 0.0
        %402 = vmatprep.subr.mxu0 0.0
        %403 = vmatpush1.msra.mxu0 0.0
        %404 = vmatprep.subr.mxu0 %v372
        %405 = vmatpush1.msra.mxu0 %v370
        %406 = vmatprep.subr.mxu0 0.0
        %407 = vmatpush2.msra.mxu0 0.0
        %408 = vmatprep.subr.mxu0 0.0
        %409 = vmatpush2.msra.mxu0 0.0
        %410 = vmatprep.subr.mxu0 0.0
        %411 = vmatpush2.msra.mxu0 0.0
        %412 = vmatprep.subr.mxu0 0.0
        %413 = vmatpush2.msra.mxu0 0.0
        %414 = vmatprep.subr.mxu0 0.0
        %415 = vmatpush2.msra.mxu0 0.0
        %416 = vmatprep.subr.mxu0 0.0
        %417 = vmatpush2.msra.mxu0 0.0
        %418 = vmatprep.subr.mxu0 0.0
        %419 = vmatpush2.msra.mxu0 0.0
        %420 = vmatprep.subr.mxu0 0.0
        %421 = vmatpush2.msra.mxu0 0.0
        %422 = vmatprep.subr.mxu0 0.0
        %423 = vmatpush2.msra.mxu0 0.0
        %424 = vmatprep.subr.mxu0 0.0
        %425 = vmatpush2.msra.mxu0 0.0
        %426 = vmatprep.subr.mxu0 0.0
        %427 = vmatpush2.msra.mxu0 0.0
        %428 = vmatprep.subr.mxu0 0.0
        %429 = vmatpush2.msra.mxu0 0.0
        %430 = vmatprep.subr.mxu0 0.0
        %431 = vmatpush2.msra.mxu0 0.0
        %432 = vmatprep.subr.mxu0 0.0
        %433 = vmatpush2.msra.mxu0 0.0
        %434 = vmatprep.subr.mxu0 0.0
        %435 = vmatpush2.msra.mxu0 0.0
        %436 = vmatprep.subr.mxu0 0.0
        %437 = vmatpush2.msra.mxu0 0.0
        %438 = vmatprep.mubr.f32.mxu0 0.0
        %439 = vmatmul.mubr.f32.gmra.mxu0 %v358
        %v440 = vpop.f32.mrf.mxu0
        %v441 = vadd.f32 %v337, %v440
        %v442 = vpop.f32.mrf.mxu0
        %v443 = vadd.f32 %v337, %v442
        %444 = vmatprep.mubr.f32.mxu0 0.0
        %445 = vmatmul.mubr.f32.gmra.mxu0 %v361
        %v446 = vpop.f32.mrf.mxu0
        %v447 = vadd.f32 %v342, %v446
        %v448 = vpop.f32.mrf.mxu0
        %v449 = vadd.f32 %v342, %v448
        %450 = vmatprep.mubr.f32.mxu0 0.0
        %451 = vmatmul.mubr.f32.gmra.mxu0 %v364
        %v452 = vpop.f32.mrf.mxu0
        %v453 = vadd.f32 %v347, %v452
        %v454 = vpop.f32.mrf.mxu0
        %v455 = vadd.f32 %v347, %v454
        %456 = vmatprep.mubr.f32.mxu0 0.0
        %457 = vmatmul.mubr.f32.gmra.mxu0 %v367
        %v458 = vpop.f32.mrf.mxu0
        %v459 = vadd.f32 %v352, %v458
        %v460 = vpop.f32.mrf.mxu0
        %v461 = vadd.f32 %v352, %v460
        %462 = vdwg.mxu0
        %v463 = vmax.f32 %v441, 0.0
        %v464 = vmax.f32 %v443, 0.0
        %v465 = vmax.f32 %v447, 0.0
        %v466 = vmax.f32 %v449, 0.0
        %v467 = vmax.f32 %v453, 0.0
        %v468 = vmax.f32 %v455, 0.0
        %v469 = vmax.f32 %v459, 0.0
        %v470 = vmax.f32 %v461, 0.0
        %v471 = vld [vmem:[%s3] sm:$0xff]
        %v472 = vld [vmem:[%s3 + $0x8] sm:$0xff]
        %v473 = vld [vmem:[%s3 + $0x10] sm:$0xff]
        %v474 = vld [vmem:[%s3 + $0x18] sm:$0xff]
        %v475 = vld [vmem:[%s3 + $0x20] sm:$0xff]
        %v476 = vld [vmem:[%s3 + $0x28] sm:$0xff]
        %v477 = vld [vmem:[%s3 + $0x30] sm:$0xff]
        %v478 = vld [vmem:[%s3 + $0x38] sm:$0xff]
        %v479 = vld [vmem:[%s4] sm:$0xff]
        %v480 = vld [vmem:[%s4 + $0x8] sm:$0xff]
        %v481 = vld [vmem:[%s4 + $0x10] sm:$0xff]
        %v482 = vld [vmem:[%s4 + $0x18] sm:$0xff]
        %v483 = vld [vmem:[%s4 + $0x20] sm:$0xff]
        %v484 = vld [vmem:[%s4 + $0x28] sm:$0xff]
        %v485 = vld [vmem:[%s4 + $0x30] sm:$0xff]
        %v486 = vld [vmem:[%s4 + $0x38] sm:$0xff]
        %488 = vset.pattern.permute.xlu0 0
        %489 = vperm.xlu0 %488, %v479
        %v490 = vpop.permute.xlu0 %489
        %493 = vset.pattern.permute.xlu0 0
        %494 = vperm.xlu0 %493, %v480
        %v495 = vpop.permute.xlu0 %494
        %498 = vset.pattern.permute.xlu0 0
        %499 = vperm.xlu0 %498, %v481
        %v500 = vpop.permute.xlu0 %499
        %503 = vset.pattern.permute.xlu0 0
        %504 = vperm.xlu0 %503, %v482
        %v505 = vpop.permute.xlu0 %504
        %508 = vset.pattern.permute.xlu0 0
        %509 = vperm.xlu0 %508, %v483
        %v510 = vpop.permute.xlu0 %509
        %513 = vset.pattern.permute.xlu0 0
        %514 = vperm.xlu0 %513, %v484
        %v515 = vpop.permute.xlu0 %514
        %518 = vset.pattern.permute.xlu0 0
        %519 = vperm.xlu0 %518, %v485
        %v520 = vpop.permute.xlu0 %519
        %523 = vset.pattern.permute.xlu0 0
        %524 = vperm.xlu0 %523, %v486
        %v525 = vpop.permute.xlu0 %524
        %vm527 = vcmask 261120
        %v529 = vsel %vm527, %v471, 0
        %v532 = vsel %vm527, %v472, 0
        %v535 = vsel %vm527, %v473, 0
        %v538 = vsel %vm527, %v474, 0
        %v541 = vsel %vm527, %v475, 0
        %v544 = vsel %vm527, %v476, 0
        %v547 = vsel %vm527, %v477, 0
        %v550 = vsel %vm527, %v478, 0
        %552 = vmatprep.subr.mxu0 0.0
        %553 = vmatpush1.msra.mxu0 0.0
        %554 = vmatprep.subr.mxu0 0.0
        %555 = vmatpush1.msra.mxu0 0.0
        %556 = vmatprep.subr.mxu0 0.0
        %557 = vmatpush1.msra.mxu0 0.0
        %558 = vmatprep.subr.mxu0 0.0
        %559 = vmatpush1.msra.mxu0 0.0
        %560 = vmatprep.subr.mxu0 0.0
        %561 = vmatpush1.msra.mxu0 0.0
        %562 = vmatprep.subr.mxu0 0.0
        %563 = vmatpush1.msra.mxu0 0.0
        %564 = vmatprep.subr.mxu0 0.0
        %565 = vmatpush1.msra.mxu0 0.0
        %566 = vmatprep.subr.mxu0 0.0
        %567 = vmatpush1.msra.mxu0 0.0
        %568 = vmatprep.subr.mxu0 0.0
        %569 = vmatpush1.msra.mxu0 0.0
        %570 = vmatprep.subr.mxu0 0.0
        %571 = vmatpush1.msra.mxu0 0.0
        %572 = vmatprep.subr.mxu0 0.0
        %573 = vmatpush1.msra.mxu0 0.0
        %574 = vmatprep.subr.mxu0 0.0
        %575 = vmatpush1.msra.mxu0 0.0
        %576 = vmatprep.subr.mxu0 %v470
        %577 = vmatpush1.msra.mxu0 %v469
        %578 = vmatprep.subr.mxu0 %v468
        %579 = vmatpush1.msra.mxu0 %v467
        %580 = vmatprep.subr.mxu0 %v466
        %581 = vmatpush1.msra.mxu0 %v465
        %582 = vmatprep.subr.mxu0 %v464
        %583 = vmatpush1.msra.mxu0 %v463
        %584 = vmatprep.subr.mxu0 0.0
        %585 = vmatpush2.msra.mxu0 0.0
        %586 = vmatprep.subr.mxu0 0.0
        %587 = vmatpush2.msra.mxu0 0.0
        %588 = vmatprep.subr.mxu0 0.0
        %589 = vmatpush2.msra.mxu0 0.0
        %590 = vmatprep.subr.mxu0 0.0
        %591 = vmatpush2.msra.mxu0 0.0
        %592 = vmatprep.subr.mxu0 0.0
        %593 = vmatpush2.msra.mxu0 0.0
        %594 = vmatprep.subr.mxu0 0.0
        %595 = vmatpush2.msra.mxu0 0.0
        %596 = vmatprep.subr.mxu0 0.0
        %597 = vmatpush2.msra.mxu0 0.0
        %598 = vmatprep.subr.mxu0 0.0
        %599 = vmatpush2.msra.mxu0 0.0
        %600 = vmatprep.subr.mxu0 0.0
        %601 = vmatpush2.msra.mxu0 0.0
        %602 = vmatprep.subr.mxu0 0.0
        %603 = vmatpush2.msra.mxu0 0.0
        %604 = vmatprep.subr.mxu0 0.0
        %605 = vmatpush2.msra.mxu0 0.0
        %606 = vmatprep.subr.mxu0 0.0
        %607 = vmatpush2.msra.mxu0 0.0
        %608 = vmatprep.subr.mxu0 0.0
        %609 = vmatpush2.msra.mxu0 0.0
        %610 = vmatprep.subr.mxu0 0.0
        %611 = vmatpush2.msra.mxu0 0.0
        %612 = vmatprep.subr.mxu0 0.0
        %613 = vmatpush2.msra.mxu0 0.0
        %614 = vmatprep.subr.mxu0 0.0
        %615 = vmatpush2.msra.mxu0 0.0
        %616 = vmatprep.mubr.f32.mxu0 0.0
        %617 = vmatmul.mubr.f32.gmra.mxu0 %v529
        %v618 = vpop.f32.mrf.mxu0
        %v619 = vadd.f32 %v490, %v618
        %v620 = vpop.f32.mrf.mxu0
        %v621 = vadd.f32 %v490, %v620
        %622 = vmatprep.mubr.f32.mxu0 0.0
        %623 = vmatmul.mubr.f32.gmra.mxu0 %v532
        %v624 = vpop.f32.mrf.mxu0
        %v625 = vadd.f32 %v495, %v624
        %v626 = vpop.f32.mrf.mxu0
        %v627 = vadd.f32 %v495, %v626
        %628 = vmatprep.mubr.f32.mxu0 0.0
        %629 = vmatmul.mubr.f32.gmra.mxu0 %v535
        %v630 = vpop.f32.mrf.mxu0
        %v631 = vadd.f32 %v500, %v630
        %v632 = vpop.f32.mrf.mxu0
        %v633 = vadd.f32 %v500, %v632
        %634 = vmatprep.mubr.f32.mxu0 0.0
        %635 = vmatmul.mubr.f32.gmra.mxu0 %v538
        %v636 = vpop.f32.mrf.mxu0
        %v637 = vadd.f32 %v505, %v636
        %v638 = vpop.f32.mrf.mxu0
        %v639 = vadd.f32 %v505, %v638
        %640 = vmatprep.mubr.f32.mxu0 0.0
        %641 = vmatmul.mubr.f32.gmra.mxu0 %v541
        %v642 = vpop.f32.mrf.mxu0
        %v643 = vadd.f32 %v510, %v642
        %v644 = vpop.f32.mrf.mxu0
        %v645 = vadd.f32 %v510, %v644
        %646 = vmatprep.mubr.f32.mxu0 0.0
        %647 = vmatmul.mubr.f32.gmra.mxu0 %v544
        %v648 = vpop.f32.mrf.mxu0
        %v649 = vadd.f32 %v515, %v648
        %v650 = vpop.f32.mrf.mxu0
        %v651 = vadd.f32 %v515, %v650
        %652 = vmatprep.mubr.f32.mxu0 0.0
        %653 = vmatmul.mubr.f32.gmra.mxu0 %v547
        %v654 = vpop.f32.mrf.mxu0
        %v655 = vadd.f32 %v520, %v654
        %v656 = vpop.f32.mrf.mxu0
        %v657 = vadd.f32 %v520, %v656
        %658 = vmatprep.mubr.f32.mxu0 0.0
        %659 = vmatmul.mubr.f32.gmra.mxu0 %v550
        %v660 = vpop.f32.mrf.mxu0
        %v661 = vadd.f32 %v525, %v660
        %v662 = vpop.f32.mrf.mxu0
        %v663 = vadd.f32 %v525, %v662
        %664 = vdwg.mxu0
        %v665 = vmax.f32 %v619, 0.0
        %v666 = vmax.f32 %v621, 0.0
        %v667 = vmax.f32 %v625, 0.0
        %v668 = vmax.f32 %v627, 0.0
        %v669 = vmax.f32 %v631, 0.0
        %v670 = vmax.f32 %v633, 0.0
        %v671 = vmax.f32 %v637, 0.0
        %v672 = vmax.f32 %v639, 0.0
        %v673 = vmax.f32 %v643, 0.0
        %v674 = vmax.f32 %v645, 0.0
        %v675 = vmax.f32 %v649, 0.0
        %v676 = vmax.f32 %v651, 0.0
        %v677 = vmax.f32 %v655, 0.0
        %v678 = vmax.f32 %v657, 0.0
        %v679 = vmax.f32 %v661, 0.0
        %v680 = vmax.f32 %v663, 0.0
        %v681 = vld [vmem:[%s5] sm:$0xff]
        %v682 = vld [vmem:[%s5 + $0x8] sm:$0xff]
        %v683 = vld [vmem:[%s5 + $0x10] sm:$0xff]
        %v684 = vld [vmem:[%s5 + $0x18] sm:$0xff]
        %v685 = vld [vmem:[%s6] sm:$0xff]
        %v686 = vld [vmem:[%s6 + $0x8] sm:$0xff]
        %v687 = vld [vmem:[%s6 + $0x10] sm:$0xff]
        %v688 = vld [vmem:[%s6 + $0x18] sm:$0xff]
        %690 = vset.pattern.permute.xlu0 0
        %691 = vperm.xlu0 %690, %v685
        %v692 = vpop.permute.xlu0 %691
        %695 = vset.pattern.permute.xlu0 0
        %696 = vperm.xlu0 %695, %v686
        %v697 = vpop.permute.xlu0 %696
        %700 = vset.pattern.permute.xlu0 0
        %701 = vperm.xlu0 %700, %v687
        %v702 = vpop.permute.xlu0 %701
        %705 = vset.pattern.permute.xlu0 0
        %706 = vperm.xlu0 %705, %v688
        %v707 = vpop.permute.xlu0 %706
        %vm709 = vcmask 523264
        %v711 = vsel %vm709, %v681, 0
        %v714 = vsel %vm709, %v682, 0
        %v717 = vsel %vm709, %v683, 0
        %v720 = vsel %vm709, %v684, 0
        %722 = vmatprep.subr.mxu0 0.0
        %723 = vmatpush1.msra.mxu0 0.0
        %724 = vmatprep.subr.mxu0 0.0
        %725 = vmatpush1.msra.mxu0 0.0
        %726 = vmatprep.subr.mxu0 0.0
        %727 = vmatpush1.msra.mxu0 0.0
        %728 = vmatprep.subr.mxu0 0.0
        %729 = vmatpush1.msra.mxu0 0.0
        %730 = vmatprep.subr.mxu0 0.0
        %731 = vmatpush1.msra.mxu0 0.0
        %732 = vmatprep.subr.mxu0 0.0
        %733 = vmatpush1.msra.mxu0 0.0
        %734 = vmatprep.subr.mxu0 0.0
        %735 = vmatpush1.msra.mxu0 0.0
        %736 = vmatprep.subr.mxu0 0.0
        %737 = vmatpush1.msra.mxu0 0.0
        %738 = vmatprep.subr.mxu0 %v680
        %739 = vmatpush1.msra.mxu0 %v679
        %740 = vmatprep.subr.mxu0 %v678
        %741 = vmatpush1.msra.mxu0 %v677
        %742 = vmatprep.subr.mxu0 %v676
        %743 = vmatpush1.msra.mxu0 %v675
        %744 = vmatprep.subr.mxu0 %v674
        %745 = vmatpush1.msra.mxu0 %v673
        %746 = vmatprep.subr.mxu0 %v672
        %747 = vmatpush1.msra.mxu0 %v671
        %748 = vmatprep.subr.mxu0 %v670
        %749 = vmatpush1.msra.mxu0 %v669
        %750 = vmatprep.subr.mxu0 %v668
        %751 = vmatpush1.msra.mxu0 %v667
        %752 = vmatprep.subr.mxu0 %v666
        %753 = vmatpush1.msra.mxu0 %v665
        %754 = vmatprep.subr.mxu0 0.0
        %755 = vmatpush2.msra.mxu0 0.0
        %756 = vmatprep.subr.mxu0 0.0
        %757 = vmatpush2.msra.mxu0 0.0
        %758 = vmatprep.subr.mxu0 0.0
        %759 = vmatpush2.msra.mxu0 0.0
        %760 = vmatprep.subr.mxu0 0.0
        %761 = vmatpush2.msra.mxu0 0.0
        %762 = vmatprep.subr.mxu0 0.0
        %763 = vmatpush2.msra.mxu0 0.0
        %764 = vmatprep.subr.mxu0 0.0
        %765 = vmatpush2.msra.mxu0 0.0
        %766 = vmatprep.subr.mxu0 0.0
        %767 = vmatpush2.msra.mxu0 0.0
        %768 = vmatprep.subr.mxu0 0.0
        %769 = vmatpush2.msra.mxu0 0.0
        %770 = vmatprep.subr.mxu0 0.0
        %771 = vmatpush2.msra.mxu0 0.0
        %772 = vmatprep.subr.mxu0 0.0
        %773 = vmatpush2.msra.mxu0 0.0
        %774 = vmatprep.subr.mxu0 0.0
        %775 = vmatpush2.msra.mxu0 0.0
        %776 = vmatprep.subr.mxu0 0.0
        %777 = vmatpush2.msra.mxu0 0.0
        %778 = vmatprep.subr.mxu0 0.0
        %779 = vmatpush2.msra.mxu0 0.0
        %780 = vmatprep.subr.mxu0 0.0
        %781 = vmatpush2.msra.mxu0 0.0
        %782 = vmatprep.subr.mxu0 0.0
        %783 = vmatpush2.msra.mxu0 0.0
        %784 = vmatprep.subr.mxu0 0.0
        %785 = vmatpush2.msra.mxu0 0.0
        %786 = vmatprep.mubr.f32.mxu0 0.0
        %787 = vmatmul.mubr.f32.gmra.mxu0 %v711
        %v788 = vpop.f32.mrf.mxu0
        %v789 = vadd.f32 %v692, %v788
        %v790 = vpop.f32.mrf.mxu0
        %v791 = vadd.f32 %v692, %v790
        %792 = vmatprep.mubr.f32.mxu0 0.0
        %793 = vmatmul.mubr.f32.gmra.mxu0 %v714
        %v794 = vpop.f32.mrf.mxu0
        %v795 = vadd.f32 %v697, %v794
        %v796 = vpop.f32.mrf.mxu0
        %v797 = vadd.f32 %v697, %v796
        %798 = vmatprep.mubr.f32.mxu0 0.0
        %799 = vmatmul.mubr.f32.gmra.mxu0 %v717
        %v800 = vpop.f32.mrf.mxu0
        %v801 = vadd.f32 %v702, %v800
        %v802 = vpop.f32.mrf.mxu0
        %v803 = vadd.f32 %v702, %v802
        %804 = vmatprep.mubr.f32.mxu0 0.0
        %805 = vmatmul.mubr.f32.gmra.mxu0 %v720
        %v806 = vpop.f32.mrf.mxu0
        %v807 = vadd.f32 %v707, %v806
        %v808 = vpop.f32.mrf.mxu0
        %v809 = vadd.f32 %v707, %v808
        %810 = vdwg.mxu0
        %v811 = vmax.f32 %v789, 0.0
        %v812 = vmax.f32 %v791, 0.0
        %v813 = vmax.f32 %v795, 0.0
        %v814 = vmax.f32 %v797, 0.0
        %v815 = vmax.f32 %v801, 0.0
        %v816 = vmax.f32 %v803, 0.0
        %v817 = vmax.f32 %v807, 0.0
        %v818 = vmax.f32 %v809, 0.0
        %819 = vst [vmem:[%s313] sm:$0xff] %v811
        %820 = vst [vmem:[%s313 + $0x8] sm:$0xff] %v812
        %821 = vst [vmem:[%s313 + $0x10] sm:$0xff] %v813
        %822 = vst [vmem:[%s313 + $0x18] sm:$0xff] %v814
        %823 = vst [vmem:[%s313 + $0x20] sm:$0xff] %v815
        %824 = vst [vmem:[%s313 + $0x28] sm:$0xff] %v816
        %825 = vst [vmem:[%s313 + $0x30] sm:$0xff] %v817
        %826 = vst [vmem:[%s313 + $0x38] sm:$0xff] %v818
        %p827 = scmp.eq.s32.totalorder %s21, 0
        // Predicated region
        $region49: #{sparse_equivariant_forward.6} parent=47 // pred_check
          %p828 = pneg %p827
        $region50: #{sparse_equivariant_forward.6} parent=47 // pred_check_branch
          %830 = sbr.rel (%p828) target = $region52
        $region51: #{sparse_equivariant_forward.6} parent=47 // pred_region
          %vm831 = vcmask 7168
          %832 = vst.msk [vmem:[%s8] sm:$0xff] %vm831, 0.0
          %833 = vst.msk [vmem:[%s8 + $0x8] sm:$0xff] %vm831, 0.0
          %834 = vst.msk [vmem:[%s8 + $0x10] sm:$0xff] %vm831, 0.0
          %835 = vst.msk [vmem:[%s8 + $0x18] sm:$0xff] %vm831, 0.0
          %836 = vst.msk [vmem:[%s9] sm:$0xff] %vm831, 0.0
          %837 = vst.msk [vmem:[%s9 + $0x8] sm:$0xff] %vm831, 0.0
          %838 = vst.msk [vmem:[%s9 + $0x10] sm:$0xff] %vm831, 0.0
          %839 = vst.msk [vmem:[%s9 + $0x18] sm:$0xff] %vm831, 0.0
        $region52: #{sparse_equivariant_forward.6} parent=47 // pred_fallthru
          _
        %v840 = vlaneseq
        %v841 = vand.u32 %v840, 127
        %v842 = vadd.s32 %v841, 128
        %s843 = smul.u32 %s21, 256
        %v844 = vstv %s843
        %v845 = vadd.s32 %v844, %v841
        %v846 = vadd.s32 %v844, %v842
        %vm847 = vcmp.lt.s32.totalorder %v845, 1000
        %vm848 = vcmp.lt.s32.totalorder %v846, 1000
        %v849 = vsel %vm847, 1, 0
        %v850 = vsel %vm848, 1, 0
        %vm851 = vcmp.eq.s32.totalorder %v849, 1
        %vm852 = vcmp.eq.s32.totalorder %v850, 1
        %v853 = vsel %vm851, %v811, 0.0
        %v854 = vsel %vm852, %v812, 0.0
        %v855 = vsel %vm851, %v813, 0.0
        %v856 = vsel %vm852, %v814, 0.0
        %v857 = vsel %vm851, %v815, 0.0
        %v858 = vsel %vm852, %v816, 0.0
        %v859 = vsel %vm851, %v817, 0.0
        %v860 = vsel %vm852, %v818, 0.0
        %v861 = vld [vmem:[%s8] sm:$0xff]
        %v862 = vld [vmem:[%s8 + $0x8] sm:$0xff]
        %v863 = vld [vmem:[%s8 + $0x10] sm:$0xff]
        %v864 = vld [vmem:[%s8 + $0x18] sm:$0xff]
        %v865 = vadd.f32 %v853, %v854
        %866 = vadd.xlane.f32.xlu0 %v865
        %v867 = vpop.xlane.xlu0 %866
        %v868 = vadd.f32 %v855, %v856
        %869 = vadd.xlane.f32.xlu0 %v868
        %v870 = vpop.xlane.xlu0 %869
        %v871 = vadd.f32 %v857, %v858
        %872 = vadd.xlane.f32.xlu0 %v871
        %v873 = vpop.xlane.xlu0 %872
        %v874 = vadd.f32 %v859, %v860
        %875 = vadd.xlane.f32.xlu0 %v874
        %v876 = vpop.xlane.xlu0 %875
        %v877 = vadd.f32 %v861, %v867
        %v878 = vadd.f32 %v862, %v870
        %v879 = vadd.f32 %v863, %v873
        %v880 = vadd.f32 %v864, %v876
        %vm881 = vcmask 7168
        %882 = vst.msk [vmem:[%s8] sm:$0xff] %vm881, %v877
        %883 = vst.msk [vmem:[%s8 + $0x8] sm:$0xff] %vm881, %v878
        %884 = vst.msk [vmem:[%s8 + $0x10] sm:$0xff] %vm881, %v879
        %885 = vst.msk [vmem:[%s8 + $0x18] sm:$0xff] %vm881, %v880
        %v886 = vld [vmem:[%s9] sm:$0xff]
        %v887 = vld [vmem:[%s9 + $0x8] sm:$0xff]
        %v888 = vld [vmem:[%s9 + $0x10] sm:$0xff]
        %v889 = vld [vmem:[%s9 + $0x18] sm:$0xff]
        %v890 = vmul.f32 %v853, %v853
        %v891 = vmul.f32 %v854, %v854
        %v892 = vmul.f32 %v855, %v855
        %v893 = vmul.f32 %v856, %v856
        %v894 = vmul.f32 %v857, %v857
        %v895 = vmul.f32 %v858, %v858
        %v896 = vmul.f32 %v859, %v859
        %v897 = vmul.f32 %v860, %v860
        %v898 = vadd.f32 %v890, %v891
        %899 = vadd.xlane.f32.xlu0 %v898
        %v900 = vpop.xlane.xlu0 %899
        %v901 = vadd.f32 %v892, %v893
        %902 = vadd.xlane.f32.xlu0 %v901
        %v903 = vpop.xlane.xlu0 %902
        %v904 = vadd.f32 %v894, %v895
        %905 = vadd.xlane.f32.xlu0 %v904
        %v906 = vpop.xlane.xlu0 %905
        %v907 = vadd.f32 %v896, %v897
        %908 = vadd.xlane.f32.xlu0 %v907
        %v909 = vpop.xlane.xlu0 %908
        %v910 = vadd.f32 %v886, %v900
        %v911 = vadd.f32 %v887, %v903
        %v912 = vadd.f32 %v888, %v906
        %v913 = vadd.f32 %v889, %v909
        %914 = vst.msk [vmem:[%s9] sm:$0xff] %vm881, %v910
        %915 = vst.msk [vmem:[%s9 + $0x8] sm:$0xff] %vm881, %v911
        %916 = vst.msk [vmem:[%s9 + $0x10] sm:$0xff] %vm881, %v912
        %917 = vst.msk [vmem:[%s9 + $0x18] sm:$0xff] %vm881, %v913
        %s918 = sand.u32 %s181, 1
        %s919 = sand.u32 %s181, 1
        %s920 = smul.addr %s919, 64
        %s921 = scalar_lea.vmem [#allocation2], %s920
        // Predicated region
        $region53: #{sparse_equivariant_forward.6} parent=47 // pred_check
          %p922 = pneg %p191
        $region54: #{sparse_equivariant_forward.6} parent=47 // pred_check_branch
          %924 = sbr.rel (%p922) target = $region56
        $region55: #{sparse_equivariant_forward.6} parent=47 // pred_region
          %s925 = smul.u32 2, %s21
          %s926 = smul.addr %s925, 8
          %s927 = scalar_lea.vmem %s7, %s926
          // Predicated region
          $region57: #{sparse_equivariant_forward.6} parent=55 // pred_check
            _
          $region58: #{sparse_equivariant_forward.6} parent=55 // pred_check_branch
            %929 = sbr.rel (0) target = $region60
          $region59: #{sparse_equivariant_forward.6} parent=55 // pred_region
            // Predicated region
            $region61: #{sparse_equivariant_forward.6} parent=59 // pred_check
              _
            $region62: #{sparse_equivariant_forward.6} parent=59 // pred_check_branch
              %931 = sbr.rel (0) target = $region64
            $region63: #{sparse_equivariant_forward.6} parent=59 // pred_region
              loop: start=0, step=1, limit=1
              $region65: #{sparse_equivariant_forward.6} parent=63 // loop_pre_header
                _
              $region66: #{sparse_equivariant_forward.6} parent=63 // loop_header
                %s933 = sphi 0, %s937
                %p934 = scmp.ge.s32.totalorder %s933, 1
                %s938 = sphi %s921, %s921
                %s939 = sphi %s927, %s927
              $region67: #{sparse_equivariant_forward.6} parent=63 // loop_header_branch
                %936 = sbr.rel (%p934) target = $region71
              $region68: #{sparse_equivariant_forward.6} parent=63 // loop_body
                %v940 = vld [vmem:[%s938] sm:$0xff]
                %941 = vst [vmem:[%s939] sm:$0xff] %v940
                %v942 = vld [vmem:[%s938 + $0x8] sm:$0xff]
                %943 = vst [vmem:[%s939 + $0x8] sm:$0xff] %v942
                %v944 = vld [vmem:[%s938 + $0x10] sm:$0xff]
                %945 = vst [vmem:[%s939 + $0x40] sm:$0xff] %v944
                %v946 = vld [vmem:[%s938 + $0x18] sm:$0xff]
                %947 = vst [vmem:[%s939 + $0x48] sm:$0xff] %v946
                %v948 = vld [vmem:[%s938 + $0x20] sm:$0xff]
                %949 = vst [vmem:[%s939 + $0x80] sm:$0xff] %v948
                %v950 = vld [vmem:[%s938 + $0x28] sm:$0xff]
                %951 = vst [vmem:[%s939 + $0x88] sm:$0xff] %v950
                %v952 = vld [vmem:[%s938 + $0x30] sm:$0xff]
                %953 = vst [vmem:[%s939 + $0xc0] sm:$0xff] %v952
                %v954 = vld [vmem:[%s938 + $0x38] sm:$0xff]
                %955 = vst [vmem:[%s939 + $0xc8] sm:$0xff] %v954
              $region69: #{sparse_equivariant_forward.6} parent=63 // loop_footer
                %s937 = sadd.s32 1, %s933
              $region70: #{sparse_equivariant_forward.6} parent=63 // loop_footer_branch
                %932 = sbr.rel target = $region66
              $region71: #{sparse_equivariant_forward.6} parent=63 // loop_exit
                _
            $region64: #{sparse_equivariant_forward.6} parent=59 // pred_fallthru
              _
            // Predicated region
            $region72: #{sparse_equivariant_forward.6} parent=59 // pred_check
              _
            $region73: #{sparse_equivariant_forward.6} parent=59 // pred_check_branch
              %957 = sbr.rel target = $region75
            $region74: #{sparse_equivariant_forward.6} parent=59 // pred_region
              _
            $region75: #{sparse_equivariant_forward.6} parent=59 // pred_fallthru
              _
          $region60: #{sparse_equivariant_forward.6} parent=55 // pred_fallthru
            _
          %958 = vnop
        $region56: #{sparse_equivariant_forward.6} parent=47 // pred_fallthru
          _
        // Predicated region
        $region76: #{sparse_equivariant_forward.6} parent=47 // pred_check
          %p959 = pneg %p212
        $region77: #{sparse_equivariant_forward.6} parent=47 // pred_check_branch
          %961 = sbr.rel (%p959) target = $region79
        $region78: #{sparse_equivariant_forward.6} parent=47 // pred_region
          _
        $region79: #{sparse_equivariant_forward.6} parent=47 // pred_fallthru
          _
        // Predicated region
        $region80: #{sparse_equivariant_forward.6} parent=47 // pred_check
          %p962 = pneg %p233
        $region81: #{sparse_equivariant_forward.6} parent=47 // pred_check_branch
          %964 = sbr.rel (%p962) target = $region83
        $region82: #{sparse_equivariant_forward.6} parent=47 // pred_region
          _
        $region83: #{sparse_equivariant_forward.6} parent=47 // pred_fallthru
          _
        // Predicated region
        $region84: #{sparse_equivariant_forward.6} parent=47 // pred_check
          %p965 = pneg %p212
        $region85: #{sparse_equivariant_forward.6} parent=47 // pred_check_branch
          %967 = sbr.rel (%p965) target = $region87
        $region86: #{sparse_equivariant_forward.6} parent=47 // pred_region
          _
        $region87: #{sparse_equivariant_forward.6} parent=47 // pred_fallthru
          _
        // Predicated region
        $region88: #{sparse_equivariant_forward.6} parent=47 // pred_check
          %p968 = pneg %p233
        $region89: #{sparse_equivariant_forward.6} parent=47 // pred_check_branch
          %970 = sbr.rel (%p968) target = $region91
        $region90: #{sparse_equivariant_forward.6} parent=47 // pred_region
          _
        $region91: #{sparse_equivariant_forward.6} parent=47 // pred_fallthru
          _
      $region48: #{sparse_equivariant_forward.6} parent=5 // pred_fallthru
        _
      %p971 = scmp.le.s32.totalorder 2, %s16
      // Predicated region
      $region92: #{sparse_equivariant_forward.6} parent=5 // pred_check
        %p972 = pneg %p971
      $region93: #{sparse_equivariant_forward.6} parent=5 // pred_check_branch
        %974 = sbr.rel (%p972) target = $region95
      $region94: #{sparse_equivariant_forward.6} parent=5 // pred_region
        %s975 = ssub.s32 %s16, 2
        // Predicated region
        $region96: #{sparse_equivariant_forward.6} parent=94 // pred_check
          %p976 = pneg %p197
        $region97: #{sparse_equivariant_forward.6} parent=94 // pred_check_branch
          %978 = sbr.rel (%p976) target = $region99
        $region98: #{sparse_equivariant_forward.6} parent=94 // pred_region
          %s979 = sand.u32 %s182, 1
          %s980 = sand.u32 %s182, 1
          %s981 = smul.addr %s980, 64
          %s982 = scalar_lea.vmem [#allocation2], %s981
        $region99: #{sparse_equivariant_forward.6} parent=94 // pred_fallthru
          _
      $region95: #{sparse_equivariant_forward.6} parent=5 // pred_fallthru
        _
    $region6: #{sparse_equivariant_forward.6} parent=1 // loop_footer
      %s20 = sadd.s32 1, %s16
    $region7: #{sparse_equivariant_forward.6} parent=1 // loop_footer_branch
      %15 = sbr.rel target = $region3
    $region8: #{sparse_equivariant_forward.6} parent=1 // loop_exit
      _

</llo_original>
